<compile_context>
chip_gen: v6e
topology: v6e:2x2x1
jax: 0.10.0
libtpu: 0.0.40
codegen_flags: <defaults>
</compile_context>

<pallas_src>
import jax
import jax.numpy as jnp
from jax.experimental import pallas as pl
from jax.experimental.pallas import tpu as pltpu

EPS = 1e-5  # nn.InstanceNorm2d default


# --------------------------------------------------------------------------- #
# Kernel helpers
# --------------------------------------------------------------------------- #
def _reflect_pad_into(scr, src, H, W):
    """ReflectionPad2d(1): write padded copy of src (H, W, C) into scr (H+2, W+2, C).

    `src` may be a Ref (first conv: read straight from the pipeline buffer) or a
    register array (second conv intermediate).  Row offsets are along an untiled
    (3rd-from-last) dim, so the row stores are cheap; the two column writes read
    back scratch so the reflected corners come out right.
    """
    scr[1:H + 1, 1:W + 1, :] = src[...].astype(scr.dtype)
    scr[0, 1:W + 1, :] = src[1].astype(scr.dtype)          # top    = row 1
    scr[H + 1, 1:W + 1, :] = src[H - 2].astype(scr.dtype)  # bottom = row H-2
    scr[:, 0, :] = scr[:, 2, :]                            # left   = (orig) col 1
    scr[:, W + 1, :] = scr[:, W - 1, :]                    # right  = (orig) col W-2


def _conv3x3_im2col(pad_ref, w, H, W, C):
    """3x3 VALID conv as a single im2col matmul.

    pad_ref: (H+2, W+2, C) f32 scratch Ref, w: (9C, C) in compute dtype.
    Taps are read as windows directly from the scratch ref (no full-slab reload,
    no per-dx slab list) and concatenated along the lane axis; tap order
    (dy outer, dx inner, cin innermost) matches the host-side weight reshape.
    Returns (H*W, C) f32.
    """
    taps = []
    for dy in range(3):
        for dx in range(3):
            taps.append(pad_ref[dy:dy + H, dx:dx + W, :])
    # Single cast of the fused patch to the MXU staging dtype (bf16 by default).
    patch = jnp.concatenate(taps, axis=-1).reshape(H * W, 9 * C).astype(w.dtype)
    return jnp.dot(patch, w, preferred_element_type=jnp.float32)


def _instance_norm(y, inv_n):
    """Non-affine InstanceNorm over the spatial axis (two-pass, f32).  y: (H*W, C)."""
    m = jnp.sum(y, axis=0, keepdims=True) * inv_n
    yc = y - m
    v = jnp.sum(yc * yc, axis=0, keepdims=True) * inv_n
    return yc * jax.lax.rsqrt(v + EPS)


# --------------------------------------------------------------------------- #
# Kernel
# --------------------------------------------------------------------------- #
def resnet_block_kernel(x_ref, w1_ref, w2_ref, out_ref, pad_ref):
    H, W, C = x_ref.shape
    inv_n = 1.0 / float(H * W)

    # ---- reflect pad + conv1 (im2col matmul) + InstanceNorm + ReLU ----------
    _reflect_pad_into(pad_ref, x_ref, H, W)
    y1 = _conv3x3_im2col(pad_ref, w1_ref[...], H, W, C)          # (H*W, C) f32
    y1 = jnp.maximum(_instance_norm(y1, inv_n), 0.0).reshape(H, W, C)

    # ---- reflect pad + conv2 + InstanceNorm (scratch reused) ----------------
    _reflect_pad_into(pad_ref, y1, H, W)
    y2 = _conv3x3_im2col(pad_ref, w2_ref[...], H, W, C)
    y2 = _instance_norm(y2, inv_n).reshape(H, W, C)

    # ---- residual add (re-read x from its pipeline buffer; cheap vld) -------
    out_ref[...] = (x_ref[...].astype(jnp.float32) + y2).astype(out_ref.dtype)


# --------------------------------------------------------------------------- #
# Wrappers
# --------------------------------------------------------------------------- #
def _vmem_limit_bytes():
    """Generation-aware VMEM budget: ~80% of capacity (v5e/v6e 128 MiB, v7x 64 MiB)."""
    cap = 64 * 1024 * 1024
    try:
        info = pltpu.get_tpu_info()
        cap = int(getattr(info, "vmem_capacity_bytes", cap))
    except Exception:
        pass
    return int(cap * 0.8)


def resnet_block_nhwc(x, w1_im2col, w2_im2col):
    """x: (B, H, W, C) float32; weights already reshaped to (9C, C) and cast."""
    B, H, W, C = x.shape
    assert H >= 3 and W >= 3, "ReflectionPad2d(1) needs H, W >= 3"
    assert w1_im2col.shape == (9 * C, C) and w2_im2col.shape == (9 * C, C)

    return pl.pallas_call(
        resnet_block_kernel,
        out_shape=jax.ShapeDtypeStruct((B, H, W, C), x.dtype),
        grid_spec=pltpu.PrefetchScalarGridSpec(
            num_scalar_prefetch=0,
            grid=(B,),
            in_specs=[
                pl.BlockSpec((None, H, W, C), lambda b: (b, 0, 0, 0)),
                pl.BlockSpec((9 * C, C), lambda b: (0, 0)),      # grid-invariant
                pl.BlockSpec((9 * C, C), lambda b: (0, 0)),      # grid-invariant
            ],
            out_specs=pl.BlockSpec((None, H, W, C), lambda b: (b, 0, 0, 0)),
            # Padded activation scratch kept in f32 (conv accumulation / norm
            # inputs come straight from it); operands are cast to bf16 only for
            # the fused im2col matmul.
            scratch_shapes=[pltpu.VMEM((H + 2, W + 2, C), jnp.float32)],
        ),
        compiler_params=pltpu.CompilerParams(
            dimension_semantics=("parallel",),
            vmem_limit_bytes=_vmem_limit_bytes(),
        ),
    )(x, w1_im2col, w2_im2col)


def resnet_block_nchw(x_nchw, w1, b1, w2, b2, use_bf16=True):
    """PyTorch-facing wrapper: NCHW in, NCHW out.  Weights given in HWIO (3,3,C,C).

    Conv biases are accepted for API parity with nn.Conv2d but are NOT fed to the
    kernel: each bias is immediately followed by a non-affine InstanceNorm2d whose
    per-channel mean subtraction removes it exactly.  (This only holds for
    InstanceNorm2d(affine=False); a different norm_layer would need the biases.)
    """
    del b1, b2
    cdt = jnp.bfloat16 if use_bf16 else jnp.float32
    C = w1.shape[-1]
    # Host-side im2col weight prep + MXU-staging cast (grid-invariant blocks).
    w1p = jnp.asarray(w1).reshape(9 * C, C).astype(cdt)
    w2p = jnp.asarray(w2).reshape(9 * C, C).astype(cdt)

    x = jnp.transpose(x_nchw, (0, 2, 3, 1))          # NCHW -> NHWC
    y = resnet_block_nhwc(x, w1p, w2p)
    return jnp.transpose(y, (0, 3, 1, 2))            # NHWC -> NCHW


# --------------------------------------------------------------------------- #
# Pure-JAX reference (for checking)
# --------------------------------------------------------------------------- #
def _ref_forward_nhwc(x, w1, b1, w2, b2, conv_dtype=jnp.float32):
    def conv(xin, w, b):
        xp = jnp.pad(xin, ((0, 0), (1, 1), (1, 1), (0, 0)), mode="reflect")
        y = jax.lax.conv_general_dilated(
            xp.astype(conv_dtype), w.astype(conv_dtype), (1, 1), "VALID",
            dimension_numbers=("NHWC", "HWIO", "NHWC"),
            preferred_element_type=jnp.float32,
            precision=jax.lax.Precision.HIGHEST)
        return y + b.reshape(1, 1, 1, -1)

    def inorm(y):
        m = jnp.mean(y, axis=(1, 2), keepdims=True)
        v = jnp.mean((y - m) ** 2, axis=(1, 2), keepdims=True)
        return (y - m) * jax.lax.rsqrt(v + EPS)

    h = jnp.maximum(inorm(conv(x, w1, b1)), 0.0)
    h = inorm(conv(h, w2, b2))
    return x + h


if __name__ == "__main__":
    B, C, H, W = 2, 4, 16, 16  # small shapes; dim == C

    key = jax.random.PRNGKey(0)
    k_x, k_w1, k_b1, k_w2, k_b2 = jax.random.split(key, 5)

    x_nchw = jax.random.normal(k_x, (B, C, H, W), dtype=jnp.float32)

    # Deterministic synthetic Conv2d(dim, dim, 3) parameters, stored as HWIO.
    fan_in = C * 3 * 3
    scale = 1.0 / jnp.sqrt(jnp.float32(fan_in))
    w1 = jax.random.normal(k_w1, (3, 3, C, C), dtype=jnp.float32) * scale
    b1 = jax.random.normal(k_b1, (C,), dtype=jnp.float32) * scale
    w2 = jax.random.normal(k_w2, (3, 3, C, C), dtype=jnp.float32) * scale
    b2 = jax.random.normal(k_b2, (C,), dtype=jnp.float32) * scale

    x_nhwc = jnp.transpose(x_nchw, (0, 2, 3, 1))

    # 1) Exact-semantics check: f32 kernel path vs f32 reference (biases included
    #    in the reference — verifies they are indeed cancelled by InstanceNorm).
    out_f32 = jax.block_until_ready(
        resnet_block_nchw(x_nchw, w1, b1, w2, b2, use_bf16=False))
    ref_f32 = jnp.transpose(
        _ref_forward_nhwc(x_nhwc, w1, b1, w2, b2, conv_dtype=jnp.float32),
        (0, 3, 1, 2))
    assert out_f32.shape == (B, C, H, W)
    assert jnp.allclose(out_f32, ref_f32, atol=5e-3, rtol=5e-3), (
        float(jnp.max(jnp.abs(out_f32 - ref_f32))))

    # 2) Performance path: bf16 MXU staging vs a reference with bf16 conv
    #    operands (f32 accumulation / norms) — validates the staged path tightly.
    out_bf16 = jax.block_until_ready(
        resnet_block_nchw(x_nchw, w1, b1, w2, b2, use_bf16=True))
    ref_bf16 = jnp.transpose(
        _ref_forward_nhwc(x_nhwc, w1, b1, w2, b2, conv_dtype=jnp.bfloat16),
        (0, 3, 1, 2))
    assert jnp.allclose(out_bf16, ref_bf16, atol=2e-3, rtol=2e-3), (
        float(jnp.max(jnp.abs(out_bf16 - ref_bf16))))

    print("KERNEL_OK")
</pallas_src>

<mosaic_0001>
module attributes {stable_mosaic.version = 11 : i64} {
  func.func @resnet_block_kernel(%arg0: i32, %arg1: memref<1x16x16x4xf32, #tpu.memory_space<vmem>>, %arg2: memref<36x4xf32, #tpu.memory_space<vmem>>, %arg3: memref<36x4xf32, #tpu.memory_space<vmem>>, %arg4: memref<1x16x16x4xf32, #tpu.memory_space<vmem>>, %arg5: memref<18x18x4xf32, #tpu.memory_space<vmem>>) attributes {dimension_semantics = [#tpu.dimension_semantics<parallel>], iteration_bounds = array<i64: 2>, scalar_prefetch = 0 : i64, scratch_operands = 1 : i64, tpu.core_type = #tpu.core_type<tc>, window_params = [{transform_indices = @transform_0, window_bounds = array<i64: 1, 16, 16, 4>}, {pipeline_mode = #tpu.pipeline_mode<synchronous>, transform_indices = @transform_1, window_bounds = array<i64: 36, 4>}, {pipeline_mode = #tpu.pipeline_mode<synchronous>, transform_indices = @transform_2, window_bounds = array<i64: 36, 4>}, {transform_indices = @transform_3, window_bounds = array<i64: 1, 16, 16, 4>}]} {
    %c0 = arith.constant 0 : index
    %c0_0 = arith.constant 0 : index
    %c0_1 = arith.constant 0 : index
    %c0_2 = arith.constant 0 : index
    %0 = vector.load %arg1[%c0, %c0_0, %c0_1, %c0_2] : memref<1x16x16x4xf32, #tpu.memory_space<vmem>>, vector<1x16x16x4xf32>
    %1 = vector.shape_cast %0 : vector<1x16x16x4xf32> to vector<16x16x4xf32>
    %c1 = arith.constant 1 : index
    %c1_3 = arith.constant 1 : index
    %c0_4 = arith.constant 0 : index
    %2 = vector.load %arg5[%c1, %c1_3, %c0_4] : memref<18x18x4xf32, #tpu.memory_space<vmem>>, vector<16x16x4xf32>
    tpu.vector_store %arg5[%c1, %c1_3, %c0_4], %1 {strides = array<i32>} : memref<18x18x4xf32, #tpu.memory_space<vmem>>, vector<16x16x4xf32>,
    %c0_5 = arith.constant 0 : index
    %c1_6 = arith.constant 1 : index
    %c0_7 = arith.constant 0 : index
    %c0_8 = arith.constant 0 : index
    %3 = vector.load %arg1[%c0_5, %c1_6, %c0_7, %c0_8] : memref<1x16x16x4xf32, #tpu.memory_space<vmem>>, vector<1x1x16x4xf32>
    %4 = vector.shape_cast %3 : vector<1x1x16x4xf32> to vector<16x4xf32>
    %c0_9 = arith.constant 0 : index
    %c1_10 = arith.constant 1 : index
    %c0_11 = arith.constant 0 : index
    %5 = vector.load %arg5[%c0_9, %c1_10, %c0_11] : memref<18x18x4xf32, #tpu.memory_space<vmem>>, vector<1x16x4xf32>
    %6 = vector.shape_cast %5 : vector<1x16x4xf32> to vector<16x4xf32>
    %7 = vector.shape_cast %4 : vector<16x4xf32> to vector<1x16x4xf32>
    tpu.vector_store %arg5[%c0_9, %c1_10, %c0_11], %7 {strides = array<i32>} : memref<18x18x4xf32, #tpu.memory_space<vmem>>, vector<1x16x4xf32>,
    %c0_12 = arith.constant 0 : index
    %c14 = arith.constant 14 : index
    %c0_13 = arith.constant 0 : index
    %c0_14 = arith.constant 0 : index
    %8 = vector.load %arg1[%c0_12, %c14, %c0_13, %c0_14] : memref<1x16x16x4xf32, #tpu.memory_space<vmem>>, vector<1x1x16x4xf32>
    %9 = vector.shape_cast %8 : vector<1x1x16x4xf32> to vector<16x4xf32>
    %c17 = arith.constant 17 : index
    %c1_15 = arith.constant 1 : index
    %c0_16 = arith.constant 0 : index
    %10 = vector.load %arg5[%c17, %c1_15, %c0_16] : memref<18x18x4xf32, #tpu.memory_space<vmem>>, vector<1x16x4xf32>
    %11 = vector.shape_cast %10 : vector<1x16x4xf32> to vector<16x4xf32>
    %12 = vector.shape_cast %9 : vector<16x4xf32> to vector<1x16x4xf32>
    tpu.vector_store %arg5[%c17, %c1_15, %c0_16], %12 {strides = array<i32>} : memref<18x18x4xf32, #tpu.memory_space<vmem>>, vector<1x16x4xf32>,
    %c0_17 = arith.constant 0 : index
    %c2 = arith.constant 2 : index
    %c0_18 = arith.constant 0 : index
    %13 = vector.load %arg5[%c0_17, %c2, %c0_18] : memref<18x18x4xf32, #tpu.memory_space<vmem>>, vector<18x1x4xf32>
    %14 = vector.shape_cast %13 : vector<18x1x4xf32> to vector<18x4xf32>
    %c0_19 = arith.constant 0 : index
    %c0_20 = arith.constant 0 : index
    %c0_21 = arith.constant 0 : index
    %15 = vector.load %arg5[%c0_19, %c0_20, %c0_21] : memref<18x18x4xf32, #tpu.memory_space<vmem>>, vector<18x1x4xf32>
    %16 = vector.shape_cast %15 : vector<18x1x4xf32> to vector<18x4xf32>
    %17 = vector.shape_cast %14 : vector<18x4xf32> to vector<18x1x4xf32>
    tpu.vector_store %arg5[%c0_19, %c0_20, %c0_21], %17 {strides = array<i32>} : memref<18x18x4xf32, #tpu.memory_space<vmem>>, vector<18x1x4xf32>,
    %c0_22 = arith.constant 0 : index
    %c15 = arith.constant 15 : index
    %c0_23 = arith.constant 0 : index
    %18 = vector.load %arg5[%c0_22, %c15, %c0_23] : memref<18x18x4xf32, #tpu.memory_space<vmem>>, vector<18x1x4xf32>
    %19 = vector.shape_cast %18 : vector<18x1x4xf32> to vector<18x4xf32>
    %c0_24 = arith.constant 0 : index
    %c17_25 = arith.constant 17 : index
    %c0_26 = arith.constant 0 : index
    %20 = vector.load %arg5[%c0_24, %c17_25, %c0_26] : memref<18x18x4xf32, #tpu.memory_space<vmem>>, vector<18x1x4xf32>
    %21 = vector.shape_cast %20 : vector<18x1x4xf32> to vector<18x4xf32>
    %22 = vector.shape_cast %19 : vector<18x4xf32> to vector<18x1x4xf32>
    tpu.vector_store %arg5[%c0_24, %c17_25, %c0_26], %22 {strides = array<i32>} : memref<18x18x4xf32, #tpu.memory_space<vmem>>, vector<18x1x4xf32>,
    %c0_27 = arith.constant 0 : index
    %c0_28 = arith.constant 0 : index
    %23 = vector.load %arg2[%c0_27, %c0_28] : memref<36x4xf32, #tpu.memory_space<vmem>>, vector<36x4xf32>
    %c0_29 = arith.constant 0 : index
    %c0_30 = arith.constant 0 : index
    %c0_31 = arith.constant 0 : index
    %24 = vector.load %arg5[%c0_29, %c0_30, %c0_31] : memref<18x18x4xf32, #tpu.memory_space<vmem>>, vector<16x16x4xf32>
    %c0_32 = arith.constant 0 : index
    %c1_33 = arith.constant 1 : index
    %c0_34 = arith.constant 0 : index
    %25 = vector.load %arg5[%c0_32, %c1_33, %c0_34] : memref<18x18x4xf32, #tpu.memory_space<vmem>>, vector<16x16x4xf32>
    %c0_35 = arith.constant 0 : index
    %c2_36 = arith.constant 2 : index
    %c0_37 = arith.constant 0 : index
    %26 = vector.load %arg5[%c0_35, %c2_36, %c0_37] : memref<18x18x4xf32, #tpu.memory_space<vmem>>, vector<16x16x4xf32>
    %c1_38 = arith.constant 1 : index
    %c0_39 = arith.constant 0 : index
    %c0_40 = arith.constant 0 : index
    %27 = vector.load %arg5[%c1_38, %c0_39, %c0_40] : memref<18x18x4xf32, #tpu.memory_space<vmem>>, vector<16x16x4xf32>
    %c1_41 = arith.constant 1 : index
    %c1_42 = arith.constant 1 : index
    %c0_43 = arith.constant 0 : index
    %28 = vector.load %arg5[%c1_41, %c1_42, %c0_43] : memref<18x18x4xf32, #tpu.memory_space<vmem>>, vector<16x16x4xf32>
    %c1_44 = arith.constant 1 : index
    %c2_45 = arith.constant 2 : index
    %c0_46 = arith.constant 0 : index
    %29 = vector.load %arg5[%c1_44, %c2_45, %c0_46] : memref<18x18x4xf32, #tpu.memory_space<vmem>>, vector<16x16x4xf32>
    %c2_47 = arith.constant 2 : index
    %c0_48 = arith.constant 0 : index
    %c0_49 = arith.constant 0 : index
    %30 = vector.load %arg5[%c2_47, %c0_48, %c0_49] : memref<18x18x4xf32, #tpu.memory_space<vmem>>, vector<16x16x4xf32>
    %c2_50 = arith.constant 2 : index
    %c1_51 = arith.constant 1 : index
    %c0_52 = arith.constant 0 : index
    %31 = vector.load %arg5[%c2_50, %c1_51, %c0_52] : memref<18x18x4xf32, #tpu.memory_space<vmem>>, vector<16x16x4xf32>
    %c2_53 = arith.constant 2 : index
    %c2_54 = arith.constant 2 : index
    %c0_55 = arith.constant 0 : index
    %32 = vector.load %arg5[%c2_53, %c2_54, %c0_55] : memref<18x18x4xf32, #tpu.memory_space<vmem>>, vector<16x16x4xf32>
    %33 = tpu.concatenate %24, %25, %26, %27, %28, %29, %30, %31, %32 in 2 : vector<16x16x4xf32>, vector<16x16x4xf32>, vector<16x16x4xf32>, vector<16x16x4xf32>, vector<16x16x4xf32>, vector<16x16x4xf32>, vector<16x16x4xf32>, vector<16x16x4xf32>, vector<16x16x4xf32> -> vector<16x16x36xf32>
    %34 = vector.shape_cast %33 : vector<16x16x36xf32> to vector<256x36xf32>
    %cst = arith.constant dense<0.000000e+00> : vector<256x4xf32>
    %35 = tpu.matmul %34, %23, %cst {dimension_numbers = #tpu.dot_dimension_numbers<[1], [0], [0], [1], [0, 0, 1, 1], [], []>} : vector<256x36xf32>, vector<36x4xf32>, vector<256x4xf32> -> vector<256x4xf32>
    %cst_56 = arith.constant dense<0.000000e+00> : vector<4xf32>
    %36 = vector.multi_reduction <add>, %35, %cst_56 [0] : vector<256x4xf32> to vector<4xf32>
    %37 = vector.shape_cast %36 : vector<4xf32> to vector<1x4xf32>
    %cst_57 = arith.constant 3.906250e-03 : f32
    %38 = vector.broadcast %cst_57 : f32 to vector<1x4xf32>
    %39 = arith.mulf %37, %38 : vector<1x4xf32>
    %40 = vector.broadcast %39 : vector<1x4xf32> to vector<256x4xf32>
    %41 = arith.subf %35, %40 : vector<256x4xf32>
    %42 = arith.mulf %41, %41 : vector<256x4xf32>
    %cst_58 = arith.constant dense<0.000000e+00> : vector<4xf32>
    %43 = vector.multi_reduction <add>, %42, %cst_58 [0] : vector<256x4xf32> to vector<4xf32>
    %44 = vector.shape_cast %43 : vector<4xf32> to vector<1x4xf32>
    %cst_59 = arith.constant 3.906250e-03 : f32
    %45 = vector.broadcast %cst_59 : f32 to vector<1x4xf32>
    %46 = arith.mulf %44, %45 : vector<1x4xf32>
    %cst_60 = arith.constant 9.99999974E-6 : f32
    %47 = vector.broadcast %cst_60 : f32 to vector<1x4xf32>
    %48 = arith.addf %46, %47 : vector<1x4xf32>
    %49 = math.rsqrt %48 : vector<1x4xf32>
    %50 = vector.broadcast %49 : vector<1x4xf32> to vector<256x4xf32>
    %51 = arith.mulf %41, %50 : vector<256x4xf32>
    %cst_61 = arith.constant 0.000000e+00 : f32
    %52 = vector.broadcast %cst_61 : f32 to vector<256x4xf32>
    %53 = arith.maximumf %51, %52 : vector<256x4xf32>
    %54 = vector.shape_cast %53 : vector<256x4xf32> to vector<16x16x4xf32>
    %c1_62 = arith.constant 1 : index
    %c1_63 = arith.constant 1 : index
    %c0_64 = arith.constant 0 : index
    %55 = vector.load %arg5[%c1_62, %c1_63, %c0_64] : memref<18x18x4xf32, #tpu.memory_space<vmem>>, vector<16x16x4xf32>
    tpu.vector_store %arg5[%c1_62, %c1_63, %c0_64], %54 {strides = array<i32>} : memref<18x18x4xf32, #tpu.memory_space<vmem>>, vector<16x16x4xf32>,
    %56 = vector.extract_strided_slice %54 {offsets = [1, 0, 0], sizes = [1, 16, 4], strides = [1, 1, 1]} : vector<16x16x4xf32> to vector<1x16x4xf32>
    %57 = vector.shape_cast %56 : vector<1x16x4xf32> to vector<16x4xf32>
    %c0_65 = arith.constant 0 : index
    %c1_66 = arith.constant 1 : index
    %c0_67 = arith.constant 0 : index
    %58 = vector.load %arg5[%c0_65, %c1_66, %c0_67] : memref<18x18x4xf32, #tpu.memory_space<vmem>>, vector<1x16x4xf32>
    %59 = vector.shape_cast %58 : vector<1x16x4xf32> to vector<16x4xf32>
    %60 = vector.shape_cast %57 : vector<16x4xf32> to vector<1x16x4xf32>
    tpu.vector_store %arg5[%c0_65, %c1_66, %c0_67], %60 {strides = array<i32>} : memref<18x18x4xf32, #tpu.memory_space<vmem>>, vector<1x16x4xf32>,
    %61 = vector.extract_strided_slice %54 {offsets = [14, 0, 0], sizes = [1, 16, 4], strides = [1, 1, 1]} : vector<16x16x4xf32> to vector<1x16x4xf32>
    %62 = vector.shape_cast %61 : vector<1x16x4xf32> to vector<16x4xf32>
    %c17_68 = arith.constant 17 : index
    %c1_69 = arith.constant 1 : index
    %c0_70 = arith.constant 0 : index
    %63 = vector.load %arg5[%c17_68, %c1_69, %c0_70] : memref<18x18x4xf32, #tpu.memory_space<vmem>>, vector<1x16x4xf32>
    %64 = vector.shape_cast %63 : vector<1x16x4xf32> to vector<16x4xf32>
    %65 = vector.shape_cast %62 : vector<16x4xf32> to vector<1x16x4xf32>
    tpu.vector_store %arg5[%c17_68, %c1_69, %c0_70], %65 {strides = array<i32>} : memref<18x18x4xf32, #tpu.memory_space<vmem>>, vector<1x16x4xf32>,
    %c0_71 = arith.constant 0 : index
    %c2_72 = arith.constant 2 : index
    %c0_73 = arith.constant 0 : index
    %66 = vector.load %arg5[%c0_71, %c2_72, %c0_73] : memref<18x18x4xf32, #tpu.memory_space<vmem>>, vector<18x1x4xf32>
    %67 = vector.shape_cast %66 : vector<18x1x4xf32> to vector<18x4xf32>
    %c0_74 = arith.constant 0 : index
    %c0_75 = arith.constant 0 : index
    %c0_76 = arith.constant 0 : index
    %68 = vector.load %arg5[%c0_74, %c0_75, %c0_76] : memref<18x18x4xf32, #tpu.memory_space<vmem>>, vector<18x1x4xf32>
    %69 = vector.shape_cast %68 : vector<18x1x4xf32> to vector<18x4xf32>
    %70 = vector.shape_cast %67 : vector<18x4xf32> to vector<18x1x4xf32>
    tpu.vector_store %arg5[%c0_74, %c0_75, %c0_76], %70 {strides = array<i32>} : memref<18x18x4xf32, #tpu.memory_space<vmem>>, vector<18x1x4xf32>,
    %c0_77 = arith.constant 0 : index
    %c15_78 = arith.constant 15 : index
    %c0_79 = arith.constant 0 : index
    %71 = vector.load %arg5[%c0_77, %c15_78, %c0_79] : memref<18x18x4xf32, #tpu.memory_space<vmem>>, vector<18x1x4xf32>
    %72 = vector.shape_cast %71 : vector<18x1x4xf32> to vector<18x4xf32>
    %c0_80 = arith.constant 0 : index
    %c17_81 = arith.constant 17 : index
    %c0_82 = arith.constant 0 : index
    %73 = vector.load %arg5[%c0_80, %c17_81, %c0_82] : memref<18x18x4xf32, #tpu.memory_space<vmem>>, vector<18x1x4xf32>
    %74 = vector.shape_cast %73 : vector<18x1x4xf32> to vector<18x4xf32>
    %75 = vector.shape_cast %72 : vector<18x4xf32> to vector<18x1x4xf32>
    tpu.vector_store %arg5[%c0_80, %c17_81, %c0_82], %75 {strides = array<i32>} : memref<18x18x4xf32, #tpu.memory_space<vmem>>, vector<18x1x4xf32>,
    %c0_83 = arith.constant 0 : index
    %c0_84 = arith.constant 0 : index
    %76 = vector.load %arg3[%c0_83, %c0_84] : memref<36x4xf32, #tpu.memory_space<vmem>>, vector<36x4xf32>
    %c0_85 = arith.constant 0 : index
    %c0_86 = arith.constant 0 : index
    %c0_87 = arith.constant 0 : index
    %77 = vector.load %arg5[%c0_85, %c0_86, %c0_87] : memref<18x18x4xf32, #tpu.memory_space<vmem>>, vector<16x16x4xf32>
    %c0_88 = arith.constant 0 : index
    %c1_89 = arith.constant 1 : index
    %c0_90 = arith.constant 0 : index
    %78 = vector.load %arg5[%c0_88, %c1_89, %c0_90] : memref<18x18x4xf32, #tpu.memory_space<vmem>>, vector<16x16x4xf32>
    %c0_91 = arith.constant 0 : index
    %c2_92 = arith.constant 2 : index
    %c0_93 = arith.constant 0 : index
    %79 = vector.load %arg5[%c0_91, %c2_92, %c0_93] : memref<18x18x4xf32, #tpu.memory_space<vmem>>, vector<16x16x4xf32>
    %c1_94 = arith.constant 1 : index
    %c0_95 = arith.constant 0 : index
    %c0_96 = arith.constant 0 : index
    %80 = vector.load %arg5[%c1_94, %c0_95, %c0_96] : memref<18x18x4xf32, #tpu.memory_space<vmem>>, vector<16x16x4xf32>
    %c1_97 = arith.constant 1 : index
    %c1_98 = arith.constant 1 : index
    %c0_99 = arith.constant 0 : index
    %81 = vector.load %arg5[%c1_97, %c1_98, %c0_99] : memref<18x18x4xf32, #tpu.memory_space<vmem>>, vector<16x16x4xf32>
    %c1_100 = arith.constant 1 : index
    %c2_101 = arith.constant 2 : index
    %c0_102 = arith.constant 0 : index
    %82 = vector.load %arg5[%c1_100, %c2_101, %c0_102] : memref<18x18x4xf32, #tpu.memory_space<vmem>>, vector<16x16x4xf32>
    %c2_103 = arith.constant 2 : index
    %c0_104 = arith.constant 0 : index
    %c0_105 = arith.constant 0 : index
    %83 = vector.load %arg5[%c2_103, %c0_104, %c0_105] : memref<18x18x4xf32, #tpu.memory_space<vmem>>, vector<16x16x4xf32>
    %c2_106 = arith.constant 2 : index
    %c1_107 = arith.constant 1 : index
    %c0_108 = arith.constant 0 : index
    %84 = vector.load %arg5[%c2_106, %c1_107, %c0_108] : memref<18x18x4xf32, #tpu.memory_space<vmem>>, vector<16x16x4xf32>
    %c2_109 = arith.constant 2 : index
    %c2_110 = arith.constant 2 : index
    %c0_111 = arith.constant 0 : index
    %85 = vector.load %arg5[%c2_109, %c2_110, %c0_111] : memref<18x18x4xf32, #tpu.memory_space<vmem>>, vector<16x16x4xf32>
    %86 = tpu.concatenate %77, %78, %79, %80, %81, %82, %83, %84, %85 in 2 : vector<16x16x4xf32>, vector<16x16x4xf32>, vector<16x16x4xf32>, vector<16x16x4xf32>, vector<16x16x4xf32>, vector<16x16x4xf32>, vector<16x16x4xf32>, vector<16x16x4xf32>, vector<16x16x4xf32> -> vector<16x16x36xf32>
    %87 = vector.shape_cast %86 : vector<16x16x36xf32> to vector<256x36xf32>
    %cst_112 = arith.constant dense<0.000000e+00> : vector<256x4xf32>
    %88 = tpu.matmul %87, %76, %cst_112 {dimension_numbers = #tpu.dot_dimension_numbers<[1], [0], [0], [1], [0, 0, 1, 1], [], []>} : vector<256x36xf32>, vector<36x4xf32>, vector<256x4xf32> -> vector<256x4xf32>
    %cst_113 = arith.constant dense<0.000000e+00> : vector<4xf32>
    %89 = vector.multi_reduction <add>, %88, %cst_113 [0] : vector<256x4xf32> to vector<4xf32>
    %90 = vector.shape_cast %89 : vector<4xf32> to vector<1x4xf32>
    %cst_114 = arith.constant 3.906250e-03 : f32
    %91 = vector.broadcast %cst_114 : f32 to vector<1x4xf32>
    %92 = arith.mulf %90, %91 : vector<1x4xf32>
    %93 = vector.broadcast %92 : vector<1x4xf32> to vector<256x4xf32>
    %94 = arith.subf %88, %93 : vector<256x4xf32>
    %95 = arith.mulf %94, %94 : vector<256x4xf32>
    %cst_115 = arith.constant dense<0.000000e+00> : vector<4xf32>
    %96 = vector.multi_reduction <add>, %95, %cst_115 [0] : vector<256x4xf32> to vector<4xf32>
    %97 = vector.shape_cast %96 : vector<4xf32> to vector<1x4xf32>
    %cst_116 = arith.constant 3.906250e-03 : f32
    %98 = vector.broadcast %cst_116 : f32 to vector<1x4xf32>
    %99 = arith.mulf %97, %98 : vector<1x4xf32>
    %cst_117 = arith.constant 9.99999974E-6 : f32
    %100 = vector.broadcast %cst_117 : f32 to vector<1x4xf32>
    %101 = arith.addf %99, %100 : vector<1x4xf32>
    %102 = math.rsqrt %101 : vector<1x4xf32>
    %103 = vector.broadcast %102 : vector<1x4xf32> to vector<256x4xf32>
    %104 = arith.mulf %94, %103 : vector<256x4xf32>
    %105 = vector.shape_cast %104 : vector<256x4xf32> to vector<16x16x4xf32>
    %c0_118 = arith.constant 0 : index
    %c0_119 = arith.constant 0 : index
    %c0_120 = arith.constant 0 : index
    %c0_121 = arith.constant 0 : index
    %106 = vector.load %arg1[%c0_118, %c0_119, %c0_120, %c0_121] : memref<1x16x16x4xf32, #tpu.memory_space<vmem>>, vector<1x16x16x4xf32>
    %107 = vector.shape_cast %106 : vector<1x16x16x4xf32> to vector<16x16x4xf32>
    %108 = arith.addf %107, %105 : vector<16x16x4xf32>
    %c0_122 = arith.constant 0 : index
    %c0_123 = arith.constant 0 : index
    %c0_124 = arith.constant 0 : index
    %c0_125 = arith.constant 0 : index
    %109 = vector.load %arg4[%c0_122, %c0_123, %c0_124, %c0_125] : memref<1x16x16x4xf32, #tpu.memory_space<vmem>>, vector<1x16x16x4xf32>
    %110 = vector.shape_cast %109 : vector<1x16x16x4xf32> to vector<16x16x4xf32>
    %111 = vector.shape_cast %108 : vector<16x16x4xf32> to vector<1x16x16x4xf32>
    tpu.vector_store %arg4[%c0_122, %c0_123, %c0_124, %c0_125], %111 {strides = array<i32>} : memref<1x16x16x4xf32, #tpu.memory_space<vmem>>, vector<1x16x16x4xf32>,
    return
  }
  func.func @transform_0(%arg0: i32) -> (i32, i32, i32, i32) {
    %c0_i32 = arith.constant 0 : i32
    %c0_i32_0 = arith.constant 0 : i32
    %c0_i32_1 = arith.constant 0 : i32
    %c0_i32_2 = arith.constant 0 : i32
    return %arg0, %c0_i32, %c0_i32_0, %c0_i32_1 : i32, i32, i32, i32
  }
  func.func @transform_1(%arg0: i32) -> (i32, i32) {
    %c0_i32 = arith.constant 0 : i32
    %c0_i32_0 = arith.constant 0 : i32
    %c0_i32_1 = arith.constant 0 : i32
    return %c0_i32, %c0_i32_0 : i32, i32
  }
  func.func @transform_2(%arg0: i32) -> (i32, i32) {
    %c0_i32 = arith.constant 0 : i32
    %c0_i32_0 = arith.constant 0 : i32
    %c0_i32_1 = arith.constant 0 : i32
    return %c0_i32, %c0_i32_0 : i32, i32
  }
  func.func @transform_3(%arg0: i32) -> (i32, i32, i32, i32) {
    %c0_i32 = arith.constant 0 : i32
    %c0_i32_0 = arith.constant 0 : i32
    %c0_i32_1 = arith.constant 0 : i32
    %c0_i32_2 = arith.constant 0 : i32
    return %arg0, %c0_i32, %c0_i32_0, %c0_i32_1 : i32, i32, i32, i32
  }
}

</mosaic_0001>

<llo_original>
// kernel: tpu_custom_call.1
$region0: #{tpu_custom_call.1}
  #allocation0 [shape = 'u32[]', space=smem, size = 0x4, offset = 0x4, fixed_abs, tag = 'smem constant byte address 0x4 - core index']
  #allocation1 [shape = 'u32[144,128]{1,0:T(1,128)}', space=vmem, size = 0x12000, scoped, tag = 'internal scratch']
  #allocation2 [shape = 'f32[18,18,4]{2,1,0:T(8,128)}', space=vmem, size = 0x36000, scoped, tag = 'scratch operand']
  %s0 = inlined_call_operand.vmem [shape: f32[2,16,16,4], index: 0, kind: input, shape index: {}]
  %s1 = inlined_call_operand.vmem [shape: f32[36,4], index: 1, kind: input, shape index: {}]
  %s2 = inlined_call_operand.vmem [shape: f32[36,4], index: 2, kind: input, shape index: {}]
  %s3 = inlined_call_operand.vmem [shape: f32[2,16,16,4], index: 3, kind: output, shape index: {}]
  %s4 = sld [smem:[#allocation0]]
  $region45: #{tpu_custom_call.1} parent=0
    _
  %s6 = ssub.s32 1, %s4
  %s7 = scalar_select 0, %s6, %s4
  loop: start=0, step=1, limit=4
  $region2: #{tpu_custom_call.1} parent=0 // loop_pre_header
    _
  $region3: #{tpu_custom_call.1} parent=0 // loop_header
    %s9 = sphi 0, %s13
    %p10 = scmp.ge.s32.totalorder %s9, 4
    %s19 = sphi 0, %s21
    %s22 = sphi 0, %s19
    %s23 = sphi 0, %s22
    %s39 = sphi 0, %s23
    %s43 = sphi 0, %s43
    %s45 = sphi 0, %s43
    %s46 = sphi 0, %s45
    %s60 = sphi 0, %s46
    %s64 = sphi 0, %s64
    %s66 = sphi 0, %s64
    %s67 = sphi 0, %s66
    %s81 = sphi 0, %s67
    %s87 = sphi 0, %s89
    %s90 = sphi 0, %s87
    %s91 = sphi 0, %s90
    %s107 = sphi 0, %s91
  $region4: #{tpu_custom_call.1} parent=0 // loop_header_branch
    %12 = sbr.rel (%p10) target = $region8
  $region5: #{tpu_custom_call.1} parent=0 // loop_body
    %s14 = ssub.s32 %s9, 1
    %s15 = ssub.s32 %s9, 2
    %s16 = sadd.s32 %s9, 1
    %s17 = ssub.s32 %s9, %s16
    %p18 = scmp.eq.s32.totalorder %s17, 0
    %s20 = sadd.s32 %s19, 1
    %s21 = scalar_select %p18, %s19, %s20
    %p24 = pneg %p18
    %p25 = scmp.eq.s32.totalorder %s9, 1
    %p26 = por %p24, %p25
    %p27 = scmp.ne.s32.totalorder %s19, %s22
    %p28 = scmp.eq.s32.totalorder %s9, 0
    %p29 = por %p27, %p28
    %p30 = scmp.ne.s32.totalorder %s19, %s22
    %p31 = scmp.eq.s32.totalorder %s14, 1
    %p32 = por %p30, %p31
    %p33 = scmp.ne.s32.totalorder %s22, %s23
    %p34 = scmp.eq.s32.totalorder %s14, 0
    %p35 = por %p33, %p34
    %p36 = scmp.ne.s32.totalorder %s22, %s23
    %p37 = scmp.eq.s32.totalorder %s15, 1
    %p38 = por %p36, %p37
    %p40 = scmp.ne.s32.totalorder %s23, %s39
    %p41 = scmp.eq.s32.totalorder %s15, 0
    %p42 = por %p40, %p41
    %s44 = sadd.s32 %s43, 1
    %p47 = scmp.eq.s32.totalorder %s9, 1
    %p48 = scmp.ne.s32.totalorder %s43, %s45
    %p49 = scmp.eq.s32.totalorder %s9, 0
    %p50 = por %p48, %p49
    %p51 = scmp.ne.s32.totalorder %s43, %s45
    %p52 = scmp.eq.s32.totalorder %s14, 1
    %p53 = por %p51, %p52
    %p54 = scmp.ne.s32.totalorder %s45, %s46
    %p55 = scmp.eq.s32.totalorder %s14, 0
    %p56 = por %p54, %p55
    %p57 = scmp.ne.s32.totalorder %s45, %s46
    %p58 = scmp.eq.s32.totalorder %s15, 1
    %p59 = por %p57, %p58
    %p61 = scmp.ne.s32.totalorder %s46, %s60
    %p62 = scmp.eq.s32.totalorder %s15, 0
    %p63 = por %p61, %p62
    %s65 = sadd.s32 %s64, 1
    %p68 = scmp.eq.s32.totalorder %s9, 1
    %p69 = scmp.ne.s32.totalorder %s64, %s66
    %p70 = scmp.eq.s32.totalorder %s9, 0
    %p71 = por %p69, %p70
    %p72 = scmp.ne.s32.totalorder %s64, %s66
    %p73 = scmp.eq.s32.totalorder %s14, 1
    %p74 = por %p72, %p73
    %p75 = scmp.ne.s32.totalorder %s66, %s67
    %p76 = scmp.eq.s32.totalorder %s14, 0
    %p77 = por %p75, %p76
    %p78 = scmp.ne.s32.totalorder %s66, %s67
    %p79 = scmp.eq.s32.totalorder %s15, 1
    %p80 = por %p78, %p79
    %p82 = scmp.ne.s32.totalorder %s67, %s81
    %p83 = scmp.eq.s32.totalorder %s15, 0
    %p84 = por %p82, %p83
    %s85 = ssub.s32 %s9, %s16
    %p86 = scmp.eq.s32.totalorder %s85, 0
    %s88 = sadd.s32 %s87, 1
    %s89 = scalar_select %p86, %s87, %s88
    %p92 = pneg %p86
    %p93 = scmp.eq.s32.totalorder %s9, 1
    %p94 = por %p92, %p93
    %p95 = scmp.ne.s32.totalorder %s87, %s90
    %p96 = scmp.eq.s32.totalorder %s9, 0
    %p97 = por %p95, %p96
    %p98 = scmp.ne.s32.totalorder %s87, %s90
    %p99 = scmp.eq.s32.totalorder %s14, 1
    %p100 = por %p98, %p99
    %p101 = scmp.ne.s32.totalorder %s90, %s91
    %p102 = scmp.eq.s32.totalorder %s14, 0
    %p103 = por %p101, %p102
    %p104 = scmp.ne.s32.totalorder %s90, %s91
    %p105 = scmp.eq.s32.totalorder %s15, 1
    %p106 = por %p104, %p105
    %p108 = scmp.ne.s32.totalorder %s91, %s107
    %p109 = scmp.eq.s32.totalorder %s15, 0
    %p110 = por %p108, %p109
    %p111 = scmp.le.s32.totalorder 1, %s9
    %p112 = scmp.lt.s32.totalorder %s9, 3
    %p113 = pnand %p111, %p112
    %p114 = pneg %p113
    // Predicated region
    $region9: #{tpu_custom_call.1} parent=5 // pred_check
      _
    $region10: #{tpu_custom_call.1} parent=5 // pred_check_branch
      %116 = sbr.rel (%p113) target = $region12
    $region11: #{tpu_custom_call.1} parent=5 // pred_region
      %s117 = ssub.s32 %s9, 1
      // Predicated region
      $region13: #{tpu_custom_call.1} parent=11 // pred_check
        %p118 = pneg %p56
      $region14: #{tpu_custom_call.1} parent=11 // pred_check_branch
        %120 = sbr.rel (%p118) target = $region16
      $region15: #{tpu_custom_call.1} parent=11 // pred_region
        _
      $region16: #{tpu_custom_call.1} parent=11 // pred_fallthru
        _
      // Predicated region
      $region17: #{tpu_custom_call.1} parent=11 // pred_check
        %p121 = pneg %p77
      $region18: #{tpu_custom_call.1} parent=11 // pred_check_branch
        %123 = sbr.rel (%p121) target = $region20
      $region19: #{tpu_custom_call.1} parent=11 // pred_region
        _
      $region20: #{tpu_custom_call.1} parent=11 // pred_fallthru
        _
    $region12: #{tpu_custom_call.1} parent=5 // pred_fallthru
      _
    %p124 = scmp.lt.s32.totalorder %s9, 2
    // Predicated region
    $region21: #{tpu_custom_call.1} parent=5 // pred_check
      %p125 = pneg %p124
    $region22: #{tpu_custom_call.1} parent=5 // pred_check_branch
      %127 = sbr.rel (%p125) target = $region24
    $region23: #{tpu_custom_call.1} parent=5 // pred_region
      // Predicated region
      $region25: #{tpu_custom_call.1} parent=23 // pred_check
        %p128 = pneg %p29
      $region26: #{tpu_custom_call.1} parent=23 // pred_check_branch
        %130 = sbr.rel (%p128) target = $region28
      $region27: #{tpu_custom_call.1} parent=23 // pred_region
        %p131 = scmp.lt.s32.totalorder %s9, 1
        %s132 = scalar_select %p131, %s9, 1
        %s133 = smul.addr %s132, 32
        %s134 = smul.addr %s133, 8
        %s135 = scalar_lea.vmem %s0, %s134
      $region28: #{tpu_custom_call.1} parent=23 // pred_fallthru
        _
    $region24: #{tpu_custom_call.1} parent=5 // pred_fallthru
      _
    %p136 = scmp.le.s32.totalorder 1, %s9
    %p137 = scmp.lt.s32.totalorder %s9, 3
    %p138 = pnand %p136, %p137
    %p139 = pneg %p138
    // Predicated region
    $region29: #{tpu_custom_call.1} parent=5 // pred_check
      _
    $region30: #{tpu_custom_call.1} parent=5 // pred_check_branch
      %141 = sbr.rel (%p138) target = $region32
    $region31: #{tpu_custom_call.1} parent=5 // pred_region
      %s142 = ssub.s32 %s9, 1
      %p143 = scmp.lt.s32.totalorder %s14, 1
      %s144 = scalar_select %p143, %s14, 1
      %s145 = smul.addr %s144, 32
      %s146 = smul.addr %s145, 8
      %s147 = scalar_lea.vmem %s0, %s146
      %p148 = pneg %p35
      %p149 = pneg %p32
      %p150 = pneg %p56
      %p151 = pneg %p53
      %p152 = pneg %p77
      %p153 = pneg %p74
      %p154 = pneg %p103
      %p155 = pneg %p100
      %p156 = scmp.lt.s32.totalorder %s14, 1
      %s157 = scalar_select %p156, %s14, 1
      %s158 = smul.addr %s157, 32
      %s159 = smul.addr %s158, 8
      %s160 = scalar_lea.vmem %s3, %s159
      %p161 = scmp.lt.s32.totalorder %s14, 1
      %s162 = scalar_select %p161, %s14, 1
      %s163 = smul.addr %s162, 32
      %s164 = smul.addr %s163, 8
      %s165 = scalar_lea.vmem %s0, %s164
      %p166 = scmp.lt.s32.totalorder %s14, 1
      %s167 = scalar_select %p166, %s14, 1
      %s168 = smul.addr %s167, 32
      %s169 = smul.addr %s168, 8
      %s170 = scalar_lea.vmem %s3, %s169
      %v171 = vld [vmem:[%s165] sm:$0xff]
      %v172 = vld [vmem:[%s165 + $0x8] sm:$0xff]
      %v173 = vld [vmem:[%s165 + $0x10] sm:$0xff]
      %v174 = vld [vmem:[%s165 + $0x18] sm:$0xff]
      %v175 = vld [vmem:[%s165 + $0x20] sm:$0xff]
      %v176 = vld [vmem:[%s165 + $0x28] sm:$0xff]
      %v177 = vld [vmem:[%s165 + $0x30] sm:$0xff]
      %v178 = vld [vmem:[%s165 + $0x38] sm:$0xff]
      %v179 = vld [vmem:[%s165 + $0x40] sm:$0xff]
      %v180 = vld [vmem:[%s165 + $0x48] sm:$0xff]
      %v181 = vld [vmem:[%s165 + $0x50] sm:$0xff]
      %v182 = vld [vmem:[%s165 + $0x58] sm:$0xff]
      %v183 = vld [vmem:[%s165 + $0x60] sm:$0xff]
      %v184 = vld [vmem:[%s165 + $0x68] sm:$0xff]
      %v185 = vld [vmem:[%s165 + $0x70] sm:$0xff]
      %v186 = vld [vmem:[%s165 + $0x78] sm:$0xff]
      %v187 = vld [vmem:[%s165 + $0x80] sm:$0xff]
      %v188 = vld [vmem:[%s165 + $0x88] sm:$0xff]
      %v189 = vld [vmem:[%s165 + $0x90] sm:$0xff]
      %v190 = vld [vmem:[%s165 + $0x98] sm:$0xff]
      %v191 = vld [vmem:[%s165 + $0xa0] sm:$0xff]
      %v192 = vld [vmem:[%s165 + $0xa8] sm:$0xff]
      %v193 = vld [vmem:[%s165 + $0xb0] sm:$0xff]
      %v194 = vld [vmem:[%s165 + $0xb8] sm:$0xff]
      %v195 = vld [vmem:[%s165 + $0xc0] sm:$0xff]
      %v196 = vld [vmem:[%s165 + $0xc8] sm:$0xff]
      %v197 = vld [vmem:[%s165 + $0xd0] sm:$0xff]
      %v198 = vld [vmem:[%s165 + $0xd8] sm:$0xff]
      %v199 = vld [vmem:[%s165 + $0xe0] sm:$0xff]
      %v200 = vld [vmem:[%s165 + $0xe8] sm:$0xff]
      %v201 = vld [vmem:[%s165 + $0xf0] sm:$0xff]
      %v202 = vld [vmem:[%s165 + $0xf8] sm:$0xff]
      %s203 = scalar_lea.vmem [#allocation2], 24
      %vm204 = vcmask 31744
      %205 = vst.msk [vmem:[%s203 + $0x1] sm:$0xff] %vm204, %v171
      %206 = vst.msk [vmem:[%s203 + $0x9] sm:$0xff] %vm204, %v172
      %207 = vst.msk [vmem:[%s203 + $0x19] sm:$0xff] %vm204, %v173
      %208 = vst.msk [vmem:[%s203 + $0x21] sm:$0xff] %vm204, %v174
      %209 = vst.msk [vmem:[%s203 + $0x31] sm:$0xff] %vm204, %v175
      %210 = vst.msk [vmem:[%s203 + $0x39] sm:$0xff] %vm204, %v176
      %211 = vst.msk [vmem:[%s203 + $0x49] sm:$0xff] %vm204, %v177
      %212 = vst.msk [vmem:[%s203 + $0x51] sm:$0xff] %vm204, %v178
      %213 = vst.msk [vmem:[%s203 + $0x61] sm:$0xff] %vm204, %v179
      %214 = vst.msk [vmem:[%s203 + $0x69] sm:$0xff] %vm204, %v180
      %215 = vst.msk [vmem:[%s203 + $0x79] sm:$0xff] %vm204, %v181
      %216 = vst.msk [vmem:[%s203 + $0x81] sm:$0xff] %vm204, %v182
      %217 = vst.msk [vmem:[%s203 + $0x91] sm:$0xff] %vm204, %v183
      %218 = vst.msk [vmem:[%s203 + $0x99] sm:$0xff] %vm204, %v184
      %219 = vst.msk [vmem:[%s203 + $0xa9] sm:$0xff] %vm204, %v185
      %220 = vst.msk [vmem:[%s203 + $0xb1] sm:$0xff] %vm204, %v186
      %221 = vst.msk [vmem:[%s203 + $0xc1] sm:$0xff] %vm204, %v187
      %222 = vst.msk [vmem:[%s203 + $0xc9] sm:$0xff] %vm204, %v188
      %223 = vst.msk [vmem:[%s203 + $0xd9] sm:$0xff] %vm204, %v189
      %224 = vst.msk [vmem:[%s203 + $0xe1] sm:$0xff] %vm204, %v190
      %225 = vst.msk [vmem:[%s203 + $0xf1] sm:$0xff] %vm204, %v191
      %226 = vst.msk [vmem:[%s203 + $0xf9] sm:$0xff] %vm204, %v192
      %227 = vst.msk [vmem:[%s203 + $0x109] sm:$0xff] %vm204, %v193
      %228 = vst.msk [vmem:[%s203 + $0x111] sm:$0xff] %vm204, %v194
      %229 = vst.msk [vmem:[%s203 + $0x121] sm:$0xff] %vm204, %v195
      %230 = vst.msk [vmem:[%s203 + $0x129] sm:$0xff] %vm204, %v196
      %231 = vst.msk [vmem:[%s203 + $0x139] sm:$0xff] %vm204, %v197
      %232 = vst.msk [vmem:[%s203 + $0x141] sm:$0xff] %vm204, %v198
      %233 = vst.msk [vmem:[%s203 + $0x151] sm:$0xff] %vm204, %v199
      %234 = vst.msk [vmem:[%s203 + $0x159] sm:$0xff] %vm204, %v200
      %235 = vst.msk [vmem:[%s203 + $0x169] sm:$0xff] %vm204, %v201
      %236 = vst.msk [vmem:[%s203 + $0x171] sm:$0xff] %vm204, %v202
      %s237 = scalar_lea.vmem %s165, 16
      %v238 = vld [vmem:[%s237] sm:$0xff]
      %v239 = vld [vmem:[%s237 + $0x8] sm:$0xff]
      %240 = vst.msk [vmem:[#allocation2 + $0x1] sm:$0xff] %vm204, %v238
      %241 = vst.msk [vmem:[#allocation2 + $0x9] sm:$0xff] %vm204, %v239
      %s242 = scalar_lea.vmem %s165, 224
      %v243 = vld [vmem:[%s242] sm:$0xff]
      %v244 = vld [vmem:[%s242 + $0x8] sm:$0xff]
      %s245 = scalar_lea.vmem [#allocation2], 408
      %246 = vst.msk [vmem:[%s245 + $0x1] sm:$0xff] %vm204, %v243
      %247 = vst.msk [vmem:[%s245 + $0x9] sm:$0xff] %vm204, %v244
      %v248 = vld [vmem:[#allocation2 + $0x2] sm:$0x1]
      %v249 = vld [vmem:[#allocation2 + $0x1a] sm:$0x1]
      %v250 = vld [vmem:[#allocation2 + $0x32] sm:$0x1]
      %v251 = vld [vmem:[#allocation2 + $0x4a] sm:$0x1]
      %v252 = vld [vmem:[#allocation2 + $0x62] sm:$0x1]
      %v253 = vld [vmem:[#allocation2 + $0x7a] sm:$0x1]
      %v254 = vld [vmem:[#allocation2 + $0x92] sm:$0x1]
      %v255 = vld [vmem:[#allocation2 + $0xaa] sm:$0x1]
      %v256 = vld [vmem:[#allocation2 + $0xc2] sm:$0x1]
      %v257 = vld [vmem:[#allocation2 + $0xda] sm:$0x1]
      %v258 = vld [vmem:[#allocation2 + $0xf2] sm:$0x1]
      %v259 = vld [vmem:[#allocation2 + $0x10a] sm:$0x1]
      %v260 = vld [vmem:[#allocation2 + $0x122] sm:$0x1]
      %v261 = vld [vmem:[#allocation2 + $0x13a] sm:$0x1]
      %v262 = vld [vmem:[#allocation2 + $0x152] sm:$0x1]
      %v263 = vld [vmem:[#allocation2 + $0x16a] sm:$0x1]
      %v264 = vld [vmem:[#allocation2 + $0x182] sm:$0x1]
      %v265 = vld [vmem:[#allocation2 + $0x19a] sm:$0x1]
      %vm266 = vcmask 24576
      %267 = vst.msk [vmem:[#allocation2] sm:$0x1] %vm266, %v248
      %268 = vst.msk [vmem:[#allocation2 + $0x18] sm:$0x1] %vm266, %v249
      %269 = vst.msk [vmem:[#allocation2 + $0x30] sm:$0x1] %vm266, %v250
      %270 = vst.msk [vmem:[#allocation2 + $0x48] sm:$0x1] %vm266, %v251
      %271 = vst.msk [vmem:[#allocation2 + $0x60] sm:$0x1] %vm266, %v252
      %272 = vst.msk [vmem:[#allocation2 + $0x78] sm:$0x1] %vm266, %v253
      %273 = vst.msk [vmem:[#allocation2 + $0x90] sm:$0x1] %vm266, %v254
      %274 = vst.msk [vmem:[#allocation2 + $0xa8] sm:$0x1] %vm266, %v255
      %275 = vst.msk [vmem:[#allocation2 + $0xc0] sm:$0x1] %vm266, %v256
      %276 = vst.msk [vmem:[#allocation2 + $0xd8] sm:$0x1] %vm266, %v257
      %277 = vst.msk [vmem:[#allocation2 + $0xf0] sm:$0x1] %vm266, %v258
      %278 = vst.msk [vmem:[#allocation2 + $0x108] sm:$0x1] %vm266, %v259
      %279 = vst.msk [vmem:[#allocation2 + $0x120] sm:$0x1] %vm266, %v260
      %280 = vst.msk [vmem:[#allocation2 + $0x138] sm:$0x1] %vm266, %v261
      %281 = vst.msk [vmem:[#allocation2 + $0x150] sm:$0x1] %vm266, %v262
      %282 = vst.msk [vmem:[#allocation2 + $0x168] sm:$0x1] %vm266, %v263
      %283 = vst.msk [vmem:[#allocation2 + $0x180] sm:$0x1] %vm266, %v264
      %284 = vst.msk [vmem:[#allocation2 + $0x198] sm:$0x1] %vm266, %v265
      %v285 = vld [vmem:[#allocation2 + $0xf] sm:$0x1]
      %v286 = vld [vmem:[#allocation2 + $0x27] sm:$0x1]
      %v287 = vld [vmem:[#allocation2 + $0x3f] sm:$0x1]
      %v288 = vld [vmem:[#allocation2 + $0x57] sm:$0x1]
      %v289 = vld [vmem:[#allocation2 + $0x6f] sm:$0x1]
      %v290 = vld [vmem:[#allocation2 + $0x87] sm:$0x1]
      %v291 = vld [vmem:[#allocation2 + $0x9f] sm:$0x1]
      %v292 = vld [vmem:[#allocation2 + $0xb7] sm:$0x1]
      %v293 = vld [vmem:[#allocation2 + $0xcf] sm:$0x1]
      %v294 = vld [vmem:[#allocation2 + $0xe7] sm:$0x1]
      %v295 = vld [vmem:[#allocation2 + $0xff] sm:$0x1]
      %v296 = vld [vmem:[#allocation2 + $0x117] sm:$0x1]
      %v297 = vld [vmem:[#allocation2 + $0x12f] sm:$0x1]
      %v298 = vld [vmem:[#allocation2 + $0x147] sm:$0x1]
      %v299 = vld [vmem:[#allocation2 + $0x15f] sm:$0x1]
      %v300 = vld [vmem:[#allocation2 + $0x177] sm:$0x1]
      %v301 = vld [vmem:[#allocation2 + $0x18f] sm:$0x1]
      %v302 = vld [vmem:[#allocation2 + $0x1a7] sm:$0x1]
      %303 = vst.msk [vmem:[#allocation2 + $0x11] sm:$0x1] %vm266, %v285
      %304 = vst.msk [vmem:[#allocation2 + $0x29] sm:$0x1] %vm266, %v286
      %305 = vst.msk [vmem:[#allocation2 + $0x41] sm:$0x1] %vm266, %v287
      %306 = vst.msk [vmem:[#allocation2 + $0x59] sm:$0x1] %vm266, %v288
      %307 = vst.msk [vmem:[#allocation2 + $0x71] sm:$0x1] %vm266, %v289
      %308 = vst.msk [vmem:[#allocation2 + $0x89] sm:$0x1] %vm266, %v290
      %309 = vst.msk [vmem:[#allocation2 + $0xa1] sm:$0x1] %vm266, %v291
      %310 = vst.msk [vmem:[#allocation2 + $0xb9] sm:$0x1] %vm266, %v292
      %311 = vst.msk [vmem:[#allocation2 + $0xd1] sm:$0x1] %vm266, %v293
      %312 = vst.msk [vmem:[#allocation2 + $0xe9] sm:$0x1] %vm266, %v294
      %313 = vst.msk [vmem:[#allocation2 + $0x101] sm:$0x1] %vm266, %v295
      %314 = vst.msk [vmem:[#allocation2 + $0x119] sm:$0x1] %vm266, %v296
      %315 = vst.msk [vmem:[#allocation2 + $0x131] sm:$0x1] %vm266, %v297
      %316 = vst.msk [vmem:[#allocation2 + $0x149] sm:$0x1] %vm266, %v298
      %317 = vst.msk [vmem:[#allocation2 + $0x161] sm:$0x1] %vm266, %v299
      %318 = vst.msk [vmem:[#allocation2 + $0x179] sm:$0x1] %vm266, %v300
      %319 = vst.msk [vmem:[#allocation2 + $0x191] sm:$0x1] %vm266, %v301
      %320 = vst.msk [vmem:[#allocation2 + $0x1a9] sm:$0x1] %vm266, %v302
      %v321 = vld [vmem:[%s1] sm:$0xff]
      %v322 = vld [vmem:[%s1 + $0x8] sm:$0xff]
      %v323 = vld [vmem:[%s1 + $0x10] sm:$0xff]
      %v324 = vld [vmem:[%s1 + $0x18] sm:$0xff]
      %v325 = vld [vmem:[%s1 + $0x20] sm:$0xf]
      %v326 = vld [vmem:[#allocation2] sm:$0xff]
      %v327 = vld [vmem:[#allocation2 + $0x8] sm:$0xff]
      %v328 = vld [vmem:[#allocation2 + $0x18] sm:$0xff]
      %v329 = vld [vmem:[#allocation2 + $0x20] sm:$0xff]
      %v330 = vld [vmem:[#allocation2 + $0x30] sm:$0xff]
      %v331 = vld [vmem:[#allocation2 + $0x38] sm:$0xff]
      %v332 = vld [vmem:[#allocation2 + $0x48] sm:$0xff]
      %v333 = vld [vmem:[#allocation2 + $0x50] sm:$0xff]
      %v334 = vld [vmem:[#allocation2 + $0x60] sm:$0xff]
      %v335 = vld [vmem:[#allocation2 + $0x68] sm:$0xff]
      %v336 = vld [vmem:[#allocation2 + $0x78] sm:$0xff]
      %v337 = vld [vmem:[#allocation2 + $0x80] sm:$0xff]
      %v338 = vld [vmem:[#allocation2 + $0x90] sm:$0xff]
      %v339 = vld [vmem:[#allocation2 + $0x98] sm:$0xff]
      %v340 = vld [vmem:[#allocation2 + $0xa8] sm:$0xff]
      %v341 = vld [vmem:[#allocation2 + $0xb0] sm:$0xff]
      %v342 = vld [vmem:[#allocation2 + $0xc0] sm:$0xff]
      %v343 = vld [vmem:[#allocation2 + $0xc8] sm:$0xff]
      %v344 = vld [vmem:[#allocation2 + $0xd8] sm:$0xff]
      %v345 = vld [vmem:[#allocation2 + $0xe0] sm:$0xff]
      %v346 = vld [vmem:[#allocation2 + $0xf0] sm:$0xff]
      %v347 = vld [vmem:[#allocation2 + $0xf8] sm:$0xff]
      %v348 = vld [vmem:[#allocation2 + $0x108] sm:$0xff]
      %v349 = vld [vmem:[#allocation2 + $0x110] sm:$0xff]
      %v350 = vld [vmem:[#allocation2 + $0x120] sm:$0xff]
      %v351 = vld [vmem:[#allocation2 + $0x128] sm:$0xff]
      %v352 = vld [vmem:[#allocation2 + $0x138] sm:$0xff]
      %v353 = vld [vmem:[#allocation2 + $0x140] sm:$0xff]
      %v354 = vld [vmem:[#allocation2 + $0x150] sm:$0xff]
      %v355 = vld [vmem:[#allocation2 + $0x158] sm:$0xff]
      %v356 = vld [vmem:[#allocation2 + $0x168] sm:$0xff]
      %v357 = vld [vmem:[#allocation2 + $0x170] sm:$0xff]
      %v358 = vld [vmem:[#allocation2 + $0x1] sm:$0xff]
      %v359 = vld [vmem:[#allocation2 + $0x9] sm:$0xff]
      %v360 = vld [vmem:[#allocation2 + $0x19] sm:$0xff]
      %v361 = vld [vmem:[#allocation2 + $0x21] sm:$0xff]
      %v362 = vld [vmem:[#allocation2 + $0x31] sm:$0xff]
      %v363 = vld [vmem:[#allocation2 + $0x39] sm:$0xff]
      %v364 = vld [vmem:[#allocation2 + $0x49] sm:$0xff]
      %v365 = vld [vmem:[#allocation2 + $0x51] sm:$0xff]
      %v366 = vld [vmem:[#allocation2 + $0x61] sm:$0xff]
      %v367 = vld [vmem:[#allocation2 + $0x69] sm:$0xff]
      %v368 = vld [vmem:[#allocation2 + $0x79] sm:$0xff]
      %v369 = vld [vmem:[#allocation2 + $0x81] sm:$0xff]
      %v370 = vld [vmem:[#allocation2 + $0x91] sm:$0xff]
      %v371 = vld [vmem:[#allocation2 + $0x99] sm:$0xff]
      %v372 = vld [vmem:[#allocation2 + $0xa9] sm:$0xff]
      %v373 = vld [vmem:[#allocation2 + $0xb1] sm:$0xff]
      %v374 = vld [vmem:[#allocation2 + $0xc1] sm:$0xff]
      %v375 = vld [vmem:[#allocation2 + $0xc9] sm:$0xff]
      %v376 = vld [vmem:[#allocation2 + $0xd9] sm:$0xff]
      %v377 = vld [vmem:[#allocation2 + $0xe1] sm:$0xff]
      %v378 = vld [vmem:[#allocation2 + $0xf1] sm:$0xff]
      %v379 = vld [vmem:[#allocation2 + $0xf9] sm:$0xff]
      %v380 = vld [vmem:[#allocation2 + $0x109] sm:$0xff]
      %v381 = vld [vmem:[#allocation2 + $0x111] sm:$0xff]
      %v382 = vld [vmem:[#allocation2 + $0x121] sm:$0xff]
      %v383 = vld [vmem:[#allocation2 + $0x129] sm:$0xff]
      %v384 = vld [vmem:[#allocation2 + $0x139] sm:$0xff]
      %v385 = vld [vmem:[#allocation2 + $0x141] sm:$0xff]
      %v386 = vld [vmem:[#allocation2 + $0x151] sm:$0xff]
      %v387 = vld [vmem:[#allocation2 + $0x159] sm:$0xff]
      %v388 = vld [vmem:[#allocation2 + $0x169] sm:$0xff]
      %v389 = vld [vmem:[#allocation2 + $0x171] sm:$0xff]
      %v390 = vld [vmem:[#allocation2 + $0x2] sm:$0xff]
      %v391 = vld [vmem:[#allocation2 + $0xa] sm:$0xff]
      %v392 = vld [vmem:[#allocation2 + $0x1a] sm:$0xff]
      %v393 = vld [vmem:[#allocation2 + $0x22] sm:$0xff]
      %v394 = vld [vmem:[#allocation2 + $0x32] sm:$0xff]
      %v395 = vld [vmem:[#allocation2 + $0x3a] sm:$0xff]
      %v396 = vld [vmem:[#allocation2 + $0x4a] sm:$0xff]
      %v397 = vld [vmem:[#allocation2 + $0x52] sm:$0xff]
      %v398 = vld [vmem:[#allocation2 + $0x62] sm:$0xff]
      %v399 = vld [vmem:[#allocation2 + $0x6a] sm:$0xff]
      %v400 = vld [vmem:[#allocation2 + $0x7a] sm:$0xff]
      %v401 = vld [vmem:[#allocation2 + $0x82] sm:$0xff]
      %v402 = vld [vmem:[#allocation2 + $0x92] sm:$0xff]
      %v403 = vld [vmem:[#allocation2 + $0x9a] sm:$0xff]
      %v404 = vld [vmem:[#allocation2 + $0xaa] sm:$0xff]
      %v405 = vld [vmem:[#allocation2 + $0xb2] sm:$0xff]
      %v406 = vld [vmem:[#allocation2 + $0xc2] sm:$0xff]
      %v407 = vld [vmem:[#allocation2 + $0xca] sm:$0xff]
      %v408 = vld [vmem:[#allocation2 + $0xda] sm:$0xff]
      %v409 = vld [vmem:[#allocation2 + $0xe2] sm:$0xff]
      %v410 = vld [vmem:[#allocation2 + $0xf2] sm:$0xff]
      %v411 = vld [vmem:[#allocation2 + $0xfa] sm:$0xff]
      %v412 = vld [vmem:[#allocation2 + $0x10a] sm:$0xff]
      %v413 = vld [vmem:[#allocation2 + $0x112] sm:$0xff]
      %v414 = vld [vmem:[#allocation2 + $0x122] sm:$0xff]
      %v415 = vld [vmem:[#allocation2 + $0x12a] sm:$0xff]
      %v416 = vld [vmem:[#allocation2 + $0x13a] sm:$0xff]
      %v417 = vld [vmem:[#allocation2 + $0x142] sm:$0xff]
      %v418 = vld [vmem:[#allocation2 + $0x152] sm:$0xff]
      %v419 = vld [vmem:[#allocation2 + $0x15a] sm:$0xff]
      %v420 = vld [vmem:[#allocation2 + $0x16a] sm:$0xff]
      %v421 = vld [vmem:[#allocation2 + $0x172] sm:$0xff]
      %v422 = vld [vmem:[%s203] sm:$0xff]
      %v423 = vld [vmem:[%s203 + $0x8] sm:$0xff]
      %v424 = vld [vmem:[%s203 + $0x18] sm:$0xff]
      %v425 = vld [vmem:[%s203 + $0x20] sm:$0xff]
      %v426 = vld [vmem:[%s203 + $0x30] sm:$0xff]
      %v427 = vld [vmem:[%s203 + $0x38] sm:$0xff]
      %v428 = vld [vmem:[%s203 + $0x48] sm:$0xff]
      %v429 = vld [vmem:[%s203 + $0x50] sm:$0xff]
      %v430 = vld [vmem:[%s203 + $0x60] sm:$0xff]
      %v431 = vld [vmem:[%s203 + $0x68] sm:$0xff]
      %v432 = vld [vmem:[%s203 + $0x78] sm:$0xff]
      %v433 = vld [vmem:[%s203 + $0x80] sm:$0xff]
      %v434 = vld [vmem:[%s203 + $0x90] sm:$0xff]
      %v435 = vld [vmem:[%s203 + $0x98] sm:$0xff]
      %v436 = vld [vmem:[%s203 + $0xa8] sm:$0xff]
      %v437 = vld [vmem:[%s203 + $0xb0] sm:$0xff]
      %v438 = vld [vmem:[%s203 + $0xc0] sm:$0xff]
      %v439 = vld [vmem:[%s203 + $0xc8] sm:$0xff]
      %v440 = vld [vmem:[%s203 + $0xd8] sm:$0xff]
      %v441 = vld [vmem:[%s203 + $0xe0] sm:$0xff]
      %v442 = vld [vmem:[%s203 + $0xf0] sm:$0xff]
      %v443 = vld [vmem:[%s203 + $0xf8] sm:$0xff]
      %v444 = vld [vmem:[%s203 + $0x108] sm:$0xff]
      %v445 = vld [vmem:[%s203 + $0x110] sm:$0xff]
      %v446 = vld [vmem:[%s203 + $0x120] sm:$0xff]
      %v447 = vld [vmem:[%s203 + $0x128] sm:$0xff]
      %v448 = vld [vmem:[%s203 + $0x138] sm:$0xff]
      %v449 = vld [vmem:[%s203 + $0x140] sm:$0xff]
      %v450 = vld [vmem:[%s203 + $0x150] sm:$0xff]
      %v451 = vld [vmem:[%s203 + $0x158] sm:$0xff]
      %v452 = vld [vmem:[%s203 + $0x168] sm:$0xff]
      %v453 = vld [vmem:[%s203 + $0x170] sm:$0xff]
      %v454 = vld [vmem:[%s203 + $0x1] sm:$0xff]
      %v455 = vld [vmem:[%s203 + $0x9] sm:$0xff]
      %v456 = vld [vmem:[%s203 + $0x19] sm:$0xff]
      %v457 = vld [vmem:[%s203 + $0x21] sm:$0xff]
      %v458 = vld [vmem:[%s203 + $0x31] sm:$0xff]
      %v459 = vld [vmem:[%s203 + $0x39] sm:$0xff]
      %v460 = vld [vmem:[%s203 + $0x49] sm:$0xff]
      %v461 = vld [vmem:[%s203 + $0x51] sm:$0xff]
      %v462 = vld [vmem:[%s203 + $0x61] sm:$0xff]
      %v463 = vld [vmem:[%s203 + $0x69] sm:$0xff]
      %v464 = vld [vmem:[%s203 + $0x79] sm:$0xff]
      %v465 = vld [vmem:[%s203 + $0x81] sm:$0xff]
      %v466 = vld [vmem:[%s203 + $0x91] sm:$0xff]
      %v467 = vld [vmem:[%s203 + $0x99] sm:$0xff]
      %v468 = vld [vmem:[%s203 + $0xa9] sm:$0xff]
      %v469 = vld [vmem:[%s203 + $0xb1] sm:$0xff]
      %v470 = vld [vmem:[%s203 + $0xc1] sm:$0xff]
      %v471 = vld [vmem:[%s203 + $0xc9] sm:$0xff]
      %v472 = vld [vmem:[%s203 + $0xd9] sm:$0xff]
      %v473 = vld [vmem:[%s203 + $0xe1] sm:$0xff]
      %v474 = vld [vmem:[%s203 + $0xf1] sm:$0xff]
      %v475 = vld [vmem:[%s203 + $0xf9] sm:$0xff]
      %v476 = vld [vmem:[%s203 + $0x109] sm:$0xff]
      %v477 = vld [vmem:[%s203 + $0x111] sm:$0xff]
      %v478 = vld [vmem:[%s203 + $0x121] sm:$0xff]
      %v479 = vld [vmem:[%s203 + $0x129] sm:$0xff]
      %v480 = vld [vmem:[%s203 + $0x139] sm:$0xff]
      %v481 = vld [vmem:[%s203 + $0x141] sm:$0xff]
      %v482 = vld [vmem:[%s203 + $0x151] sm:$0xff]
      %v483 = vld [vmem:[%s203 + $0x159] sm:$0xff]
      %v484 = vld [vmem:[%s203 + $0x169] sm:$0xff]
      %v485 = vld [vmem:[%s203 + $0x171] sm:$0xff]
      %v486 = vld [vmem:[%s203 + $0x2] sm:$0xff]
      %v487 = vld [vmem:[%s203 + $0xa] sm:$0xff]
      %v488 = vld [vmem:[%s203 + $0x1a] sm:$0xff]
      %v489 = vld [vmem:[%s203 + $0x22] sm:$0xff]
      %v490 = vld [vmem:[%s203 + $0x32] sm:$0xff]
      %v491 = vld [vmem:[%s203 + $0x3a] sm:$0xff]
      %v492 = vld [vmem:[%s203 + $0x4a] sm:$0xff]
      %v493 = vld [vmem:[%s203 + $0x52] sm:$0xff]
      %v494 = vld [vmem:[%s203 + $0x62] sm:$0xff]
      %v495 = vld [vmem:[%s203 + $0x6a] sm:$0xff]
      %v496 = vld [vmem:[%s203 + $0x7a] sm:$0xff]
      %v497 = vld [vmem:[%s203 + $0x82] sm:$0xff]
      %v498 = vld [vmem:[%s203 + $0x92] sm:$0xff]
      %v499 = vld [vmem:[%s203 + $0x9a] sm:$0xff]
      %v500 = vld [vmem:[%s203 + $0xaa] sm:$0xff]
      %v501 = vld [vmem:[%s203 + $0xb2] sm:$0xff]
      %v502 = vld [vmem:[%s203 + $0xc2] sm:$0xff]
      %v503 = vld [vmem:[%s203 + $0xca] sm:$0xff]
      %v504 = vld [vmem:[%s203 + $0xda] sm:$0xff]
      %v505 = vld [vmem:[%s203 + $0xe2] sm:$0xff]
      %v506 = vld [vmem:[%s203 + $0xf2] sm:$0xff]
      %v507 = vld [vmem:[%s203 + $0xfa] sm:$0xff]
      %v508 = vld [vmem:[%s203 + $0x10a] sm:$0xff]
      %v509 = vld [vmem:[%s203 + $0x112] sm:$0xff]
      %v510 = vld [vmem:[%s203 + $0x122] sm:$0xff]
      %v511 = vld [vmem:[%s203 + $0x12a] sm:$0xff]
      %v512 = vld [vmem:[%s203 + $0x13a] sm:$0xff]
      %v513 = vld [vmem:[%s203 + $0x142] sm:$0xff]
      %v514 = vld [vmem:[%s203 + $0x152] sm:$0xff]
      %v515 = vld [vmem:[%s203 + $0x15a] sm:$0xff]
      %v516 = vld [vmem:[%s203 + $0x16a] sm:$0xff]
      %v517 = vld [vmem:[%s203 + $0x172] sm:$0xff]
      %s518 = scalar_lea.vmem [#allocation2], 48
      %v519 = vld [vmem:[%s518] sm:$0xff]
      %v520 = vld [vmem:[%s518 + $0x8] sm:$0xff]
      %v521 = vld [vmem:[%s518 + $0x18] sm:$0xff]
      %v522 = vld [vmem:[%s518 + $0x20] sm:$0xff]
      %v523 = vld [vmem:[%s518 + $0x30] sm:$0xff]
      %v524 = vld [vmem:[%s518 + $0x38] sm:$0xff]
      %v525 = vld [vmem:[%s518 + $0x48] sm:$0xff]
      %v526 = vld [vmem:[%s518 + $0x50] sm:$0xff]
      %v527 = vld [vmem:[%s518 + $0x60] sm:$0xff]
      %v528 = vld [vmem:[%s518 + $0x68] sm:$0xff]
      %v529 = vld [vmem:[%s518 + $0x78] sm:$0xff]
      %v530 = vld [vmem:[%s518 + $0x80] sm:$0xff]
      %v531 = vld [vmem:[%s518 + $0x90] sm:$0xff]
      %v532 = vld [vmem:[%s518 + $0x98] sm:$0xff]
      %v533 = vld [vmem:[%s518 + $0xa8] sm:$0xff]
      %v534 = vld [vmem:[%s518 + $0xb0] sm:$0xff]
      %v535 = vld [vmem:[%s518 + $0xc0] sm:$0xff]
      %v536 = vld [vmem:[%s518 + $0xc8] sm:$0xff]
      %v537 = vld [vmem:[%s518 + $0xd8] sm:$0xff]
      %v538 = vld [vmem:[%s518 + $0xe0] sm:$0xff]
      %v539 = vld [vmem:[%s518 + $0xf0] sm:$0xff]
      %v540 = vld [vmem:[%s518 + $0xf8] sm:$0xff]
      %v541 = vld [vmem:[%s518 + $0x108] sm:$0xff]
      %v542 = vld [vmem:[%s518 + $0x110] sm:$0xff]
      %v543 = vld [vmem:[%s518 + $0x120] sm:$0xff]
      %v544 = vld [vmem:[%s518 + $0x128] sm:$0xff]
      %v545 = vld [vmem:[%s518 + $0x138] sm:$0xff]
      %v546 = vld [vmem:[%s518 + $0x140] sm:$0xff]
      %v547 = vld [vmem:[%s518 + $0x150] sm:$0xff]
      %v548 = vld [vmem:[%s518 + $0x158] sm:$0xff]
      %v549 = vld [vmem:[%s518 + $0x168] sm:$0xff]
      %v550 = vld [vmem:[%s518 + $0x170] sm:$0xff]
      %v551 = vld [vmem:[%s518 + $0x1] sm:$0xff]
      %v552 = vld [vmem:[%s518 + $0x9] sm:$0xff]
      %v553 = vld [vmem:[%s518 + $0x19] sm:$0xff]
      %v554 = vld [vmem:[%s518 + $0x21] sm:$0xff]
      %v555 = vld [vmem:[%s518 + $0x31] sm:$0xff]
      %v556 = vld [vmem:[%s518 + $0x39] sm:$0xff]
      %v557 = vld [vmem:[%s518 + $0x49] sm:$0xff]
      %v558 = vld [vmem:[%s518 + $0x51] sm:$0xff]
      %v559 = vld [vmem:[%s518 + $0x61] sm:$0xff]
      %v560 = vld [vmem:[%s518 + $0x69] sm:$0xff]
      %v561 = vld [vmem:[%s518 + $0x79] sm:$0xff]
      %v562 = vld [vmem:[%s518 + $0x81] sm:$0xff]
      %v563 = vld [vmem:[%s518 + $0x91] sm:$0xff]
      %v564 = vld [vmem:[%s518 + $0x99] sm:$0xff]
      %v565 = vld [vmem:[%s518 + $0xa9] sm:$0xff]
      %v566 = vld [vmem:[%s518 + $0xb1] sm:$0xff]
      %v567 = vld [vmem:[%s518 + $0xc1] sm:$0xff]
      %v568 = vld [vmem:[%s518 + $0xc9] sm:$0xff]
      %v569 = vld [vmem:[%s518 + $0xd9] sm:$0xff]
      %v570 = vld [vmem:[%s518 + $0xe1] sm:$0xff]
      %v571 = vld [vmem:[%s518 + $0xf1] sm:$0xff]
      %v572 = vld [vmem:[%s518 + $0xf9] sm:$0xff]
      %v573 = vld [vmem:[%s518 + $0x109] sm:$0xff]
      %v574 = vld [vmem:[%s518 + $0x111] sm:$0xff]
      %v575 = vld [vmem:[%s518 + $0x121] sm:$0xff]
      %v576 = vld [vmem:[%s518 + $0x129] sm:$0xff]
      %v577 = vld [vmem:[%s518 + $0x139] sm:$0xff]
      %v578 = vld [vmem:[%s518 + $0x141] sm:$0xff]
      %v579 = vld [vmem:[%s518 + $0x151] sm:$0xff]
      %v580 = vld [vmem:[%s518 + $0x159] sm:$0xff]
      %v581 = vld [vmem:[%s518 + $0x169] sm:$0xff]
      %v582 = vld [vmem:[%s518 + $0x171] sm:$0xff]
      %v583 = vld [vmem:[%s518 + $0x2] sm:$0xff]
      %v584 = vld [vmem:[%s518 + $0xa] sm:$0xff]
      %v585 = vld [vmem:[%s518 + $0x1a] sm:$0xff]
      %v586 = vld [vmem:[%s518 + $0x22] sm:$0xff]
      %v587 = vld [vmem:[%s518 + $0x32] sm:$0xff]
      %v588 = vld [vmem:[%s518 + $0x3a] sm:$0xff]
      %v589 = vld [vmem:[%s518 + $0x4a] sm:$0xff]
      %v590 = vld [vmem:[%s518 + $0x52] sm:$0xff]
      %v591 = vld [vmem:[%s518 + $0x62] sm:$0xff]
      %v592 = vld [vmem:[%s518 + $0x6a] sm:$0xff]
      %v593 = vld [vmem:[%s518 + $0x7a] sm:$0xff]
      %v594 = vld [vmem:[%s518 + $0x82] sm:$0xff]
      %v595 = vld [vmem:[%s518 + $0x92] sm:$0xff]
      %v596 = vld [vmem:[%s518 + $0x9a] sm:$0xff]
      %v597 = vld [vmem:[%s518 + $0xaa] sm:$0xff]
      %v598 = vld [vmem:[%s518 + $0xb2] sm:$0xff]
      %v599 = vld [vmem:[%s518 + $0xc2] sm:$0xff]
      %v600 = vld [vmem:[%s518 + $0xca] sm:$0xff]
      %v601 = vld [vmem:[%s518 + $0xda] sm:$0xff]
      %v602 = vld [vmem:[%s518 + $0xe2] sm:$0xff]
      %v603 = vld [vmem:[%s518 + $0xf2] sm:$0xff]
      %v604 = vld [vmem:[%s518 + $0xfa] sm:$0xff]
      %v605 = vld [vmem:[%s518 + $0x10a] sm:$0xff]
      %v606 = vld [vmem:[%s518 + $0x112] sm:$0xff]
      %v607 = vld [vmem:[%s518 + $0x122] sm:$0xff]
      %v608 = vld [vmem:[%s518 + $0x12a] sm:$0xff]
      %v609 = vld [vmem:[%s518 + $0x13a] sm:$0xff]
      %v610 = vld [vmem:[%s518 + $0x142] sm:$0xff]
      %v611 = vld [vmem:[%s518 + $0x152] sm:$0xff]
      %v612 = vld [vmem:[%s518 + $0x15a] sm:$0xff]
      %v613 = vld [vmem:[%s518 + $0x16a] sm:$0xff]
      %v614 = vld [vmem:[%s518 + $0x172] sm:$0xff]
      %647 = vrot.lane.b32.xlu0 %v358, 4
      %v648 = vpop.permute.xlu0 %647
      %649 = vrot.lane.b32.xlu0 %v359, 4
      %v650 = vpop.permute.xlu0 %649
      %651 = vrot.lane.b32.xlu0 %v360, 4
      %v652 = vpop.permute.xlu0 %651
      %653 = vrot.lane.b32.xlu0 %v361, 4
      %v654 = vpop.permute.xlu0 %653
      %655 = vrot.lane.b32.xlu0 %v362, 4
      %v656 = vpop.permute.xlu0 %655
      %657 = vrot.lane.b32.xlu0 %v363, 4
      %v658 = vpop.permute.xlu0 %657
      %659 = vrot.lane.b32.xlu0 %v364, 4
      %v660 = vpop.permute.xlu0 %659
      %661 = vrot.lane.b32.xlu0 %v365, 4
      %v662 = vpop.permute.xlu0 %661
      %663 = vrot.lane.b32.xlu0 %v366, 4
      %v664 = vpop.permute.xlu0 %663
      %665 = vrot.lane.b32.xlu0 %v367, 4
      %v666 = vpop.permute.xlu0 %665
      %667 = vrot.lane.b32.xlu0 %v368, 4
      %v668 = vpop.permute.xlu0 %667
      %669 = vrot.lane.b32.xlu0 %v369, 4
      %v670 = vpop.permute.xlu0 %669
      %671 = vrot.lane.b32.xlu0 %v370, 4
      %v672 = vpop.permute.xlu0 %671
      %673 = vrot.lane.b32.xlu0 %v371, 4
      %v674 = vpop.permute.xlu0 %673
      %675 = vrot.lane.b32.xlu0 %v372, 4
      %v676 = vpop.permute.xlu0 %675
      %677 = vrot.lane.b32.xlu0 %v373, 4
      %v678 = vpop.permute.xlu0 %677
      %679 = vrot.lane.b32.xlu0 %v374, 4
      %v680 = vpop.permute.xlu0 %679
      %681 = vrot.lane.b32.xlu0 %v375, 4
      %v682 = vpop.permute.xlu0 %681
      %683 = vrot.lane.b32.xlu0 %v376, 4
      %v684 = vpop.permute.xlu0 %683
      %685 = vrot.lane.b32.xlu0 %v377, 4
      %v686 = vpop.permute.xlu0 %685
      %687 = vrot.lane.b32.xlu0 %v378, 4
      %v688 = vpop.permute.xlu0 %687
      %689 = vrot.lane.b32.xlu0 %v379, 4
      %v690 = vpop.permute.xlu0 %689
      %691 = vrot.lane.b32.xlu0 %v380, 4
      %v692 = vpop.permute.xlu0 %691
      %693 = vrot.lane.b32.xlu0 %v381, 4
      %v694 = vpop.permute.xlu0 %693
      %695 = vrot.lane.b32.xlu0 %v382, 4
      %v696 = vpop.permute.xlu0 %695
      %697 = vrot.lane.b32.xlu0 %v383, 4
      %v698 = vpop.permute.xlu0 %697
      %699 = vrot.lane.b32.xlu0 %v384, 4
      %v700 = vpop.permute.xlu0 %699
      %701 = vrot.lane.b32.xlu0 %v385, 4
      %v702 = vpop.permute.xlu0 %701
      %703 = vrot.lane.b32.xlu0 %v386, 4
      %v704 = vpop.permute.xlu0 %703
      %705 = vrot.lane.b32.xlu0 %v387, 4
      %v706 = vpop.permute.xlu0 %705
      %707 = vrot.lane.b32.xlu0 %v388, 4
      %v708 = vpop.permute.xlu0 %707
      %709 = vrot.lane.b32.xlu0 %v389, 4
      %v710 = vpop.permute.xlu0 %709
      %775 = vrot.lane.b32.xlu0 %v390, 8
      %v776 = vpop.permute.xlu0 %775
      %777 = vrot.lane.b32.xlu0 %v391, 8
      %v778 = vpop.permute.xlu0 %777
      %779 = vrot.lane.b32.xlu0 %v392, 8
      %v780 = vpop.permute.xlu0 %779
      %781 = vrot.lane.b32.xlu0 %v393, 8
      %v782 = vpop.permute.xlu0 %781
      %783 = vrot.lane.b32.xlu0 %v394, 8
      %v784 = vpop.permute.xlu0 %783
      %785 = vrot.lane.b32.xlu0 %v395, 8
      %v786 = vpop.permute.xlu0 %785
      %787 = vrot.lane.b32.xlu0 %v396, 8
      %v788 = vpop.permute.xlu0 %787
      %789 = vrot.lane.b32.xlu0 %v397, 8
      %v790 = vpop.permute.xlu0 %789
      %791 = vrot.lane.b32.xlu0 %v398, 8
      %v792 = vpop.permute.xlu0 %791
      %793 = vrot.lane.b32.xlu0 %v399, 8
      %v794 = vpop.permute.xlu0 %793
      %795 = vrot.lane.b32.xlu0 %v400, 8
      %v796 = vpop.permute.xlu0 %795
      %797 = vrot.lane.b32.xlu0 %v401, 8
      %v798 = vpop.permute.xlu0 %797
      %799 = vrot.lane.b32.xlu0 %v402, 8
      %v800 = vpop.permute.xlu0 %799
      %801 = vrot.lane.b32.xlu0 %v403, 8
      %v802 = vpop.permute.xlu0 %801
      %803 = vrot.lane.b32.xlu0 %v404, 8
      %v804 = vpop.permute.xlu0 %803
      %805 = vrot.lane.b32.xlu0 %v405, 8
      %v806 = vpop.permute.xlu0 %805
      %807 = vrot.lane.b32.xlu0 %v406, 8
      %v808 = vpop.permute.xlu0 %807
      %809 = vrot.lane.b32.xlu0 %v407, 8
      %v810 = vpop.permute.xlu0 %809
      %811 = vrot.lane.b32.xlu0 %v408, 8
      %v812 = vpop.permute.xlu0 %811
      %813 = vrot.lane.b32.xlu0 %v409, 8
      %v814 = vpop.permute.xlu0 %813
      %815 = vrot.lane.b32.xlu0 %v410, 8
      %v816 = vpop.permute.xlu0 %815
      %817 = vrot.lane.b32.xlu0 %v411, 8
      %v818 = vpop.permute.xlu0 %817
      %819 = vrot.lane.b32.xlu0 %v412, 8
      %v820 = vpop.permute.xlu0 %819
      %821 = vrot.lane.b32.xlu0 %v413, 8
      %v822 = vpop.permute.xlu0 %821
      %823 = vrot.lane.b32.xlu0 %v414, 8
      %v824 = vpop.permute.xlu0 %823
      %825 = vrot.lane.b32.xlu0 %v415, 8
      %v826 = vpop.permute.xlu0 %825
      %827 = vrot.lane.b32.xlu0 %v416, 8
      %v828 = vpop.permute.xlu0 %827
      %829 = vrot.lane.b32.xlu0 %v417, 8
      %v830 = vpop.permute.xlu0 %829
      %831 = vrot.lane.b32.xlu0 %v418, 8
      %v832 = vpop.permute.xlu0 %831
      %833 = vrot.lane.b32.xlu0 %v419, 8
      %v834 = vpop.permute.xlu0 %833
      %835 = vrot.lane.b32.xlu0 %v420, 8
      %v836 = vpop.permute.xlu0 %835
      %837 = vrot.lane.b32.xlu0 %v421, 8
      %v838 = vpop.permute.xlu0 %837
      %903 = vrot.lane.b32.xlu0 %v422, 12
      %v904 = vpop.permute.xlu0 %903
      %905 = vrot.lane.b32.xlu0 %v423, 12
      %v906 = vpop.permute.xlu0 %905
      %907 = vrot.lane.b32.xlu0 %v424, 12
      %v908 = vpop.permute.xlu0 %907
      %909 = vrot.lane.b32.xlu0 %v425, 12
      %v910 = vpop.permute.xlu0 %909
      %911 = vrot.lane.b32.xlu0 %v426, 12
      %v912 = vpop.permute.xlu0 %911
      %913 = vrot.lane.b32.xlu0 %v427, 12
      %v914 = vpop.permute.xlu0 %913
      %915 = vrot.lane.b32.xlu0 %v428, 12
      %v916 = vpop.permute.xlu0 %915
      %917 = vrot.lane.b32.xlu0 %v429, 12
      %v918 = vpop.permute.xlu0 %917
      %919 = vrot.lane.b32.xlu0 %v430, 12
      %v920 = vpop.permute.xlu0 %919
      %921 = vrot.lane.b32.xlu0 %v431, 12
      %v922 = vpop.permute.xlu0 %921
      %923 = vrot.lane.b32.xlu0 %v432, 12
      %v924 = vpop.permute.xlu0 %923
      %925 = vrot.lane.b32.xlu0 %v433, 12
      %v926 = vpop.permute.xlu0 %925
      %927 = vrot.lane.b32.xlu0 %v434, 12
      %v928 = vpop.permute.xlu0 %927
      %929 = vrot.lane.b32.xlu0 %v435, 12
      %v930 = vpop.permute.xlu0 %929
      %931 = vrot.lane.b32.xlu0 %v436, 12
      %v932 = vpop.permute.xlu0 %931
      %933 = vrot.lane.b32.xlu0 %v437, 12
      %v934 = vpop.permute.xlu0 %933
      %935 = vrot.lane.b32.xlu0 %v438, 12
      %v936 = vpop.permute.xlu0 %935
      %937 = vrot.lane.b32.xlu0 %v439, 12
      %v938 = vpop.permute.xlu0 %937
      %939 = vrot.lane.b32.xlu0 %v440, 12
      %v940 = vpop.permute.xlu0 %939
      %941 = vrot.lane.b32.xlu0 %v441, 12
      %v942 = vpop.permute.xlu0 %941
      %943 = vrot.lane.b32.xlu0 %v442, 12
      %v944 = vpop.permute.xlu0 %943
      %945 = vrot.lane.b32.xlu0 %v443, 12
      %v946 = vpop.permute.xlu0 %945
      %947 = vrot.lane.b32.xlu0 %v444, 12
      %v948 = vpop.permute.xlu0 %947
      %949 = vrot.lane.b32.xlu0 %v445, 12
      %v950 = vpop.permute.xlu0 %949
      %951 = vrot.lane.b32.xlu0 %v446, 12
      %v952 = vpop.permute.xlu0 %951
      %953 = vrot.lane.b32.xlu0 %v447, 12
      %v954 = vpop.permute.xlu0 %953
      %955 = vrot.lane.b32.xlu0 %v448, 12
      %v956 = vpop.permute.xlu0 %955
      %957 = vrot.lane.b32.xlu0 %v449, 12
      %v958 = vpop.permute.xlu0 %957
      %959 = vrot.lane.b32.xlu0 %v450, 12
      %v960 = vpop.permute.xlu0 %959
      %961 = vrot.lane.b32.xlu0 %v451, 12
      %v962 = vpop.permute.xlu0 %961
      %963 = vrot.lane.b32.xlu0 %v452, 12
      %v964 = vpop.permute.xlu0 %963
      %965 = vrot.lane.b32.xlu0 %v453, 12
      %v966 = vpop.permute.xlu0 %965
      %1031 = vrot.lane.b32.xlu0 %v454, 16
      %v1032 = vpop.permute.xlu0 %1031
      %1033 = vrot.lane.b32.xlu0 %v455, 16
      %v1034 = vpop.permute.xlu0 %1033
      %1035 = vrot.lane.b32.xlu0 %v456, 16
      %v1036 = vpop.permute.xlu0 %1035
      %1037 = vrot.lane.b32.xlu0 %v457, 16
      %v1038 = vpop.permute.xlu0 %1037
      %1039 = vrot.lane.b32.xlu0 %v458, 16
      %v1040 = vpop.permute.xlu0 %1039
      %1041 = vrot.lane.b32.xlu0 %v459, 16
      %v1042 = vpop.permute.xlu0 %1041
      %1043 = vrot.lane.b32.xlu0 %v460, 16
      %v1044 = vpop.permute.xlu0 %1043
      %1045 = vrot.lane.b32.xlu0 %v461, 16
      %v1046 = vpop.permute.xlu0 %1045
      %1047 = vrot.lane.b32.xlu0 %v462, 16
      %v1048 = vpop.permute.xlu0 %1047
      %1049 = vrot.lane.b32.xlu0 %v463, 16
      %v1050 = vpop.permute.xlu0 %1049
      %1051 = vrot.lane.b32.xlu0 %v464, 16
      %v1052 = vpop.permute.xlu0 %1051
      %1053 = vrot.lane.b32.xlu0 %v465, 16
      %v1054 = vpop.permute.xlu0 %1053
      %1055 = vrot.lane.b32.xlu0 %v466, 16
      %v1056 = vpop.permute.xlu0 %1055
      %1057 = vrot.lane.b32.xlu0 %v467, 16
      %v1058 = vpop.permute.xlu0 %1057
      %1059 = vrot.lane.b32.xlu0 %v468, 16
      %v1060 = vpop.permute.xlu0 %1059
      %1061 = vrot.lane.b32.xlu0 %v469, 16
      %v1062 = vpop.permute.xlu0 %1061
      %1063 = vrot.lane.b32.xlu0 %v470, 16
      %v1064 = vpop.permute.xlu0 %1063
      %1065 = vrot.lane.b32.xlu0 %v471, 16
      %v1066 = vpop.permute.xlu0 %1065
      %1067 = vrot.lane.b32.xlu0 %v472, 16
      %v1068 = vpop.permute.xlu0 %1067
      %1069 = vrot.lane.b32.xlu0 %v473, 16
      %v1070 = vpop.permute.xlu0 %1069
      %1071 = vrot.lane.b32.xlu0 %v474, 16
      %v1072 = vpop.permute.xlu0 %1071
      %1073 = vrot.lane.b32.xlu0 %v475, 16
      %v1074 = vpop.permute.xlu0 %1073
      %1075 = vrot.lane.b32.xlu0 %v476, 16
      %v1076 = vpop.permute.xlu0 %1075
      %1077 = vrot.lane.b32.xlu0 %v477, 16
      %v1078 = vpop.permute.xlu0 %1077
      %1079 = vrot.lane.b32.xlu0 %v478, 16
      %v1080 = vpop.permute.xlu0 %1079
      %1081 = vrot.lane.b32.xlu0 %v479, 16
      %v1082 = vpop.permute.xlu0 %1081
      %1083 = vrot.lane.b32.xlu0 %v480, 16
      %v1084 = vpop.permute.xlu0 %1083
      %1085 = vrot.lane.b32.xlu0 %v481, 16
      %v1086 = vpop.permute.xlu0 %1085
      %1087 = vrot.lane.b32.xlu0 %v482, 16
      %v1088 = vpop.permute.xlu0 %1087
      %1089 = vrot.lane.b32.xlu0 %v483, 16
      %v1090 = vpop.permute.xlu0 %1089
      %1091 = vrot.lane.b32.xlu0 %v484, 16
      %v1092 = vpop.permute.xlu0 %1091
      %1093 = vrot.lane.b32.xlu0 %v485, 16
      %v1094 = vpop.permute.xlu0 %1093
      %1159 = vrot.lane.b32.xlu0 %v486, 20
      %v1160 = vpop.permute.xlu0 %1159
      %1161 = vrot.lane.b32.xlu0 %v487, 20
      %v1162 = vpop.permute.xlu0 %1161
      %1163 = vrot.lane.b32.xlu0 %v488, 20
      %v1164 = vpop.permute.xlu0 %1163
      %1165 = vrot.lane.b32.xlu0 %v489, 20
      %v1166 = vpop.permute.xlu0 %1165
      %1167 = vrot.lane.b32.xlu0 %v490, 20
      %v1168 = vpop.permute.xlu0 %1167
      %1169 = vrot.lane.b32.xlu0 %v491, 20
      %v1170 = vpop.permute.xlu0 %1169
      %1171 = vrot.lane.b32.xlu0 %v492, 20
      %v1172 = vpop.permute.xlu0 %1171
      %1173 = vrot.lane.b32.xlu0 %v493, 20
      %v1174 = vpop.permute.xlu0 %1173
      %1175 = vrot.lane.b32.xlu0 %v494, 20
      %v1176 = vpop.permute.xlu0 %1175
      %1177 = vrot.lane.b32.xlu0 %v495, 20
      %v1178 = vpop.permute.xlu0 %1177
      %1179 = vrot.lane.b32.xlu0 %v496, 20
      %v1180 = vpop.permute.xlu0 %1179
      %1181 = vrot.lane.b32.xlu0 %v497, 20
      %v1182 = vpop.permute.xlu0 %1181
      %1183 = vrot.lane.b32.xlu0 %v498, 20
      %v1184 = vpop.permute.xlu0 %1183
      %1185 = vrot.lane.b32.xlu0 %v499, 20
      %v1186 = vpop.permute.xlu0 %1185
      %1187 = vrot.lane.b32.xlu0 %v500, 20
      %v1188 = vpop.permute.xlu0 %1187
      %1189 = vrot.lane.b32.xlu0 %v501, 20
      %v1190 = vpop.permute.xlu0 %1189
      %1191 = vrot.lane.b32.xlu0 %v502, 20
      %v1192 = vpop.permute.xlu0 %1191
      %1193 = vrot.lane.b32.xlu0 %v503, 20
      %v1194 = vpop.permute.xlu0 %1193
      %1195 = vrot.lane.b32.xlu0 %v504, 20
      %v1196 = vpop.permute.xlu0 %1195
      %1197 = vrot.lane.b32.xlu0 %v505, 20
      %v1198 = vpop.permute.xlu0 %1197
      %1199 = vrot.lane.b32.xlu0 %v506, 20
      %v1200 = vpop.permute.xlu0 %1199
      %1201 = vrot.lane.b32.xlu0 %v507, 20
      %v1202 = vpop.permute.xlu0 %1201
      %1203 = vrot.lane.b32.xlu0 %v508, 20
      %v1204 = vpop.permute.xlu0 %1203
      %1205 = vrot.lane.b32.xlu0 %v509, 20
      %v1206 = vpop.permute.xlu0 %1205
      %1207 = vrot.lane.b32.xlu0 %v510, 20
      %v1208 = vpop.permute.xlu0 %1207
      %1209 = vrot.lane.b32.xlu0 %v511, 20
      %v1210 = vpop.permute.xlu0 %1209
      %1211 = vrot.lane.b32.xlu0 %v512, 20
      %v1212 = vpop.permute.xlu0 %1211
      %1213 = vrot.lane.b32.xlu0 %v513, 20
      %v1214 = vpop.permute.xlu0 %1213
      %1215 = vrot.lane.b32.xlu0 %v514, 20
      %v1216 = vpop.permute.xlu0 %1215
      %1217 = vrot.lane.b32.xlu0 %v515, 20
      %v1218 = vpop.permute.xlu0 %1217
      %1219 = vrot.lane.b32.xlu0 %v516, 20
      %v1220 = vpop.permute.xlu0 %1219
      %1221 = vrot.lane.b32.xlu0 %v517, 20
      %v1222 = vpop.permute.xlu0 %1221
      %1287 = vrot.lane.b32.xlu0 %v519, 24
      %v1288 = vpop.permute.xlu0 %1287
      %1289 = vrot.lane.b32.xlu0 %v520, 24
      %v1290 = vpop.permute.xlu0 %1289
      %1291 = vrot.lane.b32.xlu0 %v521, 24
      %v1292 = vpop.permute.xlu0 %1291
      %1293 = vrot.lane.b32.xlu0 %v522, 24
      %v1294 = vpop.permute.xlu0 %1293
      %1295 = vrot.lane.b32.xlu0 %v523, 24
      %v1296 = vpop.permute.xlu0 %1295
      %1297 = vrot.lane.b32.xlu0 %v524, 24
      %v1298 = vpop.permute.xlu0 %1297
      %1299 = vrot.lane.b32.xlu0 %v525, 24
      %v1300 = vpop.permute.xlu0 %1299
      %1301 = vrot.lane.b32.xlu0 %v526, 24
      %v1302 = vpop.permute.xlu0 %1301
      %1303 = vrot.lane.b32.xlu0 %v527, 24
      %v1304 = vpop.permute.xlu0 %1303
      %1305 = vrot.lane.b32.xlu0 %v528, 24
      %v1306 = vpop.permute.xlu0 %1305
      %1307 = vrot.lane.b32.xlu0 %v529, 24
      %v1308 = vpop.permute.xlu0 %1307
      %1309 = vrot.lane.b32.xlu0 %v530, 24
      %v1310 = vpop.permute.xlu0 %1309
      %1311 = vrot.lane.b32.xlu0 %v531, 24
      %v1312 = vpop.permute.xlu0 %1311
      %1313 = vrot.lane.b32.xlu0 %v532, 24
      %v1314 = vpop.permute.xlu0 %1313
      %1315 = vrot.lane.b32.xlu0 %v533, 24
      %v1316 = vpop.permute.xlu0 %1315
      %1317 = vrot.lane.b32.xlu0 %v534, 24
      %v1318 = vpop.permute.xlu0 %1317
      %1319 = vrot.lane.b32.xlu0 %v535, 24
      %v1320 = vpop.permute.xlu0 %1319
      %1321 = vrot.lane.b32.xlu0 %v536, 24
      %v1322 = vpop.permute.xlu0 %1321
      %1323 = vrot.lane.b32.xlu0 %v537, 24
      %v1324 = vpop.permute.xlu0 %1323
      %1325 = vrot.lane.b32.xlu0 %v538, 24
      %v1326 = vpop.permute.xlu0 %1325
      %1327 = vrot.lane.b32.xlu0 %v539, 24
      %v1328 = vpop.permute.xlu0 %1327
      %1329 = vrot.lane.b32.xlu0 %v540, 24
      %v1330 = vpop.permute.xlu0 %1329
      %1331 = vrot.lane.b32.xlu0 %v541, 24
      %v1332 = vpop.permute.xlu0 %1331
      %1333 = vrot.lane.b32.xlu0 %v542, 24
      %v1334 = vpop.permute.xlu0 %1333
      %1335 = vrot.lane.b32.xlu0 %v543, 24
      %v1336 = vpop.permute.xlu0 %1335
      %1337 = vrot.lane.b32.xlu0 %v544, 24
      %v1338 = vpop.permute.xlu0 %1337
      %1339 = vrot.lane.b32.xlu0 %v545, 24
      %v1340 = vpop.permute.xlu0 %1339
      %1341 = vrot.lane.b32.xlu0 %v546, 24
      %v1342 = vpop.permute.xlu0 %1341
      %1343 = vrot.lane.b32.xlu0 %v547, 24
      %v1344 = vpop.permute.xlu0 %1343
      %1345 = vrot.lane.b32.xlu0 %v548, 24
      %v1346 = vpop.permute.xlu0 %1345
      %1347 = vrot.lane.b32.xlu0 %v549, 24
      %v1348 = vpop.permute.xlu0 %1347
      %1349 = vrot.lane.b32.xlu0 %v550, 24
      %v1350 = vpop.permute.xlu0 %1349
      %1415 = vrot.lane.b32.xlu0 %v551, 28
      %v1416 = vpop.permute.xlu0 %1415
      %1417 = vrot.lane.b32.xlu0 %v552, 28
      %v1418 = vpop.permute.xlu0 %1417
      %1419 = vrot.lane.b32.xlu0 %v553, 28
      %v1420 = vpop.permute.xlu0 %1419
      %1421 = vrot.lane.b32.xlu0 %v554, 28
      %v1422 = vpop.permute.xlu0 %1421
      %1423 = vrot.lane.b32.xlu0 %v555, 28
      %v1424 = vpop.permute.xlu0 %1423
      %1425 = vrot.lane.b32.xlu0 %v556, 28
      %v1426 = vpop.permute.xlu0 %1425
      %1427 = vrot.lane.b32.xlu0 %v557, 28
      %v1428 = vpop.permute.xlu0 %1427
      %1429 = vrot.lane.b32.xlu0 %v558, 28
      %v1430 = vpop.permute.xlu0 %1429
      %1431 = vrot.lane.b32.xlu0 %v559, 28
      %v1432 = vpop.permute.xlu0 %1431
      %1433 = vrot.lane.b32.xlu0 %v560, 28
      %v1434 = vpop.permute.xlu0 %1433
      %1435 = vrot.lane.b32.xlu0 %v561, 28
      %v1436 = vpop.permute.xlu0 %1435
      %1437 = vrot.lane.b32.xlu0 %v562, 28
      %v1438 = vpop.permute.xlu0 %1437
      %1439 = vrot.lane.b32.xlu0 %v563, 28
      %v1440 = vpop.permute.xlu0 %1439
      %1441 = vrot.lane.b32.xlu0 %v564, 28
      %v1442 = vpop.permute.xlu0 %1441
      %1443 = vrot.lane.b32.xlu0 %v565, 28
      %v1444 = vpop.permute.xlu0 %1443
      %1445 = vrot.lane.b32.xlu0 %v566, 28
      %v1446 = vpop.permute.xlu0 %1445
      %1447 = vrot.lane.b32.xlu0 %v567, 28
      %v1448 = vpop.permute.xlu0 %1447
      %1449 = vrot.lane.b32.xlu0 %v568, 28
      %v1450 = vpop.permute.xlu0 %1449
      %1451 = vrot.lane.b32.xlu0 %v569, 28
      %v1452 = vpop.permute.xlu0 %1451
      %1453 = vrot.lane.b32.xlu0 %v570, 28
      %v1454 = vpop.permute.xlu0 %1453
      %1455 = vrot.lane.b32.xlu0 %v571, 28
      %v1456 = vpop.permute.xlu0 %1455
      %1457 = vrot.lane.b32.xlu0 %v572, 28
      %v1458 = vpop.permute.xlu0 %1457
      %1459 = vrot.lane.b32.xlu0 %v573, 28
      %v1460 = vpop.permute.xlu0 %1459
      %1461 = vrot.lane.b32.xlu0 %v574, 28
      %v1462 = vpop.permute.xlu0 %1461
      %1463 = vrot.lane.b32.xlu0 %v575, 28
      %v1464 = vpop.permute.xlu0 %1463
      %1465 = vrot.lane.b32.xlu0 %v576, 28
      %v1466 = vpop.permute.xlu0 %1465
      %1467 = vrot.lane.b32.xlu0 %v577, 28
      %v1468 = vpop.permute.xlu0 %1467
      %1469 = vrot.lane.b32.xlu0 %v578, 28
      %v1470 = vpop.permute.xlu0 %1469
      %1471 = vrot.lane.b32.xlu0 %v579, 28
      %v1472 = vpop.permute.xlu0 %1471
      %1473 = vrot.lane.b32.xlu0 %v580, 28
      %v1474 = vpop.permute.xlu0 %1473
      %1475 = vrot.lane.b32.xlu0 %v581, 28
      %v1476 = vpop.permute.xlu0 %1475
      %1477 = vrot.lane.b32.xlu0 %v582, 28
      %v1478 = vpop.permute.xlu0 %1477
      %1543 = vrot.lane.b32.xlu0 %v583, 32
      %v1544 = vpop.permute.xlu0 %1543
      %1545 = vrot.lane.b32.xlu0 %v584, 32
      %v1546 = vpop.permute.xlu0 %1545
      %1547 = vrot.lane.b32.xlu0 %v585, 32
      %v1548 = vpop.permute.xlu0 %1547
      %1549 = vrot.lane.b32.xlu0 %v586, 32
      %v1550 = vpop.permute.xlu0 %1549
      %1551 = vrot.lane.b32.xlu0 %v587, 32
      %v1552 = vpop.permute.xlu0 %1551
      %1553 = vrot.lane.b32.xlu0 %v588, 32
      %v1554 = vpop.permute.xlu0 %1553
      %1555 = vrot.lane.b32.xlu0 %v589, 32
      %v1556 = vpop.permute.xlu0 %1555
      %1557 = vrot.lane.b32.xlu0 %v590, 32
      %v1558 = vpop.permute.xlu0 %1557
      %1559 = vrot.lane.b32.xlu0 %v591, 32
      %v1560 = vpop.permute.xlu0 %1559
      %1561 = vrot.lane.b32.xlu0 %v592, 32
      %v1562 = vpop.permute.xlu0 %1561
      %1563 = vrot.lane.b32.xlu0 %v593, 32
      %v1564 = vpop.permute.xlu0 %1563
      %1565 = vrot.lane.b32.xlu0 %v594, 32
      %v1566 = vpop.permute.xlu0 %1565
      %1567 = vrot.lane.b32.xlu0 %v595, 32
      %v1568 = vpop.permute.xlu0 %1567
      %1569 = vrot.lane.b32.xlu0 %v596, 32
      %v1570 = vpop.permute.xlu0 %1569
      %1571 = vrot.lane.b32.xlu0 %v597, 32
      %v1572 = vpop.permute.xlu0 %1571
      %1573 = vrot.lane.b32.xlu0 %v598, 32
      %v1574 = vpop.permute.xlu0 %1573
      %1575 = vrot.lane.b32.xlu0 %v599, 32
      %v1576 = vpop.permute.xlu0 %1575
      %1577 = vrot.lane.b32.xlu0 %v600, 32
      %v1578 = vpop.permute.xlu0 %1577
      %1579 = vrot.lane.b32.xlu0 %v601, 32
      %v1580 = vpop.permute.xlu0 %1579
      %1581 = vrot.lane.b32.xlu0 %v602, 32
      %v1582 = vpop.permute.xlu0 %1581
      %1583 = vrot.lane.b32.xlu0 %v603, 32
      %v1584 = vpop.permute.xlu0 %1583
      %1585 = vrot.lane.b32.xlu0 %v604, 32
      %v1586 = vpop.permute.xlu0 %1585
      %1587 = vrot.lane.b32.xlu0 %v605, 32
      %v1588 = vpop.permute.xlu0 %1587
      %1589 = vrot.lane.b32.xlu0 %v606, 32
      %v1590 = vpop.permute.xlu0 %1589
      %1591 = vrot.lane.b32.xlu0 %v607, 32
      %v1592 = vpop.permute.xlu0 %1591
      %1593 = vrot.lane.b32.xlu0 %v608, 32
      %v1594 = vpop.permute.xlu0 %1593
      %1595 = vrot.lane.b32.xlu0 %v609, 32
      %v1596 = vpop.permute.xlu0 %1595
      %1597 = vrot.lane.b32.xlu0 %v610, 32
      %v1598 = vpop.permute.xlu0 %1597
      %1599 = vrot.lane.b32.xlu0 %v611, 32
      %v1600 = vpop.permute.xlu0 %1599
      %1601 = vrot.lane.b32.xlu0 %v612, 32
      %v1602 = vpop.permute.xlu0 %1601
      %1603 = vrot.lane.b32.xlu0 %v613, 32
      %v1604 = vpop.permute.xlu0 %1603
      %1605 = vrot.lane.b32.xlu0 %v614, 32
      %v1606 = vpop.permute.xlu0 %1605
      %v1639 = vsel %vm204, %v326, %v648
      %v1640 = vsel %vm204, %v327, %v650
      %v1641 = vsel %vm204, %v328, %v652
      %v1642 = vsel %vm204, %v329, %v654
      %v1643 = vsel %vm204, %v330, %v656
      %v1644 = vsel %vm204, %v331, %v658
      %v1645 = vsel %vm204, %v332, %v660
      %v1646 = vsel %vm204, %v333, %v662
      %v1647 = vsel %vm204, %v334, %v664
      %v1648 = vsel %vm204, %v335, %v666
      %v1649 = vsel %vm204, %v336, %v668
      %v1650 = vsel %vm204, %v337, %v670
      %v1651 = vsel %vm204, %v338, %v672
      %v1652 = vsel %vm204, %v339, %v674
      %v1653 = vsel %vm204, %v340, %v676
      %v1654 = vsel %vm204, %v341, %v678
      %v1655 = vsel %vm204, %v342, %v680
      %v1656 = vsel %vm204, %v343, %v682
      %v1657 = vsel %vm204, %v344, %v684
      %v1658 = vsel %vm204, %v345, %v686
      %v1659 = vsel %vm204, %v346, %v688
      %v1660 = vsel %vm204, %v347, %v690
      %v1661 = vsel %vm204, %v348, %v692
      %v1662 = vsel %vm204, %v349, %v694
      %v1663 = vsel %vm204, %v350, %v696
      %v1664 = vsel %vm204, %v351, %v698
      %v1665 = vsel %vm204, %v352, %v700
      %v1666 = vsel %vm204, %v353, %v702
      %v1667 = vsel %vm204, %v354, %v704
      %v1668 = vsel %vm204, %v355, %v706
      %v1669 = vsel %vm204, %v356, %v708
      %v1670 = vsel %vm204, %v357, %v710
      %vm1671 = vcmask 64512
      %v1672 = vsel %vm1671, %v1639, %v776
      %v1673 = vsel %vm1671, %v1640, %v778
      %v1674 = vsel %vm1671, %v1641, %v780
      %v1675 = vsel %vm1671, %v1642, %v782
      %v1676 = vsel %vm1671, %v1643, %v784
      %v1677 = vsel %vm1671, %v1644, %v786
      %v1678 = vsel %vm1671, %v1645, %v788
      %v1679 = vsel %vm1671, %v1646, %v790
      %v1680 = vsel %vm1671, %v1647, %v792
      %v1681 = vsel %vm1671, %v1648, %v794
      %v1682 = vsel %vm1671, %v1649, %v796
      %v1683 = vsel %vm1671, %v1650, %v798
      %v1684 = vsel %vm1671, %v1651, %v800
      %v1685 = vsel %vm1671, %v1652, %v802
      %v1686 = vsel %vm1671, %v1653, %v804
      %v1687 = vsel %vm1671, %v1654, %v806
      %v1688 = vsel %vm1671, %v1655, %v808
      %v1689 = vsel %vm1671, %v1656, %v810
      %v1690 = vsel %vm1671, %v1657, %v812
      %v1691 = vsel %vm1671, %v1658, %v814
      %v1692 = vsel %vm1671, %v1659, %v816
      %v1693 = vsel %vm1671, %v1660, %v818
      %v1694 = vsel %vm1671, %v1661, %v820
      %v1695 = vsel %vm1671, %v1662, %v822
      %v1696 = vsel %vm1671, %v1663, %v824
      %v1697 = vsel %vm1671, %v1664, %v826
      %v1698 = vsel %vm1671, %v1665, %v828
      %v1699 = vsel %vm1671, %v1666, %v830
      %v1700 = vsel %vm1671, %v1667, %v832
      %v1701 = vsel %vm1671, %v1668, %v834
      %v1702 = vsel %vm1671, %v1669, %v836
      %v1703 = vsel %vm1671, %v1670, %v838
      %vm1704 = vcmask 97280
      %v1705 = vsel %vm1704, %v1672, %v904
      %v1706 = vsel %vm1704, %v1673, %v906
      %v1707 = vsel %vm1704, %v1674, %v908
      %v1708 = vsel %vm1704, %v1675, %v910
      %v1709 = vsel %vm1704, %v1676, %v912
      %v1710 = vsel %vm1704, %v1677, %v914
      %v1711 = vsel %vm1704, %v1678, %v916
      %v1712 = vsel %vm1704, %v1679, %v918
      %v1713 = vsel %vm1704, %v1680, %v920
      %v1714 = vsel %vm1704, %v1681, %v922
      %v1715 = vsel %vm1704, %v1682, %v924
      %v1716 = vsel %vm1704, %v1683, %v926
      %v1717 = vsel %vm1704, %v1684, %v928
      %v1718 = vsel %vm1704, %v1685, %v930
      %v1719 = vsel %vm1704, %v1686, %v932
      %v1720 = vsel %vm1704, %v1687, %v934
      %v1721 = vsel %vm1704, %v1688, %v936
      %v1722 = vsel %vm1704, %v1689, %v938
      %v1723 = vsel %vm1704, %v1690, %v940
      %v1724 = vsel %vm1704, %v1691, %v942
      %v1725 = vsel %vm1704, %v1692, %v944
      %v1726 = vsel %vm1704, %v1693, %v946
      %v1727 = vsel %vm1704, %v1694, %v948
      %v1728 = vsel %vm1704, %v1695, %v950
      %v1729 = vsel %vm1704, %v1696, %v952
      %v1730 = vsel %vm1704, %v1697, %v954
      %v1731 = vsel %vm1704, %v1698, %v956
      %v1732 = vsel %vm1704, %v1699, %v958
      %v1733 = vsel %vm1704, %v1700, %v960
      %v1734 = vsel %vm1704, %v1701, %v962
      %v1735 = vsel %vm1704, %v1702, %v964
      %v1736 = vsel %vm1704, %v1703, %v966
      %vm1737 = vcmask 130048
      %v1738 = vsel %vm1737, %v1705, %v1032
      %v1739 = vsel %vm1737, %v1706, %v1034
      %v1740 = vsel %vm1737, %v1707, %v1036
      %v1741 = vsel %vm1737, %v1708, %v1038
      %v1742 = vsel %vm1737, %v1709, %v1040
      %v1743 = vsel %vm1737, %v1710, %v1042
      %v1744 = vsel %vm1737, %v1711, %v1044
      %v1745 = vsel %vm1737, %v1712, %v1046
      %v1746 = vsel %vm1737, %v1713, %v1048
      %v1747 = vsel %vm1737, %v1714, %v1050
      %v1748 = vsel %vm1737, %v1715, %v1052
      %v1749 = vsel %vm1737, %v1716, %v1054
      %v1750 = vsel %vm1737, %v1717, %v1056
      %v1751 = vsel %vm1737, %v1718, %v1058
      %v1752 = vsel %vm1737, %v1719, %v1060
      %v1753 = vsel %vm1737, %v1720, %v1062
      %v1754 = vsel %vm1737, %v1721, %v1064
      %v1755 = vsel %vm1737, %v1722, %v1066
      %v1756 = vsel %vm1737, %v1723, %v1068
      %v1757 = vsel %vm1737, %v1724, %v1070
      %v1758 = vsel %vm1737, %v1725, %v1072
      %v1759 = vsel %vm1737, %v1726, %v1074
      %v1760 = vsel %vm1737, %v1727, %v1076
      %v1761 = vsel %vm1737, %v1728, %v1078
      %v1762 = vsel %vm1737, %v1729, %v1080
      %v1763 = vsel %vm1737, %v1730, %v1082
      %v1764 = vsel %vm1737, %v1731, %v1084
      %v1765 = vsel %vm1737, %v1732, %v1086
      %v1766 = vsel %vm1737, %v1733, %v1088
      %v1767 = vsel %vm1737, %v1734, %v1090
      %v1768 = vsel %vm1737, %v1735, %v1092
      %v1769 = vsel %vm1737, %v1736, %v1094
      %vm1770 = vcmask 162816
      %v1771 = vsel %vm1770, %v1738, %v1160
      %v1772 = vsel %vm1770, %v1739, %v1162
      %v1773 = vsel %vm1770, %v1740, %v1164
      %v1774 = vsel %vm1770, %v1741, %v1166
      %v1775 = vsel %vm1770, %v1742, %v1168
      %v1776 = vsel %vm1770, %v1743, %v1170
      %v1777 = vsel %vm1770, %v1744, %v1172
      %v1778 = vsel %vm1770, %v1745, %v1174
      %v1779 = vsel %vm1770, %v1746, %v1176
      %v1780 = vsel %vm1770, %v1747, %v1178
      %v1781 = vsel %vm1770, %v1748, %v1180
      %v1782 = vsel %vm1770, %v1749, %v1182
      %v1783 = vsel %vm1770, %v1750, %v1184
      %v1784 = vsel %vm1770, %v1751, %v1186
      %v1785 = vsel %vm1770, %v1752, %v1188
      %v1786 = vsel %vm1770, %v1753, %v1190
      %v1787 = vsel %vm1770, %v1754, %v1192
      %v1788 = vsel %vm1770, %v1755, %v1194
      %v1789 = vsel %vm1770, %v1756, %v1196
      %v1790 = vsel %vm1770, %v1757, %v1198
      %v1791 = vsel %vm1770, %v1758, %v1200
      %v1792 = vsel %vm1770, %v1759, %v1202
      %v1793 = vsel %vm1770, %v1760, %v1204
      %v1794 = vsel %vm1770, %v1761, %v1206
      %v1795 = vsel %vm1770, %v1762, %v1208
      %v1796 = vsel %vm1770, %v1763, %v1210
      %v1797 = vsel %vm1770, %v1764, %v1212
      %v1798 = vsel %vm1770, %v1765, %v1214
      %v1799 = vsel %vm1770, %v1766, %v1216
      %v1800 = vsel %vm1770, %v1767, %v1218
      %v1801 = vsel %vm1770, %v1768, %v1220
      %v1802 = vsel %vm1770, %v1769, %v1222
      %vm1803 = vcmask 195584
      %v1804 = vsel %vm1803, %v1771, %v1288
      %v1805 = vsel %vm1803, %v1772, %v1290
      %v1806 = vsel %vm1803, %v1773, %v1292
      %v1807 = vsel %vm1803, %v1774, %v1294
      %v1808 = vsel %vm1803, %v1775, %v1296
      %v1809 = vsel %vm1803, %v1776, %v1298
      %v1810 = vsel %vm1803, %v1777, %v1300
      %v1811 = vsel %vm1803, %v1778, %v1302
      %v1812 = vsel %vm1803, %v1779, %v1304
      %v1813 = vsel %vm1803, %v1780, %v1306
      %v1814 = vsel %vm1803, %v1781, %v1308
      %v1815 = vsel %vm1803, %v1782, %v1310
      %v1816 = vsel %vm1803, %v1783, %v1312
      %v1817 = vsel %vm1803, %v1784, %v1314
      %v1818 = vsel %vm1803, %v1785, %v1316
      %v1819 = vsel %vm1803, %v1786, %v1318
      %v1820 = vsel %vm1803, %v1787, %v1320
      %v1821 = vsel %vm1803, %v1788, %v1322
      %v1822 = vsel %vm1803, %v1789, %v1324
      %v1823 = vsel %vm1803, %v1790, %v1326
      %v1824 = vsel %vm1803, %v1791, %v1328
      %v1825 = vsel %vm1803, %v1792, %v1330
      %v1826 = vsel %vm1803, %v1793, %v1332
      %v1827 = vsel %vm1803, %v1794, %v1334
      %v1828 = vsel %vm1803, %v1795, %v1336
      %v1829 = vsel %vm1803, %v1796, %v1338
      %v1830 = vsel %vm1803, %v1797, %v1340
      %v1831 = vsel %vm1803, %v1798, %v1342
      %v1832 = vsel %vm1803, %v1799, %v1344
      %v1833 = vsel %vm1803, %v1800, %v1346
      %v1834 = vsel %vm1803, %v1801, %v1348
      %v1835 = vsel %vm1803, %v1802, %v1350
      %vm1836 = vcmask 228352
      %v1837 = vsel %vm1836, %v1804, %v1416
      %v1838 = vsel %vm1836, %v1805, %v1418
      %v1839 = vsel %vm1836, %v1806, %v1420
      %v1840 = vsel %vm1836, %v1807, %v1422
      %v1841 = vsel %vm1836, %v1808, %v1424
      %v1842 = vsel %vm1836, %v1809, %v1426
      %v1843 = vsel %vm1836, %v1810, %v1428
      %v1844 = vsel %vm1836, %v1811, %v1430
      %v1845 = vsel %vm1836, %v1812, %v1432
      %v1846 = vsel %vm1836, %v1813, %v1434
      %v1847 = vsel %vm1836, %v1814, %v1436
      %v1848 = vsel %vm1836, %v1815, %v1438
      %v1849 = vsel %vm1836, %v1816, %v1440
      %v1850 = vsel %vm1836, %v1817, %v1442
      %v1851 = vsel %vm1836, %v1818, %v1444
      %v1852 = vsel %vm1836, %v1819, %v1446
      %v1853 = vsel %vm1836, %v1820, %v1448
      %v1854 = vsel %vm1836, %v1821, %v1450
      %v1855 = vsel %vm1836, %v1822, %v1452
      %v1856 = vsel %vm1836, %v1823, %v1454
      %v1857 = vsel %vm1836, %v1824, %v1456
      %v1858 = vsel %vm1836, %v1825, %v1458
      %v1859 = vsel %vm1836, %v1826, %v1460
      %v1860 = vsel %vm1836, %v1827, %v1462
      %v1861 = vsel %vm1836, %v1828, %v1464
      %v1862 = vsel %vm1836, %v1829, %v1466
      %v1863 = vsel %vm1836, %v1830, %v1468
      %v1864 = vsel %vm1836, %v1831, %v1470
      %v1865 = vsel %vm1836, %v1832, %v1472
      %v1866 = vsel %vm1836, %v1833, %v1474
      %v1867 = vsel %vm1836, %v1834, %v1476
      %v1868 = vsel %vm1836, %v1835, %v1478
      %vm1869 = vcmask 261120
      %v1870 = vsel %vm1869, %v1837, %v1544
      %v1871 = vsel %vm1869, %v1838, %v1546
      %v1872 = vsel %vm1869, %v1839, %v1548
      %v1873 = vsel %vm1869, %v1840, %v1550
      %v1874 = vsel %vm1869, %v1841, %v1552
      %v1875 = vsel %vm1869, %v1842, %v1554
      %v1876 = vsel %vm1869, %v1843, %v1556
      %v1877 = vsel %vm1869, %v1844, %v1558
      %v1878 = vsel %vm1869, %v1845, %v1560
      %v1879 = vsel %vm1869, %v1846, %v1562
      %v1880 = vsel %vm1869, %v1847, %v1564
      %v1881 = vsel %vm1869, %v1848, %v1566
      %v1882 = vsel %vm1869, %v1849, %v1568
      %v1883 = vsel %vm1869, %v1850, %v1570
      %v1884 = vsel %vm1869, %v1851, %v1572
      %v1885 = vsel %vm1869, %v1852, %v1574
      %v1886 = vsel %vm1869, %v1853, %v1576
      %v1887 = vsel %vm1869, %v1854, %v1578
      %v1888 = vsel %vm1869, %v1855, %v1580
      %v1889 = vsel %vm1869, %v1856, %v1582
      %v1890 = vsel %vm1869, %v1857, %v1584
      %v1891 = vsel %vm1869, %v1858, %v1586
      %v1892 = vsel %vm1869, %v1859, %v1588
      %v1893 = vsel %vm1869, %v1860, %v1590
      %v1894 = vsel %vm1869, %v1861, %v1592
      %v1895 = vsel %vm1869, %v1862, %v1594
      %v1896 = vsel %vm1869, %v1863, %v1596
      %v1897 = vsel %vm1869, %v1864, %v1598
      %v1898 = vsel %vm1869, %v1865, %v1600
      %v1899 = vsel %vm1869, %v1866, %v1602
      %v1900 = vsel %vm1869, %v1867, %v1604
      %v1901 = vsel %vm1869, %v1868, %v1606
      %vm1902 = vcmask 293888
      %v1904 = vsel %vm1902, %v1870, 0
      %v1907 = vsel %vm1902, %v1871, 0
      %v1910 = vsel %vm1902, %v1872, 0
      %v1913 = vsel %vm1902, %v1873, 0
      %v1916 = vsel %vm1902, %v1874, 0
      %v1919 = vsel %vm1902, %v1875, 0
      %v1922 = vsel %vm1902, %v1876, 0
      %v1925 = vsel %vm1902, %v1877, 0
      %v1928 = vsel %vm1902, %v1878, 0
      %v1931 = vsel %vm1902, %v1879, 0
      %v1934 = vsel %vm1902, %v1880, 0
      %v1937 = vsel %vm1902, %v1881, 0
      %v1940 = vsel %vm1902, %v1882, 0
      %v1943 = vsel %vm1902, %v1883, 0
      %v1946 = vsel %vm1902, %v1884, 0
      %v1949 = vsel %vm1902, %v1885, 0
      %v1952 = vsel %vm1902, %v1886, 0
      %v1955 = vsel %vm1902, %v1887, 0
      %v1958 = vsel %vm1902, %v1888, 0
      %v1961 = vsel %vm1902, %v1889, 0
      %v1964 = vsel %vm1902, %v1890, 0
      %v1967 = vsel %vm1902, %v1891, 0
      %v1970 = vsel %vm1902, %v1892, 0
      %v1973 = vsel %vm1902, %v1893, 0
      %v1976 = vsel %vm1902, %v1894, 0
      %v1979 = vsel %vm1902, %v1895, 0
      %v1982 = vsel %vm1902, %v1896, 0
      %v1985 = vsel %vm1902, %v1897, 0
      %v1988 = vsel %vm1902, %v1898, 0
      %v1991 = vsel %vm1902, %v1899, 0
      %v1994 = vsel %vm1902, %v1900, 0
      %v1997 = vsel %vm1902, %v1901, 0
      %vm1999 = vcmask 1043456
      %v2001 = vsel %vm1999, %v325, 0
      %2003 = vmatprep.subr.mxu0 0.0
      %2004 = vmatpush1.msra.mxu0 0.0
      %2005 = vmatprep.subr.mxu0 0.0
      %2006 = vmatpush1.msra.mxu0 0.0
      %2007 = vmatprep.subr.mxu0 0.0
      %2008 = vmatpush1.msra.mxu0 0.0
      %2009 = vmatprep.subr.mxu0 0.0
      %2010 = vmatpush1.msra.mxu0 0.0
      %2011 = vmatprep.subr.mxu0 0.0
      %2012 = vmatpush1.msra.mxu0 0.0
      %2013 = vmatprep.subr.mxu0 0.0
      %2014 = vmatpush1.msra.mxu0 0.0
      %2015 = vmatprep.subr.mxu0 0.0
      %2016 = vmatpush1.msra.mxu0 0.0
      %2017 = vmatprep.subr.mxu0 0.0
      %2018 = vmatpush1.msra.mxu0 0.0
      %2019 = vmatprep.subr.mxu0 0.0
      %2020 = vmatpush1.msra.mxu0 0.0
      %2021 = vmatprep.subr.mxu0 0.0
      %2022 = vmatpush1.msra.mxu0 0.0
      %2023 = vmatprep.subr.mxu0 0.0
      %2024 = vmatpush1.msra.mxu0 0.0
      %2025 = vmatprep.subr.mxu0 0.0
      %2026 = vmatpush1.msra.mxu0 %v2001
      %2027 = vmatprep.subr.mxu0 0.0
      %2028 = vmatpush1.msra.mxu0 %v324
      %2029 = vmatprep.subr.mxu0 0.0
      %2030 = vmatpush1.msra.mxu0 %v323
      %2031 = vmatprep.subr.mxu0 0.0
      %2032 = vmatpush1.msra.mxu0 %v322
      %2033 = vmatprep.subr.mxu0 0.0
      %2034 = vmatpush1.msra.mxu0 %v321
      %2035 = vmatprep.subr.mxu0 0.0
      %2036 = vmatpush2.msra.mxu0 0.0
      %2037 = vmatprep.subr.mxu0 0.0
      %2038 = vmatpush2.msra.mxu0 0.0
      %2039 = vmatprep.subr.mxu0 0.0
      %2040 = vmatpush2.msra.mxu0 0.0
      %2041 = vmatprep.subr.mxu0 0.0
      %2042 = vmatpush2.msra.mxu0 0.0
      %2043 = vmatprep.subr.mxu0 0.0
      %2044 = vmatpush2.msra.mxu0 0.0
      %2045 = vmatprep.subr.mxu0 0.0
      %2046 = vmatpush2.msra.mxu0 0.0
      %2047 = vmatprep.subr.mxu0 0.0
      %2048 = vmatpush2.msra.mxu0 0.0
      %2049 = vmatprep.subr.mxu0 0.0
      %2050 = vmatpush2.msra.mxu0 0.0
      %2051 = vmatprep.subr.mxu0 0.0
      %2052 = vmatpush2.msra.mxu0 0.0
      %2053 = vmatprep.subr.mxu0 0.0
      %2054 = vmatpush2.msra.mxu0 0.0
      %2055 = vmatprep.subr.mxu0 0.0
      %2056 = vmatpush2.msra.mxu0 0.0
      %2057 = vmatprep.subr.mxu0 0.0
      %2058 = vmatpush2.msra.mxu0 0.0
      %2059 = vmatprep.subr.mxu0 0.0
      %2060 = vmatpush2.msra.mxu0 0.0
      %2061 = vmatprep.subr.mxu0 0.0
      %2062 = vmatpush2.msra.mxu0 0.0
      %2063 = vmatprep.subr.mxu0 0.0
      %2064 = vmatpush2.msra.mxu0 0.0
      %2065 = vmatprep.subr.mxu0 0.0
      %2066 = vmatpush2.msra.mxu0 0.0
      %2067 = vmatprep.mubr.f32.mxu0 0.0
      %2068 = vmatmul.mubr.f32.gmra.mxu0 %v1904
      %v2069 = vpop.f32.mrf.mxu0
      %v2070 = vadd.f32 0.0, %v2069
      %v2071 = vpop.f32.mrf.mxu0
      %2072 = vmatprep.mubr.f32.mxu0 0.0
      %2073 = vmatmul.mubr.f32.gmra.mxu0 %v1907
      %v2074 = vpop.f32.mrf.mxu0
      %v2075 = vadd.f32 0.0, %v2074
      %v2076 = vpop.f32.mrf.mxu0
      %2077 = vmatprep.mubr.f32.mxu0 0.0
      %2078 = vmatmul.mubr.f32.gmra.mxu0 %v1910
      %v2079 = vpop.f32.mrf.mxu0
      %v2080 = vadd.f32 0.0, %v2079
      %v2081 = vpop.f32.mrf.mxu0
      %2082 = vmatprep.mubr.f32.mxu0 0.0
      %2083 = vmatmul.mubr.f32.gmra.mxu0 %v1913
      %v2084 = vpop.f32.mrf.mxu0
      %v2085 = vadd.f32 0.0, %v2084
      %v2086 = vpop.f32.mrf.mxu0
      %2087 = vmatprep.mubr.f32.mxu0 0.0
      %2088 = vmatmul.mubr.f32.gmra.mxu0 %v1916
      %v2089 = vpop.f32.mrf.mxu0
      %v2090 = vadd.f32 0.0, %v2089
      %v2091 = vpop.f32.mrf.mxu0
      %2092 = vmatprep.mubr.f32.mxu0 0.0
      %2093 = vmatmul.mubr.f32.gmra.mxu0 %v1919
      %v2094 = vpop.f32.mrf.mxu0
      %v2095 = vadd.f32 0.0, %v2094
      %v2096 = vpop.f32.mrf.mxu0
      %2097 = vmatprep.mubr.f32.mxu0 0.0
      %2098 = vmatmul.mubr.f32.gmra.mxu0 %v1922
      %v2099 = vpop.f32.mrf.mxu0
      %v2100 = vadd.f32 0.0, %v2099
      %v2101 = vpop.f32.mrf.mxu0
      %2102 = vmatprep.mubr.f32.mxu0 0.0
      %2103 = vmatmul.mubr.f32.gmra.mxu0 %v1925
      %v2104 = vpop.f32.mrf.mxu0
      %v2105 = vadd.f32 0.0, %v2104
      %v2106 = vpop.f32.mrf.mxu0
      %2107 = vmatprep.mubr.f32.mxu0 0.0
      %2108 = vmatmul.mubr.f32.gmra.mxu0 %v1928
      %v2109 = vpop.f32.mrf.mxu0
      %v2110 = vadd.f32 0.0, %v2109
      %v2111 = vpop.f32.mrf.mxu0
      %2112 = vmatprep.mubr.f32.mxu0 0.0
      %2113 = vmatmul.mubr.f32.gmra.mxu0 %v1931
      %v2114 = vpop.f32.mrf.mxu0
      %v2115 = vadd.f32 0.0, %v2114
      %v2116 = vpop.f32.mrf.mxu0
      %2117 = vmatprep.mubr.f32.mxu0 0.0
      %2118 = vmatmul.mubr.f32.gmra.mxu0 %v1934
      %v2119 = vpop.f32.mrf.mxu0
      %v2120 = vadd.f32 0.0, %v2119
      %v2121 = vpop.f32.mrf.mxu0
      %2122 = vmatprep.mubr.f32.mxu0 0.0
      %2123 = vmatmul.mubr.f32.gmra.mxu0 %v1937
      %v2124 = vpop.f32.mrf.mxu0
      %v2125 = vadd.f32 0.0, %v2124
      %v2126 = vpop.f32.mrf.mxu0
      %2127 = vmatprep.mubr.f32.mxu0 0.0
      %2128 = vmatmul.mubr.f32.gmra.mxu0 %v1940
      %v2129 = vpop.f32.mrf.mxu0
      %v2130 = vadd.f32 0.0, %v2129
      %v2131 = vpop.f32.mrf.mxu0
      %2132 = vmatprep.mubr.f32.mxu0 0.0
      %2133 = vmatmul.mubr.f32.gmra.mxu0 %v1943
      %v2134 = vpop.f32.mrf.mxu0
      %v2135 = vadd.f32 0.0, %v2134
      %v2136 = vpop.f32.mrf.mxu0
      %2137 = vmatprep.mubr.f32.mxu0 0.0
      %2138 = vmatmul.mubr.f32.gmra.mxu0 %v1946
      %v2139 = vpop.f32.mrf.mxu0
      %v2140 = vadd.f32 0.0, %v2139
      %v2141 = vpop.f32.mrf.mxu0
      %2142 = vmatprep.mubr.f32.mxu0 0.0
      %2143 = vmatmul.mubr.f32.gmra.mxu0 %v1949
      %v2144 = vpop.f32.mrf.mxu0
      %v2145 = vadd.f32 0.0, %v2144
      %v2146 = vpop.f32.mrf.mxu0
      %2147 = vmatprep.mubr.f32.mxu0 0.0
      %2148 = vmatmul.mubr.f32.gmra.mxu0 %v1952
      %v2149 = vpop.f32.mrf.mxu0
      %v2150 = vadd.f32 0.0, %v2149
      %v2151 = vpop.f32.mrf.mxu0
      %2152 = vmatprep.mubr.f32.mxu0 0.0
      %2153 = vmatmul.mubr.f32.gmra.mxu0 %v1955
      %v2154 = vpop.f32.mrf.mxu0
      %v2155 = vadd.f32 0.0, %v2154
      %v2156 = vpop.f32.mrf.mxu0
      %2157 = vmatprep.mubr.f32.mxu0 0.0
      %2158 = vmatmul.mubr.f32.gmra.mxu0 %v1958
      %v2159 = vpop.f32.mrf.mxu0
      %v2160 = vadd.f32 0.0, %v2159
      %v2161 = vpop.f32.mrf.mxu0
      %2162 = vmatprep.mubr.f32.mxu0 0.0
      %2163 = vmatmul.mubr.f32.gmra.mxu0 %v1961
      %v2164 = vpop.f32.mrf.mxu0
      %v2165 = vadd.f32 0.0, %v2164
      %v2166 = vpop.f32.mrf.mxu0
      %2167 = vmatprep.mubr.f32.mxu0 0.0
      %2168 = vmatmul.mubr.f32.gmra.mxu0 %v1964
      %v2169 = vpop.f32.mrf.mxu0
      %v2170 = vadd.f32 0.0, %v2169
      %v2171 = vpop.f32.mrf.mxu0
      %2172 = vmatprep.mubr.f32.mxu0 0.0
      %2173 = vmatmul.mubr.f32.gmra.mxu0 %v1967
      %v2174 = vpop.f32.mrf.mxu0
      %v2175 = vadd.f32 0.0, %v2174
      %v2176 = vpop.f32.mrf.mxu0
      %2177 = vmatprep.mubr.f32.mxu0 0.0
      %2178 = vmatmul.mubr.f32.gmra.mxu0 %v1970
      %v2179 = vpop.f32.mrf.mxu0
      %v2180 = vadd.f32 0.0, %v2179
      %v2181 = vpop.f32.mrf.mxu0
      %2182 = vmatprep.mubr.f32.mxu0 0.0
      %2183 = vmatmul.mubr.f32.gmra.mxu0 %v1973
      %v2184 = vpop.f32.mrf.mxu0
      %v2185 = vadd.f32 0.0, %v2184
      %v2186 = vpop.f32.mrf.mxu0
      %2187 = vmatprep.mubr.f32.mxu0 0.0
      %2188 = vmatmul.mubr.f32.gmra.mxu0 %v1976
      %v2189 = vpop.f32.mrf.mxu0
      %v2190 = vadd.f32 0.0, %v2189
      %v2191 = vpop.f32.mrf.mxu0
      %2192 = vmatprep.mubr.f32.mxu0 0.0
      %2193 = vmatmul.mubr.f32.gmra.mxu0 %v1979
      %v2194 = vpop.f32.mrf.mxu0
      %v2195 = vadd.f32 0.0, %v2194
      %v2196 = vpop.f32.mrf.mxu0
      %2197 = vmatprep.mubr.f32.mxu0 0.0
      %2198 = vmatmul.mubr.f32.gmra.mxu0 %v1982
      %v2199 = vpop.f32.mrf.mxu0
      %v2200 = vadd.f32 0.0, %v2199
      %v2201 = vpop.f32.mrf.mxu0
      %2202 = vmatprep.mubr.f32.mxu0 0.0
      %2203 = vmatmul.mubr.f32.gmra.mxu0 %v1985
      %v2204 = vpop.f32.mrf.mxu0
      %v2205 = vadd.f32 0.0, %v2204
      %v2206 = vpop.f32.mrf.mxu0
      %2207 = vmatprep.mubr.f32.mxu0 0.0
      %2208 = vmatmul.mubr.f32.gmra.mxu0 %v1988
      %v2209 = vpop.f32.mrf.mxu0
      %v2210 = vadd.f32 0.0, %v2209
      %v2211 = vpop.f32.mrf.mxu0
      %2212 = vmatprep.mubr.f32.mxu0 0.0
      %2213 = vmatmul.mubr.f32.gmra.mxu0 %v1991
      %v2214 = vpop.f32.mrf.mxu0
      %v2215 = vadd.f32 0.0, %v2214
      %v2216 = vpop.f32.mrf.mxu0
      %2217 = vmatprep.mubr.f32.mxu0 0.0
      %2218 = vmatmul.mubr.f32.gmra.mxu0 %v1994
      %v2219 = vpop.f32.mrf.mxu0
      %v2220 = vadd.f32 0.0, %v2219
      %v2221 = vpop.f32.mrf.mxu0
      %2222 = vmatprep.mubr.f32.mxu0 0.0
      %2223 = vmatmul.mubr.f32.gmra.mxu0 %v1997
      %v2224 = vpop.f32.mrf.mxu0
      %v2225 = vadd.f32 0.0, %v2224
      %v2226 = vpop.f32.mrf.mxu0
      %2227 = vdwg.mxu0
      %v2228 = vsel %vm204, %v2070, 0.0
      %v2229 = vsel %vm204, %v2075, 0.0
      %v2230 = vadd.f32 %v2228, %v2229
      %v2231 = vsel %vm204, %v2080, 0.0
      %v2232 = vadd.f32 %v2230, %v2231
      %v2233 = vsel %vm204, %v2085, 0.0
      %v2234 = vadd.f32 %v2232, %v2233
      %v2235 = vsel %vm204, %v2090, 0.0
      %v2236 = vadd.f32 %v2234, %v2235
      %v2237 = vsel %vm204, %v2095, 0.0
      %v2238 = vadd.f32 %v2236, %v2237
      %v2239 = vsel %vm204, %v2100, 0.0
      %v2240 = vadd.f32 %v2238, %v2239
      %v2241 = vsel %vm204, %v2105, 0.0
      %v2242 = vadd.f32 %v2240, %v2241
      %v2243 = vsel %vm204, %v2110, 0.0
      %v2244 = vadd.f32 %v2242, %v2243
      %v2245 = vsel %vm204, %v2115, 0.0
      %v2246 = vadd.f32 %v2244, %v2245
      %v2247 = vsel %vm204, %v2120, 0.0
      %v2248 = vadd.f32 %v2246, %v2247
      %v2249 = vsel %vm204, %v2125, 0.0
      %v2250 = vadd.f32 %v2248, %v2249
      %v2251 = vsel %vm204, %v2130, 0.0
      %v2252 = vadd.f32 %v2250, %v2251
      %v2253 = vsel %vm204, %v2135, 0.0
      %v2254 = vadd.f32 %v2252, %v2253
      %v2255 = vsel %vm204, %v2140, 0.0
      %v2256 = vadd.f32 %v2254, %v2255
      %v2257 = vsel %vm204, %v2145, 0.0
      %v2258 = vadd.f32 %v2256, %v2257
      %v2259 = vsel %vm204, %v2150, 0.0
      %v2260 = vadd.f32 %v2258, %v2259
      %v2261 = vsel %vm204, %v2155, 0.0
      %v2262 = vadd.f32 %v2260, %v2261
      %v2263 = vsel %vm204, %v2160, 0.0
      %v2264 = vadd.f32 %v2262, %v2263
      %v2265 = vsel %vm204, %v2165, 0.0
      %v2266 = vadd.f32 %v2264, %v2265
      %v2267 = vsel %vm204, %v2170, 0.0
      %v2268 = vadd.f32 %v2266, %v2267
      %v2269 = vsel %vm204, %v2175, 0.0
      %v2270 = vadd.f32 %v2268, %v2269
      %v2271 = vsel %vm204, %v2180, 0.0
      %v2272 = vadd.f32 %v2270, %v2271
      %v2273 = vsel %vm204, %v2185, 0.0
      %v2274 = vadd.f32 %v2272, %v2273
      %v2275 = vsel %vm204, %v2190, 0.0
      %v2276 = vadd.f32 %v2274, %v2275
      %v2277 = vsel %vm204, %v2195, 0.0
      %v2278 = vadd.f32 %v2276, %v2277
      %v2279 = vsel %vm204, %v2200, 0.0
      %v2280 = vadd.f32 %v2278, %v2279
      %v2281 = vsel %vm204, %v2205, 0.0
      %v2282 = vadd.f32 %v2280, %v2281
      %v2283 = vsel %vm204, %v2210, 0.0
      %v2284 = vadd.f32 %v2282, %v2283
      %v2285 = vsel %vm204, %v2215, 0.0
      %v2286 = vadd.f32 %v2284, %v2285
      %v2287 = vsel %vm204, %v2220, 0.0
      %v2288 = vadd.f32 %v2286, %v2287
      %v2289 = vsel %vm204, %v2225, 0.0
      %v2290 = vadd.f32 %v2288, %v2289
      %v2291 = vrot.slane %v2290, 4
      %v2292 = vadd.f32 %v2290, %v2291
      %v2293 = vrot.slane %v2292, 2
      %v2294 = vadd.f32 %v2292, %v2293
      %v2295 = vrot.slane %v2294, 1
      %v2296 = vadd.f32 %v2294, %v2295
      %v2297 = vmul.f32 %v2296, 0.00390625
      %v2298 = vsub.f32 %v2070, %v2297
      %v2299 = vsub.f32 %v2075, %v2297
      %v2300 = vsub.f32 %v2080, %v2297
      %v2301 = vsub.f32 %v2085, %v2297
      %v2302 = vsub.f32 %v2090, %v2297
      %v2303 = vsub.f32 %v2095, %v2297
      %v2304 = vsub.f32 %v2100, %v2297
      %v2305 = vsub.f32 %v2105, %v2297
      %v2306 = vsub.f32 %v2110, %v2297
      %v2307 = vsub.f32 %v2115, %v2297
      %v2308 = vsub.f32 %v2120, %v2297
      %v2309 = vsub.f32 %v2125, %v2297
      %v2310 = vsub.f32 %v2130, %v2297
      %v2311 = vsub.f32 %v2135, %v2297
      %v2312 = vsub.f32 %v2140, %v2297
      %v2313 = vsub.f32 %v2145, %v2297
      %v2314 = vsub.f32 %v2150, %v2297
      %v2315 = vsub.f32 %v2155, %v2297
      %v2316 = vsub.f32 %v2160, %v2297
      %v2317 = vsub.f32 %v2165, %v2297
      %v2318 = vsub.f32 %v2170, %v2297
      %v2319 = vsub.f32 %v2175, %v2297
      %v2320 = vsub.f32 %v2180, %v2297
      %v2321 = vsub.f32 %v2185, %v2297
      %v2322 = vsub.f32 %v2190, %v2297
      %v2323 = vsub.f32 %v2195, %v2297
      %v2324 = vsub.f32 %v2200, %v2297
      %v2325 = vsub.f32 %v2205, %v2297
      %v2326 = vsub.f32 %v2210, %v2297
      %v2327 = vsub.f32 %v2215, %v2297
      %v2328 = vsub.f32 %v2220, %v2297
      %v2329 = vsub.f32 %v2225, %v2297
      %v2330 = vmul.f32 %v2298, %v2298
      %v2331 = vmul.f32 %v2299, %v2299
      %v2332 = vmul.f32 %v2300, %v2300
      %v2333 = vmul.f32 %v2301, %v2301
      %v2334 = vmul.f32 %v2302, %v2302
      %v2335 = vmul.f32 %v2303, %v2303
      %v2336 = vmul.f32 %v2304, %v2304
      %v2337 = vmul.f32 %v2305, %v2305
      %v2338 = vmul.f32 %v2306, %v2306
      %v2339 = vmul.f32 %v2307, %v2307
      %v2340 = vmul.f32 %v2308, %v2308
      %v2341 = vmul.f32 %v2309, %v2309
      %v2342 = vmul.f32 %v2310, %v2310
      %v2343 = vmul.f32 %v2311, %v2311
      %v2344 = vmul.f32 %v2312, %v2312
      %v2345 = vmul.f32 %v2313, %v2313
      %v2346 = vmul.f32 %v2314, %v2314
      %v2347 = vmul.f32 %v2315, %v2315
      %v2348 = vmul.f32 %v2316, %v2316
      %v2349 = vmul.f32 %v2317, %v2317
      %v2350 = vmul.f32 %v2318, %v2318
      %v2351 = vmul.f32 %v2319, %v2319
      %v2352 = vmul.f32 %v2320, %v2320
      %v2353 = vmul.f32 %v2321, %v2321
      %v2354 = vmul.f32 %v2322, %v2322
      %v2355 = vmul.f32 %v2323, %v2323
      %v2356 = vmul.f32 %v2324, %v2324
      %v2357 = vmul.f32 %v2325, %v2325
      %v2358 = vmul.f32 %v2326, %v2326
      %v2359 = vmul.f32 %v2327, %v2327
      %v2360 = vmul.f32 %v2328, %v2328
      %v2361 = vmul.f32 %v2329, %v2329
      %v2362 = vsel %vm204, %v2330, 0.0
      %v2363 = vsel %vm204, %v2331, 0.0
      %v2364 = vadd.f32 %v2362, %v2363
      %v2365 = vsel %vm204, %v2332, 0.0
      %v2366 = vadd.f32 %v2364, %v2365
      %v2367 = vsel %vm204, %v2333, 0.0
      %v2368 = vadd.f32 %v2366, %v2367
      %v2369 = vsel %vm204, %v2334, 0.0
      %v2370 = vadd.f32 %v2368, %v2369
      %v2371 = vsel %vm204, %v2335, 0.0
      %v2372 = vadd.f32 %v2370, %v2371
      %v2373 = vsel %vm204, %v2336, 0.0
      %v2374 = vadd.f32 %v2372, %v2373
      %v2375 = vsel %vm204, %v2337, 0.0
      %v2376 = vadd.f32 %v2374, %v2375
      %v2377 = vsel %vm204, %v2338, 0.0
      %v2378 = vadd.f32 %v2376, %v2377
      %v2379 = vsel %vm204, %v2339, 0.0
      %v2380 = vadd.f32 %v2378, %v2379
      %v2381 = vsel %vm204, %v2340, 0.0
      %v2382 = vadd.f32 %v2380, %v2381
      %v2383 = vsel %vm204, %v2341, 0.0
      %v2384 = vadd.f32 %v2382, %v2383
      %v2385 = vsel %vm204, %v2342, 0.0
      %v2386 = vadd.f32 %v2384, %v2385
      %v2387 = vsel %vm204, %v2343, 0.0
      %v2388 = vadd.f32 %v2386, %v2387
      %v2389 = vsel %vm204, %v2344, 0.0
      %v2390 = vadd.f32 %v2388, %v2389
      %v2391 = vsel %vm204, %v2345, 0.0
      %v2392 = vadd.f32 %v2390, %v2391
      %v2393 = vsel %vm204, %v2346, 0.0
      %v2394 = vadd.f32 %v2392, %v2393
      %v2395 = vsel %vm204, %v2347, 0.0
      %v2396 = vadd.f32 %v2394, %v2395
      %v2397 = vsel %vm204, %v2348, 0.0
      %v2398 = vadd.f32 %v2396, %v2397
      %v2399 = vsel %vm204, %v2349, 0.0
      %v2400 = vadd.f32 %v2398, %v2399
      %v2401 = vsel %vm204, %v2350, 0.0
      %v2402 = vadd.f32 %v2400, %v2401
      %v2403 = vsel %vm204, %v2351, 0.0
      %v2404 = vadd.f32 %v2402, %v2403
      %v2405 = vsel %vm204, %v2352, 0.0
      %v2406 = vadd.f32 %v2404, %v2405
      %v2407 = vsel %vm204, %v2353, 0.0
      %v2408 = vadd.f32 %v2406, %v2407
      %v2409 = vsel %vm204, %v2354, 0.0
      %v2410 = vadd.f32 %v2408, %v2409
      %v2411 = vsel %vm204, %v2355, 0.0
      %v2412 = vadd.f32 %v2410, %v2411
      %v2413 = vsel %vm204, %v2356, 0.0
      %v2414 = vadd.f32 %v2412, %v2413
      %v2415 = vsel %vm204, %v2357, 0.0
      %v2416 = vadd.f32 %v2414, %v2415
      %v2417 = vsel %vm204, %v2358, 0.0
      %v2418 = vadd.f32 %v2416, %v2417
      %v2419 = vsel %vm204, %v2359, 0.0
      %v2420 = vadd.f32 %v2418, %v2419
      %v2421 = vsel %vm204, %v2360, 0.0
      %v2422 = vadd.f32 %v2420, %v2421
      %v2423 = vsel %vm204, %v2361, 0.0
      %v2424 = vadd.f32 %v2422, %v2423
      %v2425 = vrot.slane %v2424, 4
      %v2426 = vadd.f32 %v2424, %v2425
      %v2427 = vrot.slane %v2426, 2
      %v2428 = vadd.f32 %v2426, %v2427
      %v2429 = vrot.slane %v2428, 1
      %v2430 = vadd.f32 %v2428, %v2429
      %v2431 = vmul.f32 %v2430, 0.00390625
      %v2432 = vadd.f32 %v2431, 1e-05
      %v2433 = vrsqrt.pop %v2432
      %v2434 = vmul.f32 %v2298, %v2433
      %v2435 = vmul.f32 %v2299, %v2433
      %v2436 = vmul.f32 %v2300, %v2433
      %v2437 = vmul.f32 %v2301, %v2433
      %v2438 = vmul.f32 %v2302, %v2433
      %v2439 = vmul.f32 %v2303, %v2433
      %v2440 = vmul.f32 %v2304, %v2433
      %v2441 = vmul.f32 %v2305, %v2433
      %v2442 = vmul.f32 %v2306, %v2433
      %v2443 = vmul.f32 %v2307, %v2433
      %v2444 = vmul.f32 %v2308, %v2433
      %v2445 = vmul.f32 %v2309, %v2433
      %v2446 = vmul.f32 %v2310, %v2433
      %v2447 = vmul.f32 %v2311, %v2433
      %v2448 = vmul.f32 %v2312, %v2433
      %v2449 = vmul.f32 %v2313, %v2433
      %v2450 = vmul.f32 %v2314, %v2433
      %v2451 = vmul.f32 %v2315, %v2433
      %v2452 = vmul.f32 %v2316, %v2433
      %v2453 = vmul.f32 %v2317, %v2433
      %v2454 = vmul.f32 %v2318, %v2433
      %v2455 = vmul.f32 %v2319, %v2433
      %v2456 = vmul.f32 %v2320, %v2433
      %v2457 = vmul.f32 %v2321, %v2433
      %v2458 = vmul.f32 %v2322, %v2433
      %v2459 = vmul.f32 %v2323, %v2433
      %v2460 = vmul.f32 %v2324, %v2433
      %v2461 = vmul.f32 %v2325, %v2433
      %v2462 = vmul.f32 %v2326, %v2433
      %v2463 = vmul.f32 %v2327, %v2433
      %v2464 = vmul.f32 %v2328, %v2433
      %v2465 = vmul.f32 %v2329, %v2433
      %v2466 = vmax.f32 %v2434, 0.0
      %v2467 = vmax.f32 %v2435, 0.0
      %v2468 = vmax.f32 %v2436, 0.0
      %v2469 = vmax.f32 %v2437, 0.0
      %v2470 = vmax.f32 %v2438, 0.0
      %v2471 = vmax.f32 %v2439, 0.0
      %v2472 = vmax.f32 %v2440, 0.0
      %v2473 = vmax.f32 %v2441, 0.0
      %v2474 = vmax.f32 %v2442, 0.0
      %v2475 = vmax.f32 %v2443, 0.0
      %v2476 = vmax.f32 %v2444, 0.0
      %v2477 = vmax.f32 %v2445, 0.0
      %v2478 = vmax.f32 %v2446, 0.0
      %v2479 = vmax.f32 %v2447, 0.0
      %v2480 = vmax.f32 %v2448, 0.0
      %v2481 = vmax.f32 %v2449, 0.0
      %v2482 = vmax.f32 %v2450, 0.0
      %v2483 = vmax.f32 %v2451, 0.0
      %v2484 = vmax.f32 %v2452, 0.0
      %v2485 = vmax.f32 %v2453, 0.0
      %v2486 = vmax.f32 %v2454, 0.0
      %v2487 = vmax.f32 %v2455, 0.0
      %v2488 = vmax.f32 %v2456, 0.0
      %v2489 = vmax.f32 %v2457, 0.0
      %v2490 = vmax.f32 %v2458, 0.0
      %v2491 = vmax.f32 %v2459, 0.0
      %v2492 = vmax.f32 %v2460, 0.0
      %v2493 = vmax.f32 %v2461, 0.0
      %v2494 = vmax.f32 %v2462, 0.0
      %v2495 = vmax.f32 %v2463, 0.0
      %v2496 = vmax.f32 %v2464, 0.0
      %v2497 = vmax.f32 %v2465, 0.0
      %2498 = vst.msk [vmem:[%s203 + $0x1] sm:$0xff] %vm204, %v2466
      %2499 = vst.msk [vmem:[%s203 + $0x9] sm:$0xff] %vm204, %v2467
      %2500 = vst.msk [vmem:[%s203 + $0x19] sm:$0xff] %vm204, %v2468
      %2501 = vst.msk [vmem:[%s203 + $0x21] sm:$0xff] %vm204, %v2469
      %2502 = vst.msk [vmem:[%s203 + $0x31] sm:$0xff] %vm204, %v2470
      %2503 = vst.msk [vmem:[%s203 + $0x39] sm:$0xff] %vm204, %v2471
      %2504 = vst.msk [vmem:[%s203 + $0x49] sm:$0xff] %vm204, %v2472
      %2505 = vst.msk [vmem:[%s203 + $0x51] sm:$0xff] %vm204, %v2473
      %2506 = vst.msk [vmem:[%s203 + $0x61] sm:$0xff] %vm204, %v2474
      %2507 = vst.msk [vmem:[%s203 + $0x69] sm:$0xff] %vm204, %v2475
      %2508 = vst.msk [vmem:[%s203 + $0x79] sm:$0xff] %vm204, %v2476
      %2509 = vst.msk [vmem:[%s203 + $0x81] sm:$0xff] %vm204, %v2477
      %2510 = vst.msk [vmem:[%s203 + $0x91] sm:$0xff] %vm204, %v2478
      %2511 = vst.msk [vmem:[%s203 + $0x99] sm:$0xff] %vm204, %v2479
      %2512 = vst.msk [vmem:[%s203 + $0xa9] sm:$0xff] %vm204, %v2480
      %2513 = vst.msk [vmem:[%s203 + $0xb1] sm:$0xff] %vm204, %v2481
      %2514 = vst.msk [vmem:[%s203 + $0xc1] sm:$0xff] %vm204, %v2482
      %2515 = vst.msk [vmem:[%s203 + $0xc9] sm:$0xff] %vm204, %v2483
      %2516 = vst.msk [vmem:[%s203 + $0xd9] sm:$0xff] %vm204, %v2484
      %2517 = vst.msk [vmem:[%s203 + $0xe1] sm:$0xff] %vm204, %v2485
      %2518 = vst.msk [vmem:[%s203 + $0xf1] sm:$0xff] %vm204, %v2486
      %2519 = vst.msk [vmem:[%s203 + $0xf9] sm:$0xff] %vm204, %v2487
      %2520 = vst.msk [vmem:[%s203 + $0x109] sm:$0xff] %vm204, %v2488
      %2521 = vst.msk [vmem:[%s203 + $0x111] sm:$0xff] %vm204, %v2489
      %2522 = vst.msk [vmem:[%s203 + $0x121] sm:$0xff] %vm204, %v2490
      %2523 = vst.msk [vmem:[%s203 + $0x129] sm:$0xff] %vm204, %v2491
      %2524 = vst.msk [vmem:[%s203 + $0x139] sm:$0xff] %vm204, %v2492
      %2525 = vst.msk [vmem:[%s203 + $0x141] sm:$0xff] %vm204, %v2493
      %2526 = vst.msk [vmem:[%s203 + $0x151] sm:$0xff] %vm204, %v2494
      %2527 = vst.msk [vmem:[%s203 + $0x159] sm:$0xff] %vm204, %v2495
      %2528 = vst.msk [vmem:[%s203 + $0x169] sm:$0xff] %vm204, %v2496
      %2529 = vst.msk [vmem:[%s203 + $0x171] sm:$0xff] %vm204, %v2497
      %2530 = vst.msk [vmem:[#allocation2 + $0x1] sm:$0xff] %vm204, %v2468
      %2531 = vst.msk [vmem:[#allocation2 + $0x9] sm:$0xff] %vm204, %v2469
      %2532 = vst.msk [vmem:[%s245 + $0x1] sm:$0xff] %vm204, %v2494
      %2533 = vst.msk [vmem:[%s245 + $0x9] sm:$0xff] %vm204, %v2495
      %v2534 = vld [vmem:[#allocation2 + $0x2] sm:$0x1]
      %v2535 = vld [vmem:[#allocation2 + $0x1a] sm:$0x1]
      %v2536 = vld [vmem:[#allocation2 + $0x32] sm:$0x1]
      %v2537 = vld [vmem:[#allocation2 + $0x4a] sm:$0x1]
      %v2538 = vld [vmem:[#allocation2 + $0x62] sm:$0x1]
      %v2539 = vld [vmem:[#allocation2 + $0x7a] sm:$0x1]
      %v2540 = vld [vmem:[#allocation2 + $0x92] sm:$0x1]
      %v2541 = vld [vmem:[#allocation2 + $0xaa] sm:$0x1]
      %v2542 = vld [vmem:[#allocation2 + $0xc2] sm:$0x1]
      %v2543 = vld [vmem:[#allocation2 + $0xda] sm:$0x1]
      %v2544 = vld [vmem:[#allocation2 + $0xf2] sm:$0x1]
      %v2545 = vld [vmem:[#allocation2 + $0x10a] sm:$0x1]
      %v2546 = vld [vmem:[#allocation2 + $0x122] sm:$0x1]
      %v2547 = vld [vmem:[#allocation2 + $0x13a] sm:$0x1]
      %v2548 = vld [vmem:[#allocation2 + $0x152] sm:$0x1]
      %v2549 = vld [vmem:[#allocation2 + $0x16a] sm:$0x1]
      %v2550 = vld [vmem:[#allocation2 + $0x182] sm:$0x1]
      %v2551 = vld [vmem:[#allocation2 + $0x19a] sm:$0x1]
      %2552 = vst.msk [vmem:[#allocation2] sm:$0x1] %vm266, %v2534
      %2553 = vst.msk [vmem:[#allocation2 + $0x18] sm:$0x1] %vm266, %v2535
      %2554 = vst.msk [vmem:[#allocation2 + $0x30] sm:$0x1] %vm266, %v2536
      %2555 = vst.msk [vmem:[#allocation2 + $0x48] sm:$0x1] %vm266, %v2537
      %2556 = vst.msk [vmem:[#allocation2 + $0x60] sm:$0x1] %vm266, %v2538
      %2557 = vst.msk [vmem:[#allocation2 + $0x78] sm:$0x1] %vm266, %v2539
      %2558 = vst.msk [vmem:[#allocation2 + $0x90] sm:$0x1] %vm266, %v2540
      %2559 = vst.msk [vmem:[#allocation2 + $0xa8] sm:$0x1] %vm266, %v2541
      %2560 = vst.msk [vmem:[#allocation2 + $0xc0] sm:$0x1] %vm266, %v2542
      %2561 = vst.msk [vmem:[#allocation2 + $0xd8] sm:$0x1] %vm266, %v2543
      %2562 = vst.msk [vmem:[#allocation2 + $0xf0] sm:$0x1] %vm266, %v2544
      %2563 = vst.msk [vmem:[#allocation2 + $0x108] sm:$0x1] %vm266, %v2545
      %2564 = vst.msk [vmem:[#allocation2 + $0x120] sm:$0x1] %vm266, %v2546
      %2565 = vst.msk [vmem:[#allocation2 + $0x138] sm:$0x1] %vm266, %v2547
      %2566 = vst.msk [vmem:[#allocation2 + $0x150] sm:$0x1] %vm266, %v2548
      %2567 = vst.msk [vmem:[#allocation2 + $0x168] sm:$0x1] %vm266, %v2549
      %2568 = vst.msk [vmem:[#allocation2 + $0x180] sm:$0x1] %vm266, %v2550
      %2569 = vst.msk [vmem:[#allocation2 + $0x198] sm:$0x1] %vm266, %v2551
      %v2570 = vld [vmem:[#allocation2 + $0xf] sm:$0x1]
      %v2571 = vld [vmem:[#allocation2 + $0x27] sm:$0x1]
      %v2572 = vld [vmem:[#allocation2 + $0x3f] sm:$0x1]
      %v2573 = vld [vmem:[#allocation2 + $0x57] sm:$0x1]
      %v2574 = vld [vmem:[#allocation2 + $0x6f] sm:$0x1]
      %v2575 = vld [vmem:[#allocation2 + $0x87] sm:$0x1]
      %v2576 = vld [vmem:[#allocation2 + $0x9f] sm:$0x1]
      %v2577 = vld [vmem:[#allocation2 + $0xb7] sm:$0x1]
      %v2578 = vld [vmem:[#allocation2 + $0xcf] sm:$0x1]
      %v2579 = vld [vmem:[#allocation2 + $0xe7] sm:$0x1]
      %v2580 = vld [vmem:[#allocation2 + $0xff] sm:$0x1]
      %v2581 = vld [vmem:[#allocation2 + $0x117] sm:$0x1]
      %v2582 = vld [vmem:[#allocation2 + $0x12f] sm:$0x1]
      %v2583 = vld [vmem:[#allocation2 + $0x147] sm:$0x1]
      %v2584 = vld [vmem:[#allocation2 + $0x15f] sm:$0x1]
      %v2585 = vld [vmem:[#allocation2 + $0x177] sm:$0x1]
      %v2586 = vld [vmem:[#allocation2 + $0x18f] sm:$0x1]
      %v2587 = vld [vmem:[#allocation2 + $0x1a7] sm:$0x1]
      %2588 = vst.msk [vmem:[#allocation2 + $0x11] sm:$0x1] %vm266, %v2570
      %2589 = vst.msk [vmem:[#allocation2 + $0x29] sm:$0x1] %vm266, %v2571
      %2590 = vst.msk [vmem:[#allocation2 + $0x41] sm:$0x1] %vm266, %v2572
      %2591 = vst.msk [vmem:[#allocation2 + $0x59] sm:$0x1] %vm266, %v2573
      %2592 = vst.msk [vmem:[#allocation2 + $0x71] sm:$0x1] %vm266, %v2574
      %2593 = vst.msk [vmem:[#allocation2 + $0x89] sm:$0x1] %vm266, %v2575
      %2594 = vst.msk [vmem:[#allocation2 + $0xa1] sm:$0x1] %vm266, %v2576
      %2595 = vst.msk [vmem:[#allocation2 + $0xb9] sm:$0x1] %vm266, %v2577
      %2596 = vst.msk [vmem:[#allocation2 + $0xd1] sm:$0x1] %vm266, %v2578
      %2597 = vst.msk [vmem:[#allocation2 + $0xe9] sm:$0x1] %vm266, %v2579
      %2598 = vst.msk [vmem:[#allocation2 + $0x101] sm:$0x1] %vm266, %v2580
      %2599 = vst.msk [vmem:[#allocation2 + $0x119] sm:$0x1] %vm266, %v2581
      %2600 = vst.msk [vmem:[#allocation2 + $0x131] sm:$0x1] %vm266, %v2582
      %2601 = vst.msk [vmem:[#allocation2 + $0x149] sm:$0x1] %vm266, %v2583
      %2602 = vst.msk [vmem:[#allocation2 + $0x161] sm:$0x1] %vm266, %v2584
      %2603 = vst.msk [vmem:[#allocation2 + $0x179] sm:$0x1] %vm266, %v2585
      %2604 = vst.msk [vmem:[#allocation2 + $0x191] sm:$0x1] %vm266, %v2586
      %2605 = vst.msk [vmem:[#allocation2 + $0x1a9] sm:$0x1] %vm266, %v2587
      %v2606 = vld [vmem:[%s2] sm:$0xff]
      %v2607 = vld [vmem:[%s2 + $0x8] sm:$0xff]
      %v2608 = vld [vmem:[%s2 + $0x10] sm:$0xff]
      %v2609 = vld [vmem:[%s2 + $0x18] sm:$0xff]
      %v2610 = vld [vmem:[%s2 + $0x20] sm:$0xf]
      %v2611 = vld [vmem:[#allocation2] sm:$0xff]
      %v2612 = vld [vmem:[#allocation2 + $0x8] sm:$0xff]
      %v2613 = vld [vmem:[#allocation2 + $0x18] sm:$0xff]
      %v2614 = vld [vmem:[#allocation2 + $0x20] sm:$0xff]
      %v2615 = vld [vmem:[#allocation2 + $0x30] sm:$0xff]
      %v2616 = vld [vmem:[#allocation2 + $0x38] sm:$0xff]
      %v2617 = vld [vmem:[#allocation2 + $0x48] sm:$0xff]
      %v2618 = vld [vmem:[#allocation2 + $0x50] sm:$0xff]
      %v2619 = vld [vmem:[#allocation2 + $0x60] sm:$0xff]
      %v2620 = vld [vmem:[#allocation2 + $0x68] sm:$0xff]
      %v2621 = vld [vmem:[#allocation2 + $0x78] sm:$0xff]
      %v2622 = vld [vmem:[#allocation2 + $0x80] sm:$0xff]
      %v2623 = vld [vmem:[#allocation2 + $0x90] sm:$0xff]
      %v2624 = vld [vmem:[#allocation2 + $0x98] sm:$0xff]
      %v2625 = vld [vmem:[#allocation2 + $0xa8] sm:$0xff]
      %v2626 = vld [vmem:[#allocation2 + $0xb0] sm:$0xff]
      %v2627 = vld [vmem:[#allocation2 + $0xc0] sm:$0xff]
      %v2628 = vld [vmem:[#allocation2 + $0xc8] sm:$0xff]
      %v2629 = vld [vmem:[#allocation2 + $0xd8] sm:$0xff]
      %v2630 = vld [vmem:[#allocation2 + $0xe0] sm:$0xff]
      %v2631 = vld [vmem:[#allocation2 + $0xf0] sm:$0xff]
      %v2632 = vld [vmem:[#allocation2 + $0xf8] sm:$0xff]
      %v2633 = vld [vmem:[#allocation2 + $0x108] sm:$0xff]
      %v2634 = vld [vmem:[#allocation2 + $0x110] sm:$0xff]
      %v2635 = vld [vmem:[#allocation2 + $0x120] sm:$0xff]
      %v2636 = vld [vmem:[#allocation2 + $0x128] sm:$0xff]
      %v2637 = vld [vmem:[#allocation2 + $0x138] sm:$0xff]
      %v2638 = vld [vmem:[#allocation2 + $0x140] sm:$0xff]
      %v2639 = vld [vmem:[#allocation2 + $0x150] sm:$0xff]
      %v2640 = vld [vmem:[#allocation2 + $0x158] sm:$0xff]
      %v2641 = vld [vmem:[#allocation2 + $0x168] sm:$0xff]
      %v2642 = vld [vmem:[#allocation2 + $0x170] sm:$0xff]
      %v2643 = vld [vmem:[#allocation2 + $0x1] sm:$0xff]
      %v2644 = vld [vmem:[#allocation2 + $0x9] sm:$0xff]
      %v2645 = vld [vmem:[#allocation2 + $0x19] sm:$0xff]
      %v2646 = vld [vmem:[#allocation2 + $0x21] sm:$0xff]
      %v2647 = vld [vmem:[#allocation2 + $0x31] sm:$0xff]
      %v2648 = vld [vmem:[#allocation2 + $0x39] sm:$0xff]
      %v2649 = vld [vmem:[#allocation2 + $0x49] sm:$0xff]
      %v2650 = vld [vmem:[#allocation2 + $0x51] sm:$0xff]
      %v2651 = vld [vmem:[#allocation2 + $0x61] sm:$0xff]
      %v2652 = vld [vmem:[#allocation2 + $0x69] sm:$0xff]
      %v2653 = vld [vmem:[#allocation2 + $0x79] sm:$0xff]
      %v2654 = vld [vmem:[#allocation2 + $0x81] sm:$0xff]
      %v2655 = vld [vmem:[#allocation2 + $0x91] sm:$0xff]
      %v2656 = vld [vmem:[#allocation2 + $0x99] sm:$0xff]
      %v2657 = vld [vmem:[#allocation2 + $0xa9] sm:$0xff]
      %v2658 = vld [vmem:[#allocation2 + $0xb1] sm:$0xff]
      %v2659 = vld [vmem:[#allocation2 + $0xc1] sm:$0xff]
      %v2660 = vld [vmem:[#allocation2 + $0xc9] sm:$0xff]
      %v2661 = vld [vmem:[#allocation2 + $0xd9] sm:$0xff]
      %v2662 = vld [vmem:[#allocation2 + $0xe1] sm:$0xff]
      %v2663 = vld [vmem:[#allocation2 + $0xf1] sm:$0xff]
      %v2664 = vld [vmem:[#allocation2 + $0xf9] sm:$0xff]
      %v2665 = vld [vmem:[#allocation2 + $0x109] sm:$0xff]
      %v2666 = vld [vmem:[#allocation2 + $0x111] sm:$0xff]
      %v2667 = vld [vmem:[#allocation2 + $0x121] sm:$0xff]
      %v2668 = vld [vmem:[#allocation2 + $0x129] sm:$0xff]
      %v2669 = vld [vmem:[#allocation2 + $0x139] sm:$0xff]
      %v2670 = vld [vmem:[#allocation2 + $0x141] sm:$0xff]
      %v2671 = vld [vmem:[#allocation2 + $0x151] sm:$0xff]
      %v2672 = vld [vmem:[#allocation2 + $0x159] sm:$0xff]
      %v2673 = vld [vmem:[#allocation2 + $0x169] sm:$0xff]
      %v2674 = vld [vmem:[#allocation2 + $0x171] sm:$0xff]
      %v2675 = vld [vmem:[#allocation2 + $0x2] sm:$0xff]
      %v2676 = vld [vmem:[#allocation2 + $0xa] sm:$0xff]
      %v2677 = vld [vmem:[#allocation2 + $0x1a] sm:$0xff]
      %v2678 = vld [vmem:[#allocation2 + $0x22] sm:$0xff]
      %v2679 = vld [vmem:[#allocation2 + $0x32] sm:$0xff]
      %v2680 = vld [vmem:[#allocation2 + $0x3a] sm:$0xff]
      %v2681 = vld [vmem:[#allocation2 + $0x4a] sm:$0xff]
      %v2682 = vld [vmem:[#allocation2 + $0x52] sm:$0xff]
      %v2683 = vld [vmem:[#allocation2 + $0x62] sm:$0xff]
      %v2684 = vld [vmem:[#allocation2 + $0x6a] sm:$0xff]
      %v2685 = vld [vmem:[#allocation2 + $0x7a] sm:$0xff]
      %v2686 = vld [vmem:[#allocation2 + $0x82] sm:$0xff]
      %v2687 = vld [vmem:[#allocation2 + $0x92] sm:$0xff]
      %v2688 = vld [vmem:[#allocation2 + $0x9a] sm:$0xff]
      %v2689 = vld [vmem:[#allocation2 + $0xaa] sm:$0xff]
      %v2690 = vld [vmem:[#allocation2 + $0xb2] sm:$0xff]
      %v2691 = vld [vmem:[#allocation2 + $0xc2] sm:$0xff]
      %v2692 = vld [vmem:[#allocation2 + $0xca] sm:$0xff]
      %v2693 = vld [vmem:[#allocation2 + $0xda] sm:$0xff]
      %v2694 = vld [vmem:[#allocation2 + $0xe2] sm:$0xff]
      %v2695 = vld [vmem:[#allocation2 + $0xf2] sm:$0xff]
      %v2696 = vld [vmem:[#allocation2 + $0xfa] sm:$0xff]
      %v2697 = vld [vmem:[#allocation2 + $0x10a] sm:$0xff]
      %v2698 = vld [vmem:[#allocation2 + $0x112] sm:$0xff]
      %v2699 = vld [vmem:[#allocation2 + $0x122] sm:$0xff]
      %v2700 = vld [vmem:[#allocation2 + $0x12a] sm:$0xff]
      %v2701 = vld [vmem:[#allocation2 + $0x13a] sm:$0xff]
      %v2702 = vld [vmem:[#allocation2 + $0x142] sm:$0xff]
      %v2703 = vld [vmem:[#allocation2 + $0x152] sm:$0xff]
      %v2704 = vld [vmem:[#allocation2 + $0x15a] sm:$0xff]
      %v2705 = vld [vmem:[#allocation2 + $0x16a] sm:$0xff]
      %v2706 = vld [vmem:[#allocation2 + $0x172] sm:$0xff]
      %v2707 = vld [vmem:[%s203] sm:$0xff]
      %v2708 = vld [vmem:[%s203 + $0x8] sm:$0xff]
      %v2709 = vld [vmem:[%s203 + $0x18] sm:$0xff]
      %v2710 = vld [vmem:[%s203 + $0x20] sm:$0xff]
      %v2711 = vld [vmem:[%s203 + $0x30] sm:$0xff]
      %v2712 = vld [vmem:[%s203 + $0x38] sm:$0xff]
      %v2713 = vld [vmem:[%s203 + $0x48] sm:$0xff]
      %v2714 = vld [vmem:[%s203 + $0x50] sm:$0xff]
      %v2715 = vld [vmem:[%s203 + $0x60] sm:$0xff]
      %v2716 = vld [vmem:[%s203 + $0x68] sm:$0xff]
      %v2717 = vld [vmem:[%s203 + $0x78] sm:$0xff]
      %v2718 = vld [vmem:[%s203 + $0x80] sm:$0xff]
      %v2719 = vld [vmem:[%s203 + $0x90] sm:$0xff]
      %v2720 = vld [vmem:[%s203 + $0x98] sm:$0xff]
      %v2721 = vld [vmem:[%s203 + $0xa8] sm:$0xff]
      %v2722 = vld [vmem:[%s203 + $0xb0] sm:$0xff]
      %v2723 = vld [vmem:[%s203 + $0xc0] sm:$0xff]
      %v2724 = vld [vmem:[%s203 + $0xc8] sm:$0xff]
      %v2725 = vld [vmem:[%s203 + $0xd8] sm:$0xff]
      %v2726 = vld [vmem:[%s203 + $0xe0] sm:$0xff]
      %v2727 = vld [vmem:[%s203 + $0xf0] sm:$0xff]
      %v2728 = vld [vmem:[%s203 + $0xf8] sm:$0xff]
      %v2729 = vld [vmem:[%s203 + $0x108] sm:$0xff]
      %v2730 = vld [vmem:[%s203 + $0x110] sm:$0xff]
      %v2731 = vld [vmem:[%s203 + $0x120] sm:$0xff]
      %v2732 = vld [vmem:[%s203 + $0x128] sm:$0xff]
      %v2733 = vld [vmem:[%s203 + $0x138] sm:$0xff]
      %v2734 = vld [vmem:[%s203 + $0x140] sm:$0xff]
      %v2735 = vld [vmem:[%s203 + $0x150] sm:$0xff]
      %v2736 = vld [vmem:[%s203 + $0x158] sm:$0xff]
      %v2737 = vld [vmem:[%s203 + $0x168] sm:$0xff]
      %v2738 = vld [vmem:[%s203 + $0x170] sm:$0xff]
      %v2739 = vld [vmem:[%s203 + $0x1] sm:$0xff]
      %v2740 = vld [vmem:[%s203 + $0x9] sm:$0xff]
      %v2741 = vld [vmem:[%s203 + $0x19] sm:$0xff]
      %v2742 = vld [vmem:[%s203 + $0x21] sm:$0xff]
      %v2743 = vld [vmem:[%s203 + $0x31] sm:$0xff]
      %v2744 = vld [vmem:[%s203 + $0x39] sm:$0xff]
      %v2745 = vld [vmem:[%s203 + $0x49] sm:$0xff]
      %v2746 = vld [vmem:[%s203 + $0x51] sm:$0xff]
      %v2747 = vld [vmem:[%s203 + $0x61] sm:$0xff]
      %v2748 = vld [vmem:[%s203 + $0x69] sm:$0xff]
      %v2749 = vld [vmem:[%s203 + $0x79] sm:$0xff]
      %v2750 = vld [vmem:[%s203 + $0x81] sm:$0xff]
      %v2751 = vld [vmem:[%s203 + $0x91] sm:$0xff]
      %v2752 = vld [vmem:[%s203 + $0x99] sm:$0xff]
      %v2753 = vld [vmem:[%s203 + $0xa9] sm:$0xff]
      %v2754 = vld [vmem:[%s203 + $0xb1] sm:$0xff]
      %v2755 = vld [vmem:[%s203 + $0xc1] sm:$0xff]
      %v2756 = vld [vmem:[%s203 + $0xc9] sm:$0xff]
      %v2757 = vld [vmem:[%s203 + $0xd9] sm:$0xff]
      %v2758 = vld [vmem:[%s203 + $0xe1] sm:$0xff]
      %v2759 = vld [vmem:[%s203 + $0xf1] sm:$0xff]
      %v2760 = vld [vmem:[%s203 + $0xf9] sm:$0xff]
      %v2761 = vld [vmem:[%s203 + $0x109] sm:$0xff]
      %v2762 = vld [vmem:[%s203 + $0x111] sm:$0xff]
      %v2763 = vld [vmem:[%s203 + $0x121] sm:$0xff]
      %v2764 = vld [vmem:[%s203 + $0x129] sm:$0xff]
      %v2765 = vld [vmem:[%s203 + $0x139] sm:$0xff]
      %v2766 = vld [vmem:[%s203 + $0x141] sm:$0xff]
      %v2767 = vld [vmem:[%s203 + $0x151] sm:$0xff]
      %v2768 = vld [vmem:[%s203 + $0x159] sm:$0xff]
      %v2769 = vld [vmem:[%s203 + $0x169] sm:$0xff]
      %v2770 = vld [vmem:[%s203 + $0x171] sm:$0xff]
      %v2771 = vld [vmem:[%s203 + $0x2] sm:$0xff]
      %v2772 = vld [vmem:[%s203 + $0xa] sm:$0xff]
      %v2773 = vld [vmem:[%s203 + $0x1a] sm:$0xff]
      %v2774 = vld [vmem:[%s203 + $0x22] sm:$0xff]
      %v2775 = vld [vmem:[%s203 + $0x32] sm:$0xff]
      %v2776 = vld [vmem:[%s203 + $0x3a] sm:$0xff]
      %v2777 = vld [vmem:[%s203 + $0x4a] sm:$0xff]
      %v2778 = vld [vmem:[%s203 + $0x52] sm:$0xff]
      %v2779 = vld [vmem:[%s203 + $0x62] sm:$0xff]
      %v2780 = vld [vmem:[%s203 + $0x6a] sm:$0xff]
      %v2781 = vld [vmem:[%s203 + $0x7a] sm:$0xff]
      %v2782 = vld [vmem:[%s203 + $0x82] sm:$0xff]
      %v2783 = vld [vmem:[%s203 + $0x92] sm:$0xff]
      %v2784 = vld [vmem:[%s203 + $0x9a] sm:$0xff]
      %v2785 = vld [vmem:[%s203 + $0xaa] sm:$0xff]
      %v2786 = vld [vmem:[%s203 + $0xb2] sm:$0xff]
      %v2787 = vld [vmem:[%s203 + $0xc2] sm:$0xff]
      %v2788 = vld [vmem:[%s203 + $0xca] sm:$0xff]
      %v2789 = vld [vmem:[%s203 + $0xda] sm:$0xff]
      %v2790 = vld [vmem:[%s203 + $0xe2] sm:$0xff]
      %v2791 = vld [vmem:[%s203 + $0xf2] sm:$0xff]
      %v2792 = vld [vmem:[%s203 + $0xfa] sm:$0xff]
      %v2793 = vld [vmem:[%s203 + $0x10a] sm:$0xff]
      %v2794 = vld [vmem:[%s203 + $0x112] sm:$0xff]
      %v2795 = vld [vmem:[%s203 + $0x122] sm:$0xff]
      %v2796 = vld [vmem:[%s203 + $0x12a] sm:$0xff]
      %v2797 = vld [vmem:[%s203 + $0x13a] sm:$0xff]
      %v2798 = vld [vmem:[%s203 + $0x142] sm:$0xff]
      %v2799 = vld [vmem:[%s203 + $0x152] sm:$0xff]
      %v2800 = vld [vmem:[%s203 + $0x15a] sm:$0xff]
      %v2801 = vld [vmem:[%s203 + $0x16a] sm:$0xff]
      %v2802 = vld [vmem:[%s203 + $0x172] sm:$0xff]
      %v2803 = vld [vmem:[%s518] sm:$0xff]
      %v2804 = vld [vmem:[%s518 + $0x8] sm:$0xff]
      %v2805 = vld [vmem:[%s518 + $0x18] sm:$0xff]
      %v2806 = vld [vmem:[%s518 + $0x20] sm:$0xff]
      %v2807 = vld [vmem:[%s518 + $0x30] sm:$0xff]
      %v2808 = vld [vmem:[%s518 + $0x38] sm:$0xff]
      %v2809 = vld [vmem:[%s518 + $0x48] sm:$0xff]
      %v2810 = vld [vmem:[%s518 + $0x50] sm:$0xff]
      %v2811 = vld [vmem:[%s518 + $0x60] sm:$0xff]
      %v2812 = vld [vmem:[%s518 + $0x68] sm:$0xff]
      %v2813 = vld [vmem:[%s518 + $0x78] sm:$0xff]
      %v2814 = vld [vmem:[%s518 + $0x80] sm:$0xff]
      %v2815 = vld [vmem:[%s518 + $0x90] sm:$0xff]
      %v2816 = vld [vmem:[%s518 + $0x98] sm:$0xff]
      %v2817 = vld [vmem:[%s518 + $0xa8] sm:$0xff]
      %v2818 = vld [vmem:[%s518 + $0xb0] sm:$0xff]
      %v2819 = vld [vmem:[%s518 + $0xc0] sm:$0xff]
      %v2820 = vld [vmem:[%s518 + $0xc8] sm:$0xff]
      %v2821 = vld [vmem:[%s518 + $0xd8] sm:$0xff]
      %v2822 = vld [vmem:[%s518 + $0xe0] sm:$0xff]
      %v2823 = vld [vmem:[%s518 + $0xf0] sm:$0xff]
      %v2824 = vld [vmem:[%s518 + $0xf8] sm:$0xff]
      %v2825 = vld [vmem:[%s518 + $0x108] sm:$0xff]
      %v2826 = vld [vmem:[%s518 + $0x110] sm:$0xff]
      %v2827 = vld [vmem:[%s518 + $0x120] sm:$0xff]
      %v2828 = vld [vmem:[%s518 + $0x128] sm:$0xff]
      %v2829 = vld [vmem:[%s518 + $0x138] sm:$0xff]
      %v2830 = vld [vmem:[%s518 + $0x140] sm:$0xff]
      %v2831 = vld [vmem:[%s518 + $0x150] sm:$0xff]
      %v2832 = vld [vmem:[%s518 + $0x158] sm:$0xff]
      %v2833 = vld [vmem:[%s518 + $0x168] sm:$0xff]
      %v2834 = vld [vmem:[%s518 + $0x170] sm:$0xff]
      %v2835 = vld [vmem:[%s518 + $0x1] sm:$0xff]
      %v2836 = vld [vmem:[%s518 + $0x9] sm:$0xff]
      %v2837 = vld [vmem:[%s518 + $0x19] sm:$0xff]
      %v2838 = vld [vmem:[%s518 + $0x21] sm:$0xff]
      %v2839 = vld [vmem:[%s518 + $0x31] sm:$0xff]
      %v2840 = vld [vmem:[%s518 + $0x39] sm:$0xff]
      %v2841 = vld [vmem:[%s518 + $0x49] sm:$0xff]
      %v2842 = vld [vmem:[%s518 + $0x51] sm:$0xff]
      %v2843 = vld [vmem:[%s518 + $0x61] sm:$0xff]
      %v2844 = vld [vmem:[%s518 + $0x69] sm:$0xff]
      %v2845 = vld [vmem:[%s518 + $0x79] sm:$0xff]
      %v2846 = vld [vmem:[%s518 + $0x81] sm:$0xff]
      %v2847 = vld [vmem:[%s518 + $0x91] sm:$0xff]
      %v2848 = vld [vmem:[%s518 + $0x99] sm:$0xff]
      %v2849 = vld [vmem:[%s518 + $0xa9] sm:$0xff]
      %v2850 = vld [vmem:[%s518 + $0xb1] sm:$0xff]
      %v2851 = vld [vmem:[%s518 + $0xc1] sm:$0xff]
      %v2852 = vld [vmem:[%s518 + $0xc9] sm:$0xff]
      %v2853 = vld [vmem:[%s518 + $0xd9] sm:$0xff]
      %v2854 = vld [vmem:[%s518 + $0xe1] sm:$0xff]
      %v2855 = vld [vmem:[%s518 + $0xf1] sm:$0xff]
      %v2856 = vld [vmem:[%s518 + $0xf9] sm:$0xff]
      %v2857 = vld [vmem:[%s518 + $0x109] sm:$0xff]
      %v2858 = vld [vmem:[%s518 + $0x111] sm:$0xff]
      %v2859 = vld [vmem:[%s518 + $0x121] sm:$0xff]
      %v2860 = vld [vmem:[%s518 + $0x129] sm:$0xff]
      %v2861 = vld [vmem:[%s518 + $0x139] sm:$0xff]
      %v2862 = vld [vmem:[%s518 + $0x141] sm:$0xff]
      %v2863 = vld [vmem:[%s518 + $0x151] sm:$0xff]
      %v2864 = vld [vmem:[%s518 + $0x159] sm:$0xff]
      %v2865 = vld [vmem:[%s518 + $0x169] sm:$0xff]
      %v2866 = vld [vmem:[%s518 + $0x171] sm:$0xff]
      %v2867 = vld [vmem:[%s518 + $0x2] sm:$0xff]
      %v2868 = vld [vmem:[%s518 + $0xa] sm:$0xff]
      %v2869 = vld [vmem:[%s518 + $0x1a] sm:$0xff]
      %v2870 = vld [vmem:[%s518 + $0x22] sm:$0xff]
      %v2871 = vld [vmem:[%s518 + $0x32] sm:$0xff]
      %v2872 = vld [vmem:[%s518 + $0x3a] sm:$0xff]
      %v2873 = vld [vmem:[%s518 + $0x4a] sm:$0xff]
      %v2874 = vld [vmem:[%s518 + $0x52] sm:$0xff]
      %v2875 = vld [vmem:[%s518 + $0x62] sm:$0xff]
      %v2876 = vld [vmem:[%s518 + $0x6a] sm:$0xff]
      %v2877 = vld [vmem:[%s518 + $0x7a] sm:$0xff]
      %v2878 = vld [vmem:[%s518 + $0x82] sm:$0xff]
      %v2879 = vld [vmem:[%s518 + $0x92] sm:$0xff]
      %v2880 = vld [vmem:[%s518 + $0x9a] sm:$0xff]
      %v2881 = vld [vmem:[%s518 + $0xaa] sm:$0xff]
      %v2882 = vld [vmem:[%s518 + $0xb2] sm:$0xff]
      %v2883 = vld [vmem:[%s518 + $0xc2] sm:$0xff]
      %v2884 = vld [vmem:[%s518 + $0xca] sm:$0xff]
      %v2885 = vld [vmem:[%s518 + $0xda] sm:$0xff]
      %v2886 = vld [vmem:[%s518 + $0xe2] sm:$0xff]
      %v2887 = vld [vmem:[%s518 + $0xf2] sm:$0xff]
      %v2888 = vld [vmem:[%s518 + $0xfa] sm:$0xff]
      %v2889 = vld [vmem:[%s518 + $0x10a] sm:$0xff]
      %v2890 = vld [vmem:[%s518 + $0x112] sm:$0xff]
      %v2891 = vld [vmem:[%s518 + $0x122] sm:$0xff]
      %v2892 = vld [vmem:[%s518 + $0x12a] sm:$0xff]
      %v2893 = vld [vmem:[%s518 + $0x13a] sm:$0xff]
      %v2894 = vld [vmem:[%s518 + $0x142] sm:$0xff]
      %v2895 = vld [vmem:[%s518 + $0x152] sm:$0xff]
      %v2896 = vld [vmem:[%s518 + $0x15a] sm:$0xff]
      %v2897 = vld [vmem:[%s518 + $0x16a] sm:$0xff]
      %v2898 = vld [vmem:[%s518 + $0x172] sm:$0xff]
      %2931 = vrot.lane.b32.xlu0 %v2643, 4
      %v2932 = vpop.permute.xlu0 %2931
      %2933 = vrot.lane.b32.xlu0 %v2644, 4
      %v2934 = vpop.permute.xlu0 %2933
      %2935 = vrot.lane.b32.xlu0 %v2645, 4
      %v2936 = vpop.permute.xlu0 %2935
      %2937 = vrot.lane.b32.xlu0 %v2646, 4
      %v2938 = vpop.permute.xlu0 %2937
      %2939 = vrot.lane.b32.xlu0 %v2647, 4
      %v2940 = vpop.permute.xlu0 %2939
      %2941 = vrot.lane.b32.xlu0 %v2648, 4
      %v2942 = vpop.permute.xlu0 %2941
      %2943 = vrot.lane.b32.xlu0 %v2649, 4
      %v2944 = vpop.permute.xlu0 %2943
      %2945 = vrot.lane.b32.xlu0 %v2650, 4
      %v2946 = vpop.permute.xlu0 %2945
      %2947 = vrot.lane.b32.xlu0 %v2651, 4
      %v2948 = vpop.permute.xlu0 %2947
      %2949 = vrot.lane.b32.xlu0 %v2652, 4
      %v2950 = vpop.permute.xlu0 %2949
      %2951 = vrot.lane.b32.xlu0 %v2653, 4
      %v2952 = vpop.permute.xlu0 %2951
      %2953 = vrot.lane.b32.xlu0 %v2654, 4
      %v2954 = vpop.permute.xlu0 %2953
      %2955 = vrot.lane.b32.xlu0 %v2655, 4
      %v2956 = vpop.permute.xlu0 %2955
      %2957 = vrot.lane.b32.xlu0 %v2656, 4
      %v2958 = vpop.permute.xlu0 %2957
      %2959 = vrot.lane.b32.xlu0 %v2657, 4
      %v2960 = vpop.permute.xlu0 %2959
      %2961 = vrot.lane.b32.xlu0 %v2658, 4
      %v2962 = vpop.permute.xlu0 %2961
      %2963 = vrot.lane.b32.xlu0 %v2659, 4
      %v2964 = vpop.permute.xlu0 %2963
      %2965 = vrot.lane.b32.xlu0 %v2660, 4
      %v2966 = vpop.permute.xlu0 %2965
      %2967 = vrot.lane.b32.xlu0 %v2661, 4
      %v2968 = vpop.permute.xlu0 %2967
      %2969 = vrot.lane.b32.xlu0 %v2662, 4
      %v2970 = vpop.permute.xlu0 %2969
      %2971 = vrot.lane.b32.xlu0 %v2663, 4
      %v2972 = vpop.permute.xlu0 %2971
      %2973 = vrot.lane.b32.xlu0 %v2664, 4
      %v2974 = vpop.permute.xlu0 %2973
      %2975 = vrot.lane.b32.xlu0 %v2665, 4
      %v2976 = vpop.permute.xlu0 %2975
      %2977 = vrot.lane.b32.xlu0 %v2666, 4
      %v2978 = vpop.permute.xlu0 %2977
      %2979 = vrot.lane.b32.xlu0 %v2667, 4
      %v2980 = vpop.permute.xlu0 %2979
      %2981 = vrot.lane.b32.xlu0 %v2668, 4
      %v2982 = vpop.permute.xlu0 %2981
      %2983 = vrot.lane.b32.xlu0 %v2669, 4
      %v2984 = vpop.permute.xlu0 %2983
      %2985 = vrot.lane.b32.xlu0 %v2670, 4
      %v2986 = vpop.permute.xlu0 %2985
      %2987 = vrot.lane.b32.xlu0 %v2671, 4
      %v2988 = vpop.permute.xlu0 %2987
      %2989 = vrot.lane.b32.xlu0 %v2672, 4
      %v2990 = vpop.permute.xlu0 %2989
      %2991 = vrot.lane.b32.xlu0 %v2673, 4
      %v2992 = vpop.permute.xlu0 %2991
      %2993 = vrot.lane.b32.xlu0 %v2674, 4
      %v2994 = vpop.permute.xlu0 %2993
      %3059 = vrot.lane.b32.xlu0 %v2675, 8
      %v3060 = vpop.permute.xlu0 %3059
      %3061 = vrot.lane.b32.xlu0 %v2676, 8
      %v3062 = vpop.permute.xlu0 %3061
      %3063 = vrot.lane.b32.xlu0 %v2677, 8
      %v3064 = vpop.permute.xlu0 %3063
      %3065 = vrot.lane.b32.xlu0 %v2678, 8
      %v3066 = vpop.permute.xlu0 %3065
      %3067 = vrot.lane.b32.xlu0 %v2679, 8
      %v3068 = vpop.permute.xlu0 %3067
      %3069 = vrot.lane.b32.xlu0 %v2680, 8
      %v3070 = vpop.permute.xlu0 %3069
      %3071 = vrot.lane.b32.xlu0 %v2681, 8
      %v3072 = vpop.permute.xlu0 %3071
      %3073 = vrot.lane.b32.xlu0 %v2682, 8
      %v3074 = vpop.permute.xlu0 %3073
      %3075 = vrot.lane.b32.xlu0 %v2683, 8
      %v3076 = vpop.permute.xlu0 %3075
      %3077 = vrot.lane.b32.xlu0 %v2684, 8
      %v3078 = vpop.permute.xlu0 %3077
      %3079 = vrot.lane.b32.xlu0 %v2685, 8
      %v3080 = vpop.permute.xlu0 %3079
      %3081 = vrot.lane.b32.xlu0 %v2686, 8
      %v3082 = vpop.permute.xlu0 %3081
      %3083 = vrot.lane.b32.xlu0 %v2687, 8
      %v3084 = vpop.permute.xlu0 %3083
      %3085 = vrot.lane.b32.xlu0 %v2688, 8
      %v3086 = vpop.permute.xlu0 %3085
      %3087 = vrot.lane.b32.xlu0 %v2689, 8
      %v3088 = vpop.permute.xlu0 %3087
      %3089 = vrot.lane.b32.xlu0 %v2690, 8
      %v3090 = vpop.permute.xlu0 %3089
      %3091 = vrot.lane.b32.xlu0 %v2691, 8
      %v3092 = vpop.permute.xlu0 %3091
      %3093 = vrot.lane.b32.xlu0 %v2692, 8
      %v3094 = vpop.permute.xlu0 %3093
      %3095 = vrot.lane.b32.xlu0 %v2693, 8
      %v3096 = vpop.permute.xlu0 %3095
      %3097 = vrot.lane.b32.xlu0 %v2694, 8
      %v3098 = vpop.permute.xlu0 %3097
      %3099 = vrot.lane.b32.xlu0 %v2695, 8
      %v3100 = vpop.permute.xlu0 %3099
      %3101 = vrot.lane.b32.xlu0 %v2696, 8
      %v3102 = vpop.permute.xlu0 %3101
      %3103 = vrot.lane.b32.xlu0 %v2697, 8
      %v3104 = vpop.permute.xlu0 %3103
      %3105 = vrot.lane.b32.xlu0 %v2698, 8
      %v3106 = vpop.permute.xlu0 %3105
      %3107 = vrot.lane.b32.xlu0 %v2699, 8
      %v3108 = vpop.permute.xlu0 %3107
      %3109 = vrot.lane.b32.xlu0 %v2700, 8
      %v3110 = vpop.permute.xlu0 %3109
      %3111 = vrot.lane.b32.xlu0 %v2701, 8
      %v3112 = vpop.permute.xlu0 %3111
      %3113 = vrot.lane.b32.xlu0 %v2702, 8
      %v3114 = vpop.permute.xlu0 %3113
      %3115 = vrot.lane.b32.xlu0 %v2703, 8
      %v3116 = vpop.permute.xlu0 %3115
      %3117 = vrot.lane.b32.xlu0 %v2704, 8
      %v3118 = vpop.permute.xlu0 %3117
      %3119 = vrot.lane.b32.xlu0 %v2705, 8
      %v3120 = vpop.permute.xlu0 %3119
      %3121 = vrot.lane.b32.xlu0 %v2706, 8
      %v3122 = vpop.permute.xlu0 %3121
      %3187 = vrot.lane.b32.xlu0 %v2707, 12
      %v3188 = vpop.permute.xlu0 %3187
      %3189 = vrot.lane.b32.xlu0 %v2708, 12
      %v3190 = vpop.permute.xlu0 %3189
      %3191 = vrot.lane.b32.xlu0 %v2709, 12
      %v3192 = vpop.permute.xlu0 %3191
      %3193 = vrot.lane.b32.xlu0 %v2710, 12
      %v3194 = vpop.permute.xlu0 %3193
      %3195 = vrot.lane.b32.xlu0 %v2711, 12
      %v3196 = vpop.permute.xlu0 %3195
      %3197 = vrot.lane.b32.xlu0 %v2712, 12
      %v3198 = vpop.permute.xlu0 %3197
      %3199 = vrot.lane.b32.xlu0 %v2713, 12
      %v3200 = vpop.permute.xlu0 %3199
      %3201 = vrot.lane.b32.xlu0 %v2714, 12
      %v3202 = vpop.permute.xlu0 %3201
      %3203 = vrot.lane.b32.xlu0 %v2715, 12
      %v3204 = vpop.permute.xlu0 %3203
      %3205 = vrot.lane.b32.xlu0 %v2716, 12
      %v3206 = vpop.permute.xlu0 %3205
      %3207 = vrot.lane.b32.xlu0 %v2717, 12
      %v3208 = vpop.permute.xlu0 %3207
      %3209 = vrot.lane.b32.xlu0 %v2718, 12
      %v3210 = vpop.permute.xlu0 %3209
      %3211 = vrot.lane.b32.xlu0 %v2719, 12
      %v3212 = vpop.permute.xlu0 %3211
      %3213 = vrot.lane.b32.xlu0 %v2720, 12
      %v3214 = vpop.permute.xlu0 %3213
      %3215 = vrot.lane.b32.xlu0 %v2721, 12
      %v3216 = vpop.permute.xlu0 %3215
      %3217 = vrot.lane.b32.xlu0 %v2722, 12
      %v3218 = vpop.permute.xlu0 %3217
      %3219 = vrot.lane.b32.xlu0 %v2723, 12
      %v3220 = vpop.permute.xlu0 %3219
      %3221 = vrot.lane.b32.xlu0 %v2724, 12
      %v3222 = vpop.permute.xlu0 %3221
      %3223 = vrot.lane.b32.xlu0 %v2725, 12
      %v3224 = vpop.permute.xlu0 %3223
      %3225 = vrot.lane.b32.xlu0 %v2726, 12
      %v3226 = vpop.permute.xlu0 %3225
      %3227 = vrot.lane.b32.xlu0 %v2727, 12
      %v3228 = vpop.permute.xlu0 %3227
      %3229 = vrot.lane.b32.xlu0 %v2728, 12
      %v3230 = vpop.permute.xlu0 %3229
      %3231 = vrot.lane.b32.xlu0 %v2729, 12
      %v3232 = vpop.permute.xlu0 %3231
      %3233 = vrot.lane.b32.xlu0 %v2730, 12
      %v3234 = vpop.permute.xlu0 %3233
      %3235 = vrot.lane.b32.xlu0 %v2731, 12
      %v3236 = vpop.permute.xlu0 %3235
      %3237 = vrot.lane.b32.xlu0 %v2732, 12
      %v3238 = vpop.permute.xlu0 %3237
      %3239 = vrot.lane.b32.xlu0 %v2733, 12
      %v3240 = vpop.permute.xlu0 %3239
      %3241 = vrot.lane.b32.xlu0 %v2734, 12
      %v3242 = vpop.permute.xlu0 %3241
      %3243 = vrot.lane.b32.xlu0 %v2735, 12
      %v3244 = vpop.permute.xlu0 %3243
      %3245 = vrot.lane.b32.xlu0 %v2736, 12
      %v3246 = vpop.permute.xlu0 %3245
      %3247 = vrot.lane.b32.xlu0 %v2737, 12
      %v3248 = vpop.permute.xlu0 %3247
      %3249 = vrot.lane.b32.xlu0 %v2738, 12
      %v3250 = vpop.permute.xlu0 %3249
      %3315 = vrot.lane.b32.xlu0 %v2739, 16
      %v3316 = vpop.permute.xlu0 %3315
      %3317 = vrot.lane.b32.xlu0 %v2740, 16
      %v3318 = vpop.permute.xlu0 %3317
      %3319 = vrot.lane.b32.xlu0 %v2741, 16
      %v3320 = vpop.permute.xlu0 %3319
      %3321 = vrot.lane.b32.xlu0 %v2742, 16
      %v3322 = vpop.permute.xlu0 %3321
      %3323 = vrot.lane.b32.xlu0 %v2743, 16
      %v3324 = vpop.permute.xlu0 %3323
      %3325 = vrot.lane.b32.xlu0 %v2744, 16
      %v3326 = vpop.permute.xlu0 %3325
      %3327 = vrot.lane.b32.xlu0 %v2745, 16
      %v3328 = vpop.permute.xlu0 %3327
      %3329 = vrot.lane.b32.xlu0 %v2746, 16
      %v3330 = vpop.permute.xlu0 %3329
      %3331 = vrot.lane.b32.xlu0 %v2747, 16
      %v3332 = vpop.permute.xlu0 %3331
      %3333 = vrot.lane.b32.xlu0 %v2748, 16
      %v3334 = vpop.permute.xlu0 %3333
      %3335 = vrot.lane.b32.xlu0 %v2749, 16
      %v3336 = vpop.permute.xlu0 %3335
      %3337 = vrot.lane.b32.xlu0 %v2750, 16
      %v3338 = vpop.permute.xlu0 %3337
      %3339 = vrot.lane.b32.xlu0 %v2751, 16
      %v3340 = vpop.permute.xlu0 %3339
      %3341 = vrot.lane.b32.xlu0 %v2752, 16
      %v3342 = vpop.permute.xlu0 %3341
      %3343 = vrot.lane.b32.xlu0 %v2753, 16
      %v3344 = vpop.permute.xlu0 %3343
      %3345 = vrot.lane.b32.xlu0 %v2754, 16
      %v3346 = vpop.permute.xlu0 %3345
      %3347 = vrot.lane.b32.xlu0 %v2755, 16
      %v3348 = vpop.permute.xlu0 %3347
      %3349 = vrot.lane.b32.xlu0 %v2756, 16
      %v3350 = vpop.permute.xlu0 %3349
      %3351 = vrot.lane.b32.xlu0 %v2757, 16
      %v3352 = vpop.permute.xlu0 %3351
      %3353 = vrot.lane.b32.xlu0 %v2758, 16
      %v3354 = vpop.permute.xlu0 %3353
      %3355 = vrot.lane.b32.xlu0 %v2759, 16
      %v3356 = vpop.permute.xlu0 %3355
      %3357 = vrot.lane.b32.xlu0 %v2760, 16
      %v3358 = vpop.permute.xlu0 %3357
      %3359 = vrot.lane.b32.xlu0 %v2761, 16
      %v3360 = vpop.permute.xlu0 %3359
      %3361 = vrot.lane.b32.xlu0 %v2762, 16
      %v3362 = vpop.permute.xlu0 %3361
      %3363 = vrot.lane.b32.xlu0 %v2763, 16
      %v3364 = vpop.permute.xlu0 %3363
      %3365 = vrot.lane.b32.xlu0 %v2764, 16
      %v3366 = vpop.permute.xlu0 %3365
      %3367 = vrot.lane.b32.xlu0 %v2765, 16
      %v3368 = vpop.permute.xlu0 %3367
      %3369 = vrot.lane.b32.xlu0 %v2766, 16
      %v3370 = vpop.permute.xlu0 %3369
      %3371 = vrot.lane.b32.xlu0 %v2767, 16
      %v3372 = vpop.permute.xlu0 %3371
      %3373 = vrot.lane.b32.xlu0 %v2768, 16
      %v3374 = vpop.permute.xlu0 %3373
      %3375 = vrot.lane.b32.xlu0 %v2769, 16
      %v3376 = vpop.permute.xlu0 %3375
      %3377 = vrot.lane.b32.xlu0 %v2770, 16
      %v3378 = vpop.permute.xlu0 %3377
      %3443 = vrot.lane.b32.xlu0 %v2771, 20
      %v3444 = vpop.permute.xlu0 %3443
      %3445 = vrot.lane.b32.xlu0 %v2772, 20
      %v3446 = vpop.permute.xlu0 %3445
      %3447 = vrot.lane.b32.xlu0 %v2773, 20
      %v3448 = vpop.permute.xlu0 %3447
      %3449 = vrot.lane.b32.xlu0 %v2774, 20
      %v3450 = vpop.permute.xlu0 %3449
      %3451 = vrot.lane.b32.xlu0 %v2775, 20
      %v3452 = vpop.permute.xlu0 %3451
      %3453 = vrot.lane.b32.xlu0 %v2776, 20
      %v3454 = vpop.permute.xlu0 %3453
      %3455 = vrot.lane.b32.xlu0 %v2777, 20
      %v3456 = vpop.permute.xlu0 %3455
      %3457 = vrot.lane.b32.xlu0 %v2778, 20
      %v3458 = vpop.permute.xlu0 %3457
      %3459 = vrot.lane.b32.xlu0 %v2779, 20
      %v3460 = vpop.permute.xlu0 %3459
      %3461 = vrot.lane.b32.xlu0 %v2780, 20
      %v3462 = vpop.permute.xlu0 %3461
      %3463 = vrot.lane.b32.xlu0 %v2781, 20
      %v3464 = vpop.permute.xlu0 %3463
      %3465 = vrot.lane.b32.xlu0 %v2782, 20
      %v3466 = vpop.permute.xlu0 %3465
      %3467 = vrot.lane.b32.xlu0 %v2783, 20
      %v3468 = vpop.permute.xlu0 %3467
      %3469 = vrot.lane.b32.xlu0 %v2784, 20
      %v3470 = vpop.permute.xlu0 %3469
      %3471 = vrot.lane.b32.xlu0 %v2785, 20
      %v3472 = vpop.permute.xlu0 %3471
      %3473 = vrot.lane.b32.xlu0 %v2786, 20
      %v3474 = vpop.permute.xlu0 %3473
      %3475 = vrot.lane.b32.xlu0 %v2787, 20
      %v3476 = vpop.permute.xlu0 %3475
      %3477 = vrot.lane.b32.xlu0 %v2788, 20
      %v3478 = vpop.permute.xlu0 %3477
      %3479 = vrot.lane.b32.xlu0 %v2789, 20
      %v3480 = vpop.permute.xlu0 %3479
      %3481 = vrot.lane.b32.xlu0 %v2790, 20
      %v3482 = vpop.permute.xlu0 %3481
      %3483 = vrot.lane.b32.xlu0 %v2791, 20
      %v3484 = vpop.permute.xlu0 %3483
      %3485 = vrot.lane.b32.xlu0 %v2792, 20
      %v3486 = vpop.permute.xlu0 %3485
      %3487 = vrot.lane.b32.xlu0 %v2793, 20
      %v3488 = vpop.permute.xlu0 %3487
      %3489 = vrot.lane.b32.xlu0 %v2794, 20
      %v3490 = vpop.permute.xlu0 %3489
      %3491 = vrot.lane.b32.xlu0 %v2795, 20
      %v3492 = vpop.permute.xlu0 %3491
      %3493 = vrot.lane.b32.xlu0 %v2796, 20
      %v3494 = vpop.permute.xlu0 %3493
      %3495 = vrot.lane.b32.xlu0 %v2797, 20
      %v3496 = vpop.permute.xlu0 %3495
      %3497 = vrot.lane.b32.xlu0 %v2798, 20
      %v3498 = vpop.permute.xlu0 %3497
      %3499 = vrot.lane.b32.xlu0 %v2799, 20
      %v3500 = vpop.permute.xlu0 %3499
      %3501 = vrot.lane.b32.xlu0 %v2800, 20
      %v3502 = vpop.permute.xlu0 %3501
      %3503 = vrot.lane.b32.xlu0 %v2801, 20
      %v3504 = vpop.permute.xlu0 %3503
      %3505 = vrot.lane.b32.xlu0 %v2802, 20
      %v3506 = vpop.permute.xlu0 %3505
      %3571 = vrot.lane.b32.xlu0 %v2803, 24
      %v3572 = vpop.permute.xlu0 %3571
      %3573 = vrot.lane.b32.xlu0 %v2804, 24
      %v3574 = vpop.permute.xlu0 %3573
      %3575 = vrot.lane.b32.xlu0 %v2805, 24
      %v3576 = vpop.permute.xlu0 %3575
      %3577 = vrot.lane.b32.xlu0 %v2806, 24
      %v3578 = vpop.permute.xlu0 %3577
      %3579 = vrot.lane.b32.xlu0 %v2807, 24
      %v3580 = vpop.permute.xlu0 %3579
      %3581 = vrot.lane.b32.xlu0 %v2808, 24
      %v3582 = vpop.permute.xlu0 %3581
      %3583 = vrot.lane.b32.xlu0 %v2809, 24
      %v3584 = vpop.permute.xlu0 %3583
      %3585 = vrot.lane.b32.xlu0 %v2810, 24
      %v3586 = vpop.permute.xlu0 %3585
      %3587 = vrot.lane.b32.xlu0 %v2811, 24
      %v3588 = vpop.permute.xlu0 %3587
      %3589 = vrot.lane.b32.xlu0 %v2812, 24
      %v3590 = vpop.permute.xlu0 %3589
      %3591 = vrot.lane.b32.xlu0 %v2813, 24
      %v3592 = vpop.permute.xlu0 %3591
      %3593 = vrot.lane.b32.xlu0 %v2814, 24
      %v3594 = vpop.permute.xlu0 %3593
      %3595 = vrot.lane.b32.xlu0 %v2815, 24
      %v3596 = vpop.permute.xlu0 %3595
      %3597 = vrot.lane.b32.xlu0 %v2816, 24
      %v3598 = vpop.permute.xlu0 %3597
      %3599 = vrot.lane.b32.xlu0 %v2817, 24
      %v3600 = vpop.permute.xlu0 %3599
      %3601 = vrot.lane.b32.xlu0 %v2818, 24
      %v3602 = vpop.permute.xlu0 %3601
      %3603 = vrot.lane.b32.xlu0 %v2819, 24
      %v3604 = vpop.permute.xlu0 %3603
      %3605 = vrot.lane.b32.xlu0 %v2820, 24
      %v3606 = vpop.permute.xlu0 %3605
      %3607 = vrot.lane.b32.xlu0 %v2821, 24
      %v3608 = vpop.permute.xlu0 %3607
      %3609 = vrot.lane.b32.xlu0 %v2822, 24
      %v3610 = vpop.permute.xlu0 %3609
      %3611 = vrot.lane.b32.xlu0 %v2823, 24
      %v3612 = vpop.permute.xlu0 %3611
      %3613 = vrot.lane.b32.xlu0 %v2824, 24
      %v3614 = vpop.permute.xlu0 %3613
      %3615 = vrot.lane.b32.xlu0 %v2825, 24
      %v3616 = vpop.permute.xlu0 %3615
      %3617 = vrot.lane.b32.xlu0 %v2826, 24
      %v3618 = vpop.permute.xlu0 %3617
      %3619 = vrot.lane.b32.xlu0 %v2827, 24
      %v3620 = vpop.permute.xlu0 %3619
      %3621 = vrot.lane.b32.xlu0 %v2828, 24
      %v3622 = vpop.permute.xlu0 %3621
      %3623 = vrot.lane.b32.xlu0 %v2829, 24
      %v3624 = vpop.permute.xlu0 %3623
      %3625 = vrot.lane.b32.xlu0 %v2830, 24
      %v3626 = vpop.permute.xlu0 %3625
      %3627 = vrot.lane.b32.xlu0 %v2831, 24
      %v3628 = vpop.permute.xlu0 %3627
      %3629 = vrot.lane.b32.xlu0 %v2832, 24
      %v3630 = vpop.permute.xlu0 %3629
      %3631 = vrot.lane.b32.xlu0 %v2833, 24
      %v3632 = vpop.permute.xlu0 %3631
      %3633 = vrot.lane.b32.xlu0 %v2834, 24
      %v3634 = vpop.permute.xlu0 %3633
      %3699 = vrot.lane.b32.xlu0 %v2835, 28
      %v3700 = vpop.permute.xlu0 %3699
      %3701 = vrot.lane.b32.xlu0 %v2836, 28
      %v3702 = vpop.permute.xlu0 %3701
      %3703 = vrot.lane.b32.xlu0 %v2837, 28
      %v3704 = vpop.permute.xlu0 %3703
      %3705 = vrot.lane.b32.xlu0 %v2838, 28
      %v3706 = vpop.permute.xlu0 %3705
      %3707 = vrot.lane.b32.xlu0 %v2839, 28
      %v3708 = vpop.permute.xlu0 %3707
      %3709 = vrot.lane.b32.xlu0 %v2840, 28
      %v3710 = vpop.permute.xlu0 %3709
      %3711 = vrot.lane.b32.xlu0 %v2841, 28
      %v3712 = vpop.permute.xlu0 %3711
      %3713 = vrot.lane.b32.xlu0 %v2842, 28
      %v3714 = vpop.permute.xlu0 %3713
      %3715 = vrot.lane.b32.xlu0 %v2843, 28
      %v3716 = vpop.permute.xlu0 %3715
      %3717 = vrot.lane.b32.xlu0 %v2844, 28
      %v3718 = vpop.permute.xlu0 %3717
      %3719 = vrot.lane.b32.xlu0 %v2845, 28
      %v3720 = vpop.permute.xlu0 %3719
      %3721 = vrot.lane.b32.xlu0 %v2846, 28
      %v3722 = vpop.permute.xlu0 %3721
      %3723 = vrot.lane.b32.xlu0 %v2847, 28
      %v3724 = vpop.permute.xlu0 %3723
      %3725 = vrot.lane.b32.xlu0 %v2848, 28
      %v3726 = vpop.permute.xlu0 %3725
      %3727 = vrot.lane.b32.xlu0 %v2849, 28
      %v3728 = vpop.permute.xlu0 %3727
      %3729 = vrot.lane.b32.xlu0 %v2850, 28
      %v3730 = vpop.permute.xlu0 %3729
      %3731 = vrot.lane.b32.xlu0 %v2851, 28
      %v3732 = vpop.permute.xlu0 %3731
      %3733 = vrot.lane.b32.xlu0 %v2852, 28
      %v3734 = vpop.permute.xlu0 %3733
      %3735 = vrot.lane.b32.xlu0 %v2853, 28
      %v3736 = vpop.permute.xlu0 %3735
      %3737 = vrot.lane.b32.xlu0 %v2854, 28
      %v3738 = vpop.permute.xlu0 %3737
      %3739 = vrot.lane.b32.xlu0 %v2855, 28
      %v3740 = vpop.permute.xlu0 %3739
      %3741 = vrot.lane.b32.xlu0 %v2856, 28
      %v3742 = vpop.permute.xlu0 %3741
      %3743 = vrot.lane.b32.xlu0 %v2857, 28
      %v3744 = vpop.permute.xlu0 %3743
      %3745 = vrot.lane.b32.xlu0 %v2858, 28
      %v3746 = vpop.permute.xlu0 %3745
      %3747 = vrot.lane.b32.xlu0 %v2859, 28
      %v3748 = vpop.permute.xlu0 %3747
      %3749 = vrot.lane.b32.xlu0 %v2860, 28
      %v3750 = vpop.permute.xlu0 %3749
      %3751 = vrot.lane.b32.xlu0 %v2861, 28
      %v3752 = vpop.permute.xlu0 %3751
      %3753 = vrot.lane.b32.xlu0 %v2862, 28
      %v3754 = vpop.permute.xlu0 %3753
      %3755 = vrot.lane.b32.xlu0 %v2863, 28
      %v3756 = vpop.permute.xlu0 %3755
      %3757 = vrot.lane.b32.xlu0 %v2864, 28
      %v3758 = vpop.permute.xlu0 %3757
      %3759 = vrot.lane.b32.xlu0 %v2865, 28
      %v3760 = vpop.permute.xlu0 %3759
      %3761 = vrot.lane.b32.xlu0 %v2866, 28
      %v3762 = vpop.permute.xlu0 %3761
      %3827 = vrot.lane.b32.xlu0 %v2867, 32
      %v3828 = vpop.permute.xlu0 %3827
      %3829 = vrot.lane.b32.xlu0 %v2868, 32
      %v3830 = vpop.permute.xlu0 %3829
      %3831 = vrot.lane.b32.xlu0 %v2869, 32
      %v3832 = vpop.permute.xlu0 %3831
      %3833 = vrot.lane.b32.xlu0 %v2870, 32
      %v3834 = vpop.permute.xlu0 %3833
      %3835 = vrot.lane.b32.xlu0 %v2871, 32
      %v3836 = vpop.permute.xlu0 %3835
      %3837 = vrot.lane.b32.xlu0 %v2872, 32
      %v3838 = vpop.permute.xlu0 %3837
      %3839 = vrot.lane.b32.xlu0 %v2873, 32
      %v3840 = vpop.permute.xlu0 %3839
      %3841 = vrot.lane.b32.xlu0 %v2874, 32
      %v3842 = vpop.permute.xlu0 %3841
      %3843 = vrot.lane.b32.xlu0 %v2875, 32
      %v3844 = vpop.permute.xlu0 %3843
      %3845 = vrot.lane.b32.xlu0 %v2876, 32
      %v3846 = vpop.permute.xlu0 %3845
      %3847 = vrot.lane.b32.xlu0 %v2877, 32
      %v3848 = vpop.permute.xlu0 %3847
      %3849 = vrot.lane.b32.xlu0 %v2878, 32
      %v3850 = vpop.permute.xlu0 %3849
      %3851 = vrot.lane.b32.xlu0 %v2879, 32
      %v3852 = vpop.permute.xlu0 %3851
      %3853 = vrot.lane.b32.xlu0 %v2880, 32
      %v3854 = vpop.permute.xlu0 %3853
      %3855 = vrot.lane.b32.xlu0 %v2881, 32
      %v3856 = vpop.permute.xlu0 %3855
      %3857 = vrot.lane.b32.xlu0 %v2882, 32
      %v3858 = vpop.permute.xlu0 %3857
      %3859 = vrot.lane.b32.xlu0 %v2883, 32
      %v3860 = vpop.permute.xlu0 %3859
      %3861 = vrot.lane.b32.xlu0 %v2884, 32
      %v3862 = vpop.permute.xlu0 %3861
      %3863 = vrot.lane.b32.xlu0 %v2885, 32
      %v3864 = vpop.permute.xlu0 %3863
      %3865 = vrot.lane.b32.xlu0 %v2886, 32
      %v3866 = vpop.permute.xlu0 %3865
      %3867 = vrot.lane.b32.xlu0 %v2887, 32
      %v3868 = vpop.permute.xlu0 %3867
      %3869 = vrot.lane.b32.xlu0 %v2888, 32
      %v3870 = vpop.permute.xlu0 %3869
      %3871 = vrot.lane.b32.xlu0 %v2889, 32
      %v3872 = vpop.permute.xlu0 %3871
      %3873 = vrot.lane.b32.xlu0 %v2890, 32
      %v3874 = vpop.permute.xlu0 %3873
      %3875 = vrot.lane.b32.xlu0 %v2891, 32
      %v3876 = vpop.permute.xlu0 %3875
      %3877 = vrot.lane.b32.xlu0 %v2892, 32
      %v3878 = vpop.permute.xlu0 %3877
      %3879 = vrot.lane.b32.xlu0 %v2893, 32
      %v3880 = vpop.permute.xlu0 %3879
      %3881 = vrot.lane.b32.xlu0 %v2894, 32
      %v3882 = vpop.permute.xlu0 %3881
      %3883 = vrot.lane.b32.xlu0 %v2895, 32
      %v3884 = vpop.permute.xlu0 %3883
      %3885 = vrot.lane.b32.xlu0 %v2896, 32
      %v3886 = vpop.permute.xlu0 %3885
      %3887 = vrot.lane.b32.xlu0 %v2897, 32
      %v3888 = vpop.permute.xlu0 %3887
      %3889 = vrot.lane.b32.xlu0 %v2898, 32
      %v3890 = vpop.permute.xlu0 %3889
      %v3923 = vsel %vm204, %v2611, %v2932
      %v3924 = vsel %vm204, %v2612, %v2934
      %v3925 = vsel %vm204, %v2613, %v2936
      %v3926 = vsel %vm204, %v2614, %v2938
      %v3927 = vsel %vm204, %v2615, %v2940
      %v3928 = vsel %vm204, %v2616, %v2942
      %v3929 = vsel %vm204, %v2617, %v2944
      %v3930 = vsel %vm204, %v2618, %v2946
      %v3931 = vsel %vm204, %v2619, %v2948
      %v3932 = vsel %vm204, %v2620, %v2950
      %v3933 = vsel %vm204, %v2621, %v2952
      %v3934 = vsel %vm204, %v2622, %v2954
      %v3935 = vsel %vm204, %v2623, %v2956
      %v3936 = vsel %vm204, %v2624, %v2958
      %v3937 = vsel %vm204, %v2625, %v2960
      %v3938 = vsel %vm204, %v2626, %v2962
      %v3939 = vsel %vm204, %v2627, %v2964
      %v3940 = vsel %vm204, %v2628, %v2966
      %v3941 = vsel %vm204, %v2629, %v2968
      %v3942 = vsel %vm204, %v2630, %v2970
      %v3943 = vsel %vm204, %v2631, %v2972
      %v3944 = vsel %vm204, %v2632, %v2974
      %v3945 = vsel %vm204, %v2633, %v2976
      %v3946 = vsel %vm204, %v2634, %v2978
      %v3947 = vsel %vm204, %v2635, %v2980
      %v3948 = vsel %vm204, %v2636, %v2982
      %v3949 = vsel %vm204, %v2637, %v2984
      %v3950 = vsel %vm204, %v2638, %v2986
      %v3951 = vsel %vm204, %v2639, %v2988
      %v3952 = vsel %vm204, %v2640, %v2990
      %v3953 = vsel %vm204, %v2641, %v2992
      %v3954 = vsel %vm204, %v2642, %v2994
      %v3955 = vsel %vm1671, %v3923, %v3060
      %v3956 = vsel %vm1671, %v3924, %v3062
      %v3957 = vsel %vm1671, %v3925, %v3064
      %v3958 = vsel %vm1671, %v3926, %v3066
      %v3959 = vsel %vm1671, %v3927, %v3068
      %v3960 = vsel %vm1671, %v3928, %v3070
      %v3961 = vsel %vm1671, %v3929, %v3072
      %v3962 = vsel %vm1671, %v3930, %v3074
      %v3963 = vsel %vm1671, %v3931, %v3076
      %v3964 = vsel %vm1671, %v3932, %v3078
      %v3965 = vsel %vm1671, %v3933, %v3080
      %v3966 = vsel %vm1671, %v3934, %v3082
      %v3967 = vsel %vm1671, %v3935, %v3084
      %v3968 = vsel %vm1671, %v3936, %v3086
      %v3969 = vsel %vm1671, %v3937, %v3088
      %v3970 = vsel %vm1671, %v3938, %v3090
      %v3971 = vsel %vm1671, %v3939, %v3092
      %v3972 = vsel %vm1671, %v3940, %v3094
      %v3973 = vsel %vm1671, %v3941, %v3096
      %v3974 = vsel %vm1671, %v3942, %v3098
      %v3975 = vsel %vm1671, %v3943, %v3100
      %v3976 = vsel %vm1671, %v3944, %v3102
      %v3977 = vsel %vm1671, %v3945, %v3104
      %v3978 = vsel %vm1671, %v3946, %v3106
      %v3979 = vsel %vm1671, %v3947, %v3108
      %v3980 = vsel %vm1671, %v3948, %v3110
      %v3981 = vsel %vm1671, %v3949, %v3112
      %v3982 = vsel %vm1671, %v3950, %v3114
      %v3983 = vsel %vm1671, %v3951, %v3116
      %v3984 = vsel %vm1671, %v3952, %v3118
      %v3985 = vsel %vm1671, %v3953, %v3120
      %v3986 = vsel %vm1671, %v3954, %v3122
      %v3987 = vsel %vm1704, %v3955, %v3188
      %v3988 = vsel %vm1704, %v3956, %v3190
      %v3989 = vsel %vm1704, %v3957, %v3192
      %v3990 = vsel %vm1704, %v3958, %v3194
      %v3991 = vsel %vm1704, %v3959, %v3196
      %v3992 = vsel %vm1704, %v3960, %v3198
      %v3993 = vsel %vm1704, %v3961, %v3200
      %v3994 = vsel %vm1704, %v3962, %v3202
      %v3995 = vsel %vm1704, %v3963, %v3204
      %v3996 = vsel %vm1704, %v3964, %v3206
      %v3997 = vsel %vm1704, %v3965, %v3208
      %v3998 = vsel %vm1704, %v3966, %v3210
      %v3999 = vsel %vm1704, %v3967, %v3212
      %v4000 = vsel %vm1704, %v3968, %v3214
      %v4001 = vsel %vm1704, %v3969, %v3216
      %v4002 = vsel %vm1704, %v3970, %v3218
      %v4003 = vsel %vm1704, %v3971, %v3220
      %v4004 = vsel %vm1704, %v3972, %v3222
      %v4005 = vsel %vm1704, %v3973, %v3224
      %v4006 = vsel %vm1704, %v3974, %v3226
      %v4007 = vsel %vm1704, %v3975, %v3228
      %v4008 = vsel %vm1704, %v3976, %v3230
      %v4009 = vsel %vm1704, %v3977, %v3232
      %v4010 = vsel %vm1704, %v3978, %v3234
      %v4011 = vsel %vm1704, %v3979, %v3236
      %v4012 = vsel %vm1704, %v3980, %v3238
      %v4013 = vsel %vm1704, %v3981, %v3240
      %v4014 = vsel %vm1704, %v3982, %v3242
      %v4015 = vsel %vm1704, %v3983, %v3244
      %v4016 = vsel %vm1704, %v3984, %v3246
      %v4017 = vsel %vm1704, %v3985, %v3248
      %v4018 = vsel %vm1704, %v3986, %v3250
      %v4019 = vsel %vm1737, %v3987, %v3316
      %v4020 = vsel %vm1737, %v3988, %v3318
      %v4021 = vsel %vm1737, %v3989, %v3320
      %v4022 = vsel %vm1737, %v3990, %v3322
      %v4023 = vsel %vm1737, %v3991, %v3324
      %v4024 = vsel %vm1737, %v3992, %v3326
      %v4025 = vsel %vm1737, %v3993, %v3328
      %v4026 = vsel %vm1737, %v3994, %v3330
      %v4027 = vsel %vm1737, %v3995, %v3332
      %v4028 = vsel %vm1737, %v3996, %v3334
      %v4029 = vsel %vm1737, %v3997, %v3336
      %v4030 = vsel %vm1737, %v3998, %v3338
      %v4031 = vsel %vm1737, %v3999, %v3340
      %v4032 = vsel %vm1737, %v4000, %v3342
      %v4033 = vsel %vm1737, %v4001, %v3344
      %v4034 = vsel %vm1737, %v4002, %v3346
      %v4035 = vsel %vm1737, %v4003, %v3348
      %v4036 = vsel %vm1737, %v4004, %v3350
      %v4037 = vsel %vm1737, %v4005, %v3352
      %v4038 = vsel %vm1737, %v4006, %v3354
      %v4039 = vsel %vm1737, %v4007, %v3356
      %v4040 = vsel %vm1737, %v4008, %v3358
      %v4041 = vsel %vm1737, %v4009, %v3360
      %v4042 = vsel %vm1737, %v4010, %v3362
      %v4043 = vsel %vm1737, %v4011, %v3364
      %v4044 = vsel %vm1737, %v4012, %v3366
      %v4045 = vsel %vm1737, %v4013, %v3368
      %v4046 = vsel %vm1737, %v4014, %v3370
      %v4047 = vsel %vm1737, %v4015, %v3372
      %v4048 = vsel %vm1737, %v4016, %v3374
      %v4049 = vsel %vm1737, %v4017, %v3376
      %v4050 = vsel %vm1737, %v4018, %v3378
      %v4051 = vsel %vm1770, %v4019, %v3444
      %v4052 = vsel %vm1770, %v4020, %v3446
      %v4053 = vsel %vm1770, %v4021, %v3448
      %v4054 = vsel %vm1770, %v4022, %v3450
      %v4055 = vsel %vm1770, %v4023, %v3452
      %v4056 = vsel %vm1770, %v4024, %v3454
      %v4057 = vsel %vm1770, %v4025, %v3456
      %v4058 = vsel %vm1770, %v4026, %v3458
      %v4059 = vsel %vm1770, %v4027, %v3460
      %v4060 = vsel %vm1770, %v4028, %v3462
      %v4061 = vsel %vm1770, %v4029, %v3464
      %v4062 = vsel %vm1770, %v4030, %v3466
      %v4063 = vsel %vm1770, %v4031, %v3468
      %v4064 = vsel %vm1770, %v4032, %v3470
      %v4065 = vsel %vm1770, %v4033, %v3472
      %v4066 = vsel %vm1770, %v4034, %v3474
      %v4067 = vsel %vm1770, %v4035, %v3476
      %v4068 = vsel %vm1770, %v4036, %v3478
      %v4069 = vsel %vm1770, %v4037, %v3480
      %v4070 = vsel %vm1770, %v4038, %v3482
      %v4071 = vsel %vm1770, %v4039, %v3484
      %v4072 = vsel %vm1770, %v4040, %v3486
      %v4073 = vsel %vm1770, %v4041, %v3488
      %v4074 = vsel %vm1770, %v4042, %v3490
      %v4075 = vsel %vm1770, %v4043, %v3492
      %v4076 = vsel %vm1770, %v4044, %v3494
      %v4077 = vsel %vm1770, %v4045, %v3496
      %v4078 = vsel %vm1770, %v4046, %v3498
      %v4079 = vsel %vm1770, %v4047, %v3500
      %v4080 = vsel %vm1770, %v4048, %v3502
      %v4081 = vsel %vm1770, %v4049, %v3504
      %v4082 = vsel %vm1770, %v4050, %v3506
      %v4083 = vsel %vm1803, %v4051, %v3572
      %v4084 = vsel %vm1803, %v4052, %v3574
      %v4085 = vsel %vm1803, %v4053, %v3576
      %v4086 = vsel %vm1803, %v4054, %v3578
      %v4087 = vsel %vm1803, %v4055, %v3580
      %v4088 = vsel %vm1803, %v4056, %v3582
      %v4089 = vsel %vm1803, %v4057, %v3584
      %v4090 = vsel %vm1803, %v4058, %v3586
      %v4091 = vsel %vm1803, %v4059, %v3588
      %v4092 = vsel %vm1803, %v4060, %v3590
      %v4093 = vsel %vm1803, %v4061, %v3592
      %v4094 = vsel %vm1803, %v4062, %v3594
      %v4095 = vsel %vm1803, %v4063, %v3596
      %v4096 = vsel %vm1803, %v4064, %v3598
      %v4097 = vsel %vm1803, %v4065, %v3600
      %v4098 = vsel %vm1803, %v4066, %v3602
      %v4099 = vsel %vm1803, %v4067, %v3604
      %v4100 = vsel %vm1803, %v4068, %v3606
      %v4101 = vsel %vm1803, %v4069, %v3608
      %v4102 = vsel %vm1803, %v4070, %v3610
      %v4103 = vsel %vm1803, %v4071, %v3612
      %v4104 = vsel %vm1803, %v4072, %v3614
      %v4105 = vsel %vm1803, %v4073, %v3616
      %v4106 = vsel %vm1803, %v4074, %v3618
      %v4107 = vsel %vm1803, %v4075, %v3620
      %v4108 = vsel %vm1803, %v4076, %v3622
      %v4109 = vsel %vm1803, %v4077, %v3624
      %v4110 = vsel %vm1803, %v4078, %v3626
      %v4111 = vsel %vm1803, %v4079, %v3628
      %v4112 = vsel %vm1803, %v4080, %v3630
      %v4113 = vsel %vm1803, %v4081, %v3632
      %v4114 = vsel %vm1803, %v4082, %v3634
      %v4115 = vsel %vm1836, %v4083, %v3700
      %v4116 = vsel %vm1836, %v4084, %v3702
      %v4117 = vsel %vm1836, %v4085, %v3704
      %v4118 = vsel %vm1836, %v4086, %v3706
      %v4119 = vsel %vm1836, %v4087, %v3708
      %v4120 = vsel %vm1836, %v4088, %v3710
      %v4121 = vsel %vm1836, %v4089, %v3712
      %v4122 = vsel %vm1836, %v4090, %v3714
      %v4123 = vsel %vm1836, %v4091, %v3716
      %v4124 = vsel %vm1836, %v4092, %v3718
      %v4125 = vsel %vm1836, %v4093, %v3720
      %v4126 = vsel %vm1836, %v4094, %v3722
      %v4127 = vsel %vm1836, %v4095, %v3724
      %v4128 = vsel %vm1836, %v4096, %v3726
      %v4129 = vsel %vm1836, %v4097, %v3728
      %v4130 = vsel %vm1836, %v4098, %v3730
      %v4131 = vsel %vm1836, %v4099, %v3732
      %v4132 = vsel %vm1836, %v4100, %v3734
      %v4133 = vsel %vm1836, %v4101, %v3736
      %v4134 = vsel %vm1836, %v4102, %v3738
      %v4135 = vsel %vm1836, %v4103, %v3740
      %v4136 = vsel %vm1836, %v4104, %v3742
      %v4137 = vsel %vm1836, %v4105, %v3744
      %v4138 = vsel %vm1836, %v4106, %v3746
      %v4139 = vsel %vm1836, %v4107, %v3748
      %v4140 = vsel %vm1836, %v4108, %v3750
      %v4141 = vsel %vm1836, %v4109, %v3752
      %v4142 = vsel %vm1836, %v4110, %v3754
      %v4143 = vsel %vm1836, %v4111, %v3756
      %v4144 = vsel %vm1836, %v4112, %v3758
      %v4145 = vsel %vm1836, %v4113, %v3760
      %v4146 = vsel %vm1836, %v4114, %v3762
      %v4147 = vsel %vm1869, %v4115, %v3828
      %v4148 = vsel %vm1869, %v4116, %v3830
      %v4149 = vsel %vm1869, %v4117, %v3832
      %v4150 = vsel %vm1869, %v4118, %v3834
      %v4151 = vsel %vm1869, %v4119, %v3836
      %v4152 = vsel %vm1869, %v4120, %v3838
      %v4153 = vsel %vm1869, %v4121, %v3840
      %v4154 = vsel %vm1869, %v4122, %v3842
      %v4155 = vsel %vm1869, %v4123, %v3844
      %v4156 = vsel %vm1869, %v4124, %v3846
      %v4157 = vsel %vm1869, %v4125, %v3848
      %v4158 = vsel %vm1869, %v4126, %v3850
      %v4159 = vsel %vm1869, %v4127, %v3852
      %v4160 = vsel %vm1869, %v4128, %v3854
      %v4161 = vsel %vm1869, %v4129, %v3856
      %v4162 = vsel %vm1869, %v4130, %v3858
      %v4163 = vsel %vm1869, %v4131, %v3860
      %v4164 = vsel %vm1869, %v4132, %v3862
      %v4165 = vsel %vm1869, %v4133, %v3864
      %v4166 = vsel %vm1869, %v4134, %v3866
      %v4167 = vsel %vm1869, %v4135, %v3868
      %v4168 = vsel %vm1869, %v4136, %v3870
      %v4169 = vsel %vm1869, %v4137, %v3872
      %v4170 = vsel %vm1869, %v4138, %v3874
      %v4171 = vsel %vm1869, %v4139, %v3876
      %v4172 = vsel %vm1869, %v4140, %v3878
      %v4173 = vsel %vm1869, %v4141, %v3880
      %v4174 = vsel %vm1869, %v4142, %v3882
      %v4175 = vsel %vm1869, %v4143, %v3884
      %v4176 = vsel %vm1869, %v4144, %v3886
      %v4177 = vsel %vm1869, %v4145, %v3888
      %v4178 = vsel %vm1869, %v4146, %v3890
      %v4180 = vsel %vm1902, %v4147, 0
      %v4183 = vsel %vm1902, %v4148, 0
      %v4186 = vsel %vm1902, %v4149, 0
      %v4189 = vsel %vm1902, %v4150, 0
      %v4192 = vsel %vm1902, %v4151, 0
      %v4195 = vsel %vm1902, %v4152, 0
      %v4198 = vsel %vm1902, %v4153, 0
      %v4201 = vsel %vm1902, %v4154, 0
      %v4204 = vsel %vm1902, %v4155, 0
      %v4207 = vsel %vm1902, %v4156, 0
      %v4210 = vsel %vm1902, %v4157, 0
      %v4213 = vsel %vm1902, %v4158, 0
      %v4216 = vsel %vm1902, %v4159, 0
      %v4219 = vsel %vm1902, %v4160, 0
      %v4222 = vsel %vm1902, %v4161, 0
      %v4225 = vsel %vm1902, %v4162, 0
      %v4228 = vsel %vm1902, %v4163, 0
      %v4231 = vsel %vm1902, %v4164, 0
      %v4234 = vsel %vm1902, %v4165, 0
      %v4237 = vsel %vm1902, %v4166, 0
      %v4240 = vsel %vm1902, %v4167, 0
      %v4243 = vsel %vm1902, %v4168, 0
      %v4246 = vsel %vm1902, %v4169, 0
      %v4249 = vsel %vm1902, %v4170, 0
      %v4252 = vsel %vm1902, %v4171, 0
      %v4255 = vsel %vm1902, %v4172, 0
      %v4258 = vsel %vm1902, %v4173, 0
      %v4261 = vsel %vm1902, %v4174, 0
      %v4264 = vsel %vm1902, %v4175, 0
      %v4267 = vsel %vm1902, %v4176, 0
      %v4270 = vsel %vm1902, %v4177, 0
      %v4273 = vsel %vm1902, %v4178, 0
      %v4276 = vsel %vm1999, %v2610, 0
      %4278 = vmatprep.subr.mxu0 0.0
      %4279 = vmatpush1.msra.mxu0 0.0
      %4280 = vmatprep.subr.mxu0 0.0
      %4281 = vmatpush1.msra.mxu0 0.0
      %4282 = vmatprep.subr.mxu0 0.0
      %4283 = vmatpush1.msra.mxu0 0.0
      %4284 = vmatprep.subr.mxu0 0.0
      %4285 = vmatpush1.msra.mxu0 0.0
      %4286 = vmatprep.subr.mxu0 0.0
      %4287 = vmatpush1.msra.mxu0 0.0
      %4288 = vmatprep.subr.mxu0 0.0
      %4289 = vmatpush1.msra.mxu0 0.0
      %4290 = vmatprep.subr.mxu0 0.0
      %4291 = vmatpush1.msra.mxu0 0.0
      %4292 = vmatprep.subr.mxu0 0.0
      %4293 = vmatpush1.msra.mxu0 0.0
      %4294 = vmatprep.subr.mxu0 0.0
      %4295 = vmatpush1.msra.mxu0 0.0
      %4296 = vmatprep.subr.mxu0 0.0
      %4297 = vmatpush1.msra.mxu0 0.0
      %4298 = vmatprep.subr.mxu0 0.0
      %4299 = vmatpush1.msra.mxu0 0.0
      %4300 = vmatprep.subr.mxu0 0.0
      %4301 = vmatpush1.msra.mxu0 %v4276
      %4302 = vmatprep.subr.mxu0 0.0
      %4303 = vmatpush1.msra.mxu0 %v2609
      %4304 = vmatprep.subr.mxu0 0.0
      %4305 = vmatpush1.msra.mxu0 %v2608
      %4306 = vmatprep.subr.mxu0 0.0
      %4307 = vmatpush1.msra.mxu0 %v2607
      %4308 = vmatprep.subr.mxu0 0.0
      %4309 = vmatpush1.msra.mxu0 %v2606
      %4310 = vmatprep.subr.mxu0 0.0
      %4311 = vmatpush2.msra.mxu0 0.0
      %4312 = vmatprep.subr.mxu0 0.0
      %4313 = vmatpush2.msra.mxu0 0.0
      %4314 = vmatprep.subr.mxu0 0.0
      %4315 = vmatpush2.msra.mxu0 0.0
      %4316 = vmatprep.subr.mxu0 0.0
      %4317 = vmatpush2.msra.mxu0 0.0
      %4318 = vmatprep.subr.mxu0 0.0
      %4319 = vmatpush2.msra.mxu0 0.0
      %4320 = vmatprep.subr.mxu0 0.0
      %4321 = vmatpush2.msra.mxu0 0.0
      %4322 = vmatprep.subr.mxu0 0.0
      %4323 = vmatpush2.msra.mxu0 0.0
      %4324 = vmatprep.subr.mxu0 0.0
      %4325 = vmatpush2.msra.mxu0 0.0
      %4326 = vmatprep.subr.mxu0 0.0
      %4327 = vmatpush2.msra.mxu0 0.0
      %4328 = vmatprep.subr.mxu0 0.0
      %4329 = vmatpush2.msra.mxu0 0.0
      %4330 = vmatprep.subr.mxu0 0.0
      %4331 = vmatpush2.msra.mxu0 0.0
      %4332 = vmatprep.subr.mxu0 0.0
      %4333 = vmatpush2.msra.mxu0 0.0
      %4334 = vmatprep.subr.mxu0 0.0
      %4335 = vmatpush2.msra.mxu0 0.0
      %4336 = vmatprep.subr.mxu0 0.0
      %4337 = vmatpush2.msra.mxu0 0.0
      %4338 = vmatprep.subr.mxu0 0.0
      %4339 = vmatpush2.msra.mxu0 0.0
      %4340 = vmatprep.subr.mxu0 0.0
      %4341 = vmatpush2.msra.mxu0 0.0
      %4342 = vmatprep.mubr.f32.mxu0 0.0
      %4343 = vmatmul.mubr.f32.gmra.mxu0 %v4180
      %v4344 = vpop.f32.mrf.mxu0
      %v4345 = vadd.f32 0.0, %v4344
      %v4346 = vpop.f32.mrf.mxu0
      %4347 = vmatprep.mubr.f32.mxu0 0.0
      %4348 = vmatmul.mubr.f32.gmra.mxu0 %v4183
      %v4349 = vpop.f32.mrf.mxu0
      %v4350 = vadd.f32 0.0, %v4349
      %v4351 = vpop.f32.mrf.mxu0
      %4352 = vmatprep.mubr.f32.mxu0 0.0
      %4353 = vmatmul.mubr.f32.gmra.mxu0 %v4186
      %v4354 = vpop.f32.mrf.mxu0
      %v4355 = vadd.f32 0.0, %v4354
      %v4356 = vpop.f32.mrf.mxu0
      %4357 = vmatprep.mubr.f32.mxu0 0.0
      %4358 = vmatmul.mubr.f32.gmra.mxu0 %v4189
      %v4359 = vpop.f32.mrf.mxu0
      %v4360 = vadd.f32 0.0, %v4359
      %v4361 = vpop.f32.mrf.mxu0
      %4362 = vmatprep.mubr.f32.mxu0 0.0
      %4363 = vmatmul.mubr.f32.gmra.mxu0 %v4192
      %v4364 = vpop.f32.mrf.mxu0
      %v4365 = vadd.f32 0.0, %v4364
      %v4366 = vpop.f32.mrf.mxu0
      %4367 = vmatprep.mubr.f32.mxu0 0.0
      %4368 = vmatmul.mubr.f32.gmra.mxu0 %v4195
      %v4369 = vpop.f32.mrf.mxu0
      %v4370 = vadd.f32 0.0, %v4369
      %v4371 = vpop.f32.mrf.mxu0
      %4372 = vmatprep.mubr.f32.mxu0 0.0
      %4373 = vmatmul.mubr.f32.gmra.mxu0 %v4198
      %v4374 = vpop.f32.mrf.mxu0
      %v4375 = vadd.f32 0.0, %v4374
      %v4376 = vpop.f32.mrf.mxu0
      %4377 = vmatprep.mubr.f32.mxu0 0.0
      %4378 = vmatmul.mubr.f32.gmra.mxu0 %v4201
      %v4379 = vpop.f32.mrf.mxu0
      %v4380 = vadd.f32 0.0, %v4379
      %v4381 = vpop.f32.mrf.mxu0
      %4382 = vmatprep.mubr.f32.mxu0 0.0
      %4383 = vmatmul.mubr.f32.gmra.mxu0 %v4204
      %v4384 = vpop.f32.mrf.mxu0
      %v4385 = vadd.f32 0.0, %v4384
      %v4386 = vpop.f32.mrf.mxu0
      %4387 = vmatprep.mubr.f32.mxu0 0.0
      %4388 = vmatmul.mubr.f32.gmra.mxu0 %v4207
      %v4389 = vpop.f32.mrf.mxu0
      %v4390 = vadd.f32 0.0, %v4389
      %v4391 = vpop.f32.mrf.mxu0
      %4392 = vmatprep.mubr.f32.mxu0 0.0
      %4393 = vmatmul.mubr.f32.gmra.mxu0 %v4210
      %v4394 = vpop.f32.mrf.mxu0
      %v4395 = vadd.f32 0.0, %v4394
      %v4396 = vpop.f32.mrf.mxu0
      %4397 = vmatprep.mubr.f32.mxu0 0.0
      %4398 = vmatmul.mubr.f32.gmra.mxu0 %v4213
      %v4399 = vpop.f32.mrf.mxu0
      %v4400 = vadd.f32 0.0, %v4399
      %v4401 = vpop.f32.mrf.mxu0
      %4402 = vmatprep.mubr.f32.mxu0 0.0
      %4403 = vmatmul.mubr.f32.gmra.mxu0 %v4216
      %v4404 = vpop.f32.mrf.mxu0
      %v4405 = vadd.f32 0.0, %v4404
      %v4406 = vpop.f32.mrf.mxu0
      %4407 = vmatprep.mubr.f32.mxu0 0.0
      %4408 = vmatmul.mubr.f32.gmra.mxu0 %v4219
      %v4409 = vpop.f32.mrf.mxu0
      %v4410 = vadd.f32 0.0, %v4409
      %v4411 = vpop.f32.mrf.mxu0
      %4412 = vmatprep.mubr.f32.mxu0 0.0
      %4413 = vmatmul.mubr.f32.gmra.mxu0 %v4222
      %v4414 = vpop.f32.mrf.mxu0
      %v4415 = vadd.f32 0.0, %v4414
      %v4416 = vpop.f32.mrf.mxu0
      %4417 = vmatprep.mubr.f32.mxu0 0.0
      %4418 = vmatmul.mubr.f32.gmra.mxu0 %v4225
      %v4419 = vpop.f32.mrf.mxu0
      %v4420 = vadd.f32 0.0, %v4419
      %v4421 = vpop.f32.mrf.mxu0
      %4422 = vmatprep.mubr.f32.mxu0 0.0
      %4423 = vmatmul.mubr.f32.gmra.mxu0 %v4228
      %v4424 = vpop.f32.mrf.mxu0
      %v4425 = vadd.f32 0.0, %v4424
      %v4426 = vpop.f32.mrf.mxu0
      %4427 = vmatprep.mubr.f32.mxu0 0.0
      %4428 = vmatmul.mubr.f32.gmra.mxu0 %v4231
      %v4429 = vpop.f32.mrf.mxu0
      %v4430 = vadd.f32 0.0, %v4429
      %v4431 = vpop.f32.mrf.mxu0
      %4432 = vmatprep.mubr.f32.mxu0 0.0
      %4433 = vmatmul.mubr.f32.gmra.mxu0 %v4234
      %v4434 = vpop.f32.mrf.mxu0
      %v4435 = vadd.f32 0.0, %v4434
      %v4436 = vpop.f32.mrf.mxu0
      %4437 = vmatprep.mubr.f32.mxu0 0.0
      %4438 = vmatmul.mubr.f32.gmra.mxu0 %v4237
      %v4439 = vpop.f32.mrf.mxu0
      %v4440 = vadd.f32 0.0, %v4439
      %v4441 = vpop.f32.mrf.mxu0
      %4442 = vmatprep.mubr.f32.mxu0 0.0
      %4443 = vmatmul.mubr.f32.gmra.mxu0 %v4240
      %v4444 = vpop.f32.mrf.mxu0
      %v4445 = vadd.f32 0.0, %v4444
      %v4446 = vpop.f32.mrf.mxu0
      %4447 = vmatprep.mubr.f32.mxu0 0.0
      %4448 = vmatmul.mubr.f32.gmra.mxu0 %v4243
      %v4449 = vpop.f32.mrf.mxu0
      %v4450 = vadd.f32 0.0, %v4449
      %v4451 = vpop.f32.mrf.mxu0
      %4452 = vmatprep.mubr.f32.mxu0 0.0
      %4453 = vmatmul.mubr.f32.gmra.mxu0 %v4246
      %v4454 = vpop.f32.mrf.mxu0
      %v4455 = vadd.f32 0.0, %v4454
      %v4456 = vpop.f32.mrf.mxu0
      %4457 = vmatprep.mubr.f32.mxu0 0.0
      %4458 = vmatmul.mubr.f32.gmra.mxu0 %v4249
      %v4459 = vpop.f32.mrf.mxu0
      %v4460 = vadd.f32 0.0, %v4459
      %v4461 = vpop.f32.mrf.mxu0
      %4462 = vmatprep.mubr.f32.mxu0 0.0
      %4463 = vmatmul.mubr.f32.gmra.mxu0 %v4252
      %v4464 = vpop.f32.mrf.mxu0
      %v4465 = vadd.f32 0.0, %v4464
      %v4466 = vpop.f32.mrf.mxu0
      %4467 = vmatprep.mubr.f32.mxu0 0.0
      %4468 = vmatmul.mubr.f32.gmra.mxu0 %v4255
      %v4469 = vpop.f32.mrf.mxu0
      %v4470 = vadd.f32 0.0, %v4469
      %v4471 = vpop.f32.mrf.mxu0
      %4472 = vmatprep.mubr.f32.mxu0 0.0
      %4473 = vmatmul.mubr.f32.gmra.mxu0 %v4258
      %v4474 = vpop.f32.mrf.mxu0
      %v4475 = vadd.f32 0.0, %v4474
      %v4476 = vpop.f32.mrf.mxu0
      %4477 = vmatprep.mubr.f32.mxu0 0.0
      %4478 = vmatmul.mubr.f32.gmra.mxu0 %v4261
      %v4479 = vpop.f32.mrf.mxu0
      %v4480 = vadd.f32 0.0, %v4479
      %v4481 = vpop.f32.mrf.mxu0
      %4482 = vmatprep.mubr.f32.mxu0 0.0
      %4483 = vmatmul.mubr.f32.gmra.mxu0 %v4264
      %v4484 = vpop.f32.mrf.mxu0
      %v4485 = vadd.f32 0.0, %v4484
      %v4486 = vpop.f32.mrf.mxu0
      %4487 = vmatprep.mubr.f32.mxu0 0.0
      %4488 = vmatmul.mubr.f32.gmra.mxu0 %v4267
      %v4489 = vpop.f32.mrf.mxu0
      %v4490 = vadd.f32 0.0, %v4489
      %v4491 = vpop.f32.mrf.mxu0
      %4492 = vmatprep.mubr.f32.mxu0 0.0
      %4493 = vmatmul.mubr.f32.gmra.mxu0 %v4270
      %v4494 = vpop.f32.mrf.mxu0
      %v4495 = vadd.f32 0.0, %v4494
      %v4496 = vpop.f32.mrf.mxu0
      %4497 = vmatprep.mubr.f32.mxu0 0.0
      %4498 = vmatmul.mubr.f32.gmra.mxu0 %v4273
      %v4499 = vpop.f32.mrf.mxu0
      %v4500 = vadd.f32 0.0, %v4499
      %v4501 = vpop.f32.mrf.mxu0
      %4502 = vdwg.mxu0
      %v4503 = vsel %vm204, %v4345, 0.0
      %v4504 = vsel %vm204, %v4350, 0.0
      %v4505 = vadd.f32 %v4503, %v4504
      %v4506 = vsel %vm204, %v4355, 0.0
      %v4507 = vadd.f32 %v4505, %v4506
      %v4508 = vsel %vm204, %v4360, 0.0
      %v4509 = vadd.f32 %v4507, %v4508
      %v4510 = vsel %vm204, %v4365, 0.0
      %v4511 = vadd.f32 %v4509, %v4510
      %v4512 = vsel %vm204, %v4370, 0.0
      %v4513 = vadd.f32 %v4511, %v4512
      %v4514 = vsel %vm204, %v4375, 0.0
      %v4515 = vadd.f32 %v4513, %v4514
      %v4516 = vsel %vm204, %v4380, 0.0
      %v4517 = vadd.f32 %v4515, %v4516
      %v4518 = vsel %vm204, %v4385, 0.0
      %v4519 = vadd.f32 %v4517, %v4518
      %v4520 = vsel %vm204, %v4390, 0.0
      %v4521 = vadd.f32 %v4519, %v4520
      %v4522 = vsel %vm204, %v4395, 0.0
      %v4523 = vadd.f32 %v4521, %v4522
      %v4524 = vsel %vm204, %v4400, 0.0
      %v4525 = vadd.f32 %v4523, %v4524
      %v4526 = vsel %vm204, %v4405, 0.0
      %v4527 = vadd.f32 %v4525, %v4526
      %v4528 = vsel %vm204, %v4410, 0.0
      %v4529 = vadd.f32 %v4527, %v4528
      %v4530 = vsel %vm204, %v4415, 0.0
      %v4531 = vadd.f32 %v4529, %v4530
      %v4532 = vsel %vm204, %v4420, 0.0
      %v4533 = vadd.f32 %v4531, %v4532
      %v4534 = vsel %vm204, %v4425, 0.0
      %v4535 = vadd.f32 %v4533, %v4534
      %v4536 = vsel %vm204, %v4430, 0.0
      %v4537 = vadd.f32 %v4535, %v4536
      %v4538 = vsel %vm204, %v4435, 0.0
      %v4539 = vadd.f32 %v4537, %v4538
      %v4540 = vsel %vm204, %v4440, 0.0
      %v4541 = vadd.f32 %v4539, %v4540
      %v4542 = vsel %vm204, %v4445, 0.0
      %v4543 = vadd.f32 %v4541, %v4542
      %v4544 = vsel %vm204, %v4450, 0.0
      %v4545 = vadd.f32 %v4543, %v4544
      %v4546 = vsel %vm204, %v4455, 0.0
      %v4547 = vadd.f32 %v4545, %v4546
      %v4548 = vsel %vm204, %v4460, 0.0
      %v4549 = vadd.f32 %v4547, %v4548
      %v4550 = vsel %vm204, %v4465, 0.0
      %v4551 = vadd.f32 %v4549, %v4550
      %v4552 = vsel %vm204, %v4470, 0.0
      %v4553 = vadd.f32 %v4551, %v4552
      %v4554 = vsel %vm204, %v4475, 0.0
      %v4555 = vadd.f32 %v4553, %v4554
      %v4556 = vsel %vm204, %v4480, 0.0
      %v4557 = vadd.f32 %v4555, %v4556
      %v4558 = vsel %vm204, %v4485, 0.0
      %v4559 = vadd.f32 %v4557, %v4558
      %v4560 = vsel %vm204, %v4490, 0.0
      %v4561 = vadd.f32 %v4559, %v4560
      %v4562 = vsel %vm204, %v4495, 0.0
      %v4563 = vadd.f32 %v4561, %v4562
      %v4564 = vsel %vm204, %v4500, 0.0
      %v4565 = vadd.f32 %v4563, %v4564
      %v4566 = vrot.slane %v4565, 4
      %v4567 = vadd.f32 %v4565, %v4566
      %v4568 = vrot.slane %v4567, 2
      %v4569 = vadd.f32 %v4567, %v4568
      %v4570 = vrot.slane %v4569, 1
      %v4571 = vadd.f32 %v4569, %v4570
      %v4572 = vmul.f32 %v4571, 0.00390625
      %v4573 = vsub.f32 %v4345, %v4572
      %v4574 = vsub.f32 %v4350, %v4572
      %v4575 = vsub.f32 %v4355, %v4572
      %v4576 = vsub.f32 %v4360, %v4572
      %v4577 = vsub.f32 %v4365, %v4572
      %v4578 = vsub.f32 %v4370, %v4572
      %v4579 = vsub.f32 %v4375, %v4572
      %v4580 = vsub.f32 %v4380, %v4572
      %v4581 = vsub.f32 %v4385, %v4572
      %v4582 = vsub.f32 %v4390, %v4572
      %v4583 = vsub.f32 %v4395, %v4572
      %v4584 = vsub.f32 %v4400, %v4572
      %v4585 = vsub.f32 %v4405, %v4572
      %v4586 = vsub.f32 %v4410, %v4572
      %v4587 = vsub.f32 %v4415, %v4572
      %v4588 = vsub.f32 %v4420, %v4572
      %v4589 = vsub.f32 %v4425, %v4572
      %v4590 = vsub.f32 %v4430, %v4572
      %v4591 = vsub.f32 %v4435, %v4572
      %v4592 = vsub.f32 %v4440, %v4572
      %v4593 = vsub.f32 %v4445, %v4572
      %v4594 = vsub.f32 %v4450, %v4572
      %v4595 = vsub.f32 %v4455, %v4572
      %v4596 = vsub.f32 %v4460, %v4572
      %v4597 = vsub.f32 %v4465, %v4572
      %v4598 = vsub.f32 %v4470, %v4572
      %v4599 = vsub.f32 %v4475, %v4572
      %v4600 = vsub.f32 %v4480, %v4572
      %v4601 = vsub.f32 %v4485, %v4572
      %v4602 = vsub.f32 %v4490, %v4572
      %v4603 = vsub.f32 %v4495, %v4572
      %v4604 = vsub.f32 %v4500, %v4572
      %v4605 = vmul.f32 %v4573, %v4573
      %v4606 = vmul.f32 %v4574, %v4574
      %v4607 = vmul.f32 %v4575, %v4575
      %v4608 = vmul.f32 %v4576, %v4576
      %v4609 = vmul.f32 %v4577, %v4577
      %v4610 = vmul.f32 %v4578, %v4578
      %v4611 = vmul.f32 %v4579, %v4579
      %v4612 = vmul.f32 %v4580, %v4580
      %v4613 = vmul.f32 %v4581, %v4581
      %v4614 = vmul.f32 %v4582, %v4582
      %v4615 = vmul.f32 %v4583, %v4583
      %v4616 = vmul.f32 %v4584, %v4584
      %v4617 = vmul.f32 %v4585, %v4585
      %v4618 = vmul.f32 %v4586, %v4586
      %v4619 = vmul.f32 %v4587, %v4587
      %v4620 = vmul.f32 %v4588, %v4588
      %v4621 = vmul.f32 %v4589, %v4589
      %v4622 = vmul.f32 %v4590, %v4590
      %v4623 = vmul.f32 %v4591, %v4591
      %v4624 = vmul.f32 %v4592, %v4592
      %v4625 = vmul.f32 %v4593, %v4593
      %v4626 = vmul.f32 %v4594, %v4594
      %v4627 = vmul.f32 %v4595, %v4595
      %v4628 = vmul.f32 %v4596, %v4596
      %v4629 = vmul.f32 %v4597, %v4597
      %v4630 = vmul.f32 %v4598, %v4598
      %v4631 = vmul.f32 %v4599, %v4599
      %v4632 = vmul.f32 %v4600, %v4600
      %v4633 = vmul.f32 %v4601, %v4601
      %v4634 = vmul.f32 %v4602, %v4602
      %v4635 = vmul.f32 %v4603, %v4603
      %v4636 = vmul.f32 %v4604, %v4604
      %v4637 = vsel %vm204, %v4605, 0.0
      %v4638 = vsel %vm204, %v4606, 0.0
      %v4639 = vadd.f32 %v4637, %v4638
      %v4640 = vsel %vm204, %v4607, 0.0
      %v4641 = vadd.f32 %v4639, %v4640
      %v4642 = vsel %vm204, %v4608, 0.0
      %v4643 = vadd.f32 %v4641, %v4642
      %v4644 = vsel %vm204, %v4609, 0.0
      %v4645 = vadd.f32 %v4643, %v4644
      %v4646 = vsel %vm204, %v4610, 0.0
      %v4647 = vadd.f32 %v4645, %v4646
      %v4648 = vsel %vm204, %v4611, 0.0
      %v4649 = vadd.f32 %v4647, %v4648
      %v4650 = vsel %vm204, %v4612, 0.0
      %v4651 = vadd.f32 %v4649, %v4650
      %v4652 = vsel %vm204, %v4613, 0.0
      %v4653 = vadd.f32 %v4651, %v4652
      %v4654 = vsel %vm204, %v4614, 0.0
      %v4655 = vadd.f32 %v4653, %v4654
      %v4656 = vsel %vm204, %v4615, 0.0
      %v4657 = vadd.f32 %v4655, %v4656
      %v4658 = vsel %vm204, %v4616, 0.0
      %v4659 = vadd.f32 %v4657, %v4658
      %v4660 = vsel %vm204, %v4617, 0.0
      %v4661 = vadd.f32 %v4659, %v4660
      %v4662 = vsel %vm204, %v4618, 0.0
      %v4663 = vadd.f32 %v4661, %v4662
      %v4664 = vsel %vm204, %v4619, 0.0
      %v4665 = vadd.f32 %v4663, %v4664
      %v4666 = vsel %vm204, %v4620, 0.0
      %v4667 = vadd.f32 %v4665, %v4666
      %v4668 = vsel %vm204, %v4621, 0.0
      %v4669 = vadd.f32 %v4667, %v4668
      %v4670 = vsel %vm204, %v4622, 0.0
      %v4671 = vadd.f32 %v4669, %v4670
      %v4672 = vsel %vm204, %v4623, 0.0
      %v4673 = vadd.f32 %v4671, %v4672
      %v4674 = vsel %vm204, %v4624, 0.0
      %v4675 = vadd.f32 %v4673, %v4674
      %v4676 = vsel %vm204, %v4625, 0.0
      %v4677 = vadd.f32 %v4675, %v4676
      %v4678 = vsel %vm204, %v4626, 0.0
      %v4679 = vadd.f32 %v4677, %v4678
      %v4680 = vsel %vm204, %v4627, 0.0
      %v4681 = vadd.f32 %v4679, %v4680
      %v4682 = vsel %vm204, %v4628, 0.0
      %v4683 = vadd.f32 %v4681, %v4682
      %v4684 = vsel %vm204, %v4629, 0.0
      %v4685 = vadd.f32 %v4683, %v4684
      %v4686 = vsel %vm204, %v4630, 0.0
      %v4687 = vadd.f32 %v4685, %v4686
      %v4688 = vsel %vm204, %v4631, 0.0
      %v4689 = vadd.f32 %v4687, %v4688
      %v4690 = vsel %vm204, %v4632, 0.0
      %v4691 = vadd.f32 %v4689, %v4690
      %v4692 = vsel %vm204, %v4633, 0.0
      %v4693 = vadd.f32 %v4691, %v4692
      %v4694 = vsel %vm204, %v4634, 0.0
      %v4695 = vadd.f32 %v4693, %v4694
      %v4696 = vsel %vm204, %v4635, 0.0
      %v4697 = vadd.f32 %v4695, %v4696
      %v4698 = vsel %vm204, %v4636, 0.0
      %v4699 = vadd.f32 %v4697, %v4698
      %v4700 = vrot.slane %v4699, 4
      %v4701 = vadd.f32 %v4699, %v4700
      %v4702 = vrot.slane %v4701, 2
      %v4703 = vadd.f32 %v4701, %v4702
      %v4704 = vrot.slane %v4703, 1
      %v4705 = vadd.f32 %v4703, %v4704
      %v4706 = vmul.f32 %v4705, 0.00390625
      %v4707 = vadd.f32 %v4706, 1e-05
      %v4708 = vrsqrt.pop %v4707
      %v4709 = vmul.f32 %v4573, %v4708
      %v4710 = vmul.f32 %v4574, %v4708
      %v4711 = vmul.f32 %v4575, %v4708
      %v4712 = vmul.f32 %v4576, %v4708
      %v4713 = vmul.f32 %v4577, %v4708
      %v4714 = vmul.f32 %v4578, %v4708
      %v4715 = vmul.f32 %v4579, %v4708
      %v4716 = vmul.f32 %v4580, %v4708
      %v4717 = vmul.f32 %v4581, %v4708
      %v4718 = vmul.f32 %v4582, %v4708
      %v4719 = vmul.f32 %v4583, %v4708
      %v4720 = vmul.f32 %v4584, %v4708
      %v4721 = vmul.f32 %v4585, %v4708
      %v4722 = vmul.f32 %v4586, %v4708
      %v4723 = vmul.f32 %v4587, %v4708
      %v4724 = vmul.f32 %v4588, %v4708
      %v4725 = vmul.f32 %v4589, %v4708
      %v4726 = vmul.f32 %v4590, %v4708
      %v4727 = vmul.f32 %v4591, %v4708
      %v4728 = vmul.f32 %v4592, %v4708
      %v4729 = vmul.f32 %v4593, %v4708
      %v4730 = vmul.f32 %v4594, %v4708
      %v4731 = vmul.f32 %v4595, %v4708
      %v4732 = vmul.f32 %v4596, %v4708
      %v4733 = vmul.f32 %v4597, %v4708
      %v4734 = vmul.f32 %v4598, %v4708
      %v4735 = vmul.f32 %v4599, %v4708
      %v4736 = vmul.f32 %v4600, %v4708
      %v4737 = vmul.f32 %v4601, %v4708
      %v4738 = vmul.f32 %v4602, %v4708
      %v4739 = vmul.f32 %v4603, %v4708
      %v4740 = vmul.f32 %v4604, %v4708
      %v4741 = vld [vmem:[%s165] sm:$0xff]
      %v4742 = vld [vmem:[%s165 + $0x8] sm:$0xff]
      %v4743 = vld [vmem:[%s165 + $0x10] sm:$0xff]
      %v4744 = vld [vmem:[%s165 + $0x18] sm:$0xff]
      %v4745 = vld [vmem:[%s165 + $0x20] sm:$0xff]
      %v4746 = vld [vmem:[%s165 + $0x28] sm:$0xff]
      %v4747 = vld [vmem:[%s165 + $0x30] sm:$0xff]
      %v4748 = vld [vmem:[%s165 + $0x38] sm:$0xff]
      %v4749 = vld [vmem:[%s165 + $0x40] sm:$0xff]
      %v4750 = vld [vmem:[%s165 + $0x48] sm:$0xff]
      %v4751 = vld [vmem:[%s165 + $0x50] sm:$0xff]
      %v4752 = vld [vmem:[%s165 + $0x58] sm:$0xff]
      %v4753 = vld [vmem:[%s165 + $0x60] sm:$0xff]
      %v4754 = vld [vmem:[%s165 + $0x68] sm:$0xff]
      %v4755 = vld [vmem:[%s165 + $0x70] sm:$0xff]
      %v4756 = vld [vmem:[%s165 + $0x78] sm:$0xff]
      %v4757 = vld [vmem:[%s165 + $0x80] sm:$0xff]
      %v4758 = vld [vmem:[%s165 + $0x88] sm:$0xff]
      %v4759 = vld [vmem:[%s165 + $0x90] sm:$0xff]
      %v4760 = vld [vmem:[%s165 + $0x98] sm:$0xff]
      %v4761 = vld [vmem:[%s165 + $0xa0] sm:$0xff]
      %v4762 = vld [vmem:[%s165 + $0xa8] sm:$0xff]
      %v4763 = vld [vmem:[%s165 + $0xb0] sm:$0xff]
      %v4764 = vld [vmem:[%s165 + $0xb8] sm:$0xff]
      %v4765 = vld [vmem:[%s165 + $0xc0] sm:$0xff]
      %v4766 = vld [vmem:[%s165 + $0xc8] sm:$0xff]
      %v4767 = vld [vmem:[%s165 + $0xd0] sm:$0xff]
      %v4768 = vld [vmem:[%s165 + $0xd8] sm:$0xff]
      %v4769 = vld [vmem:[%s165 + $0xe0] sm:$0xff]
      %v4770 = vld [vmem:[%s165 + $0xe8] sm:$0xff]
      %v4771 = vld [vmem:[%s165 + $0xf0] sm:$0xff]
      %v4772 = vld [vmem:[%s165 + $0xf8] sm:$0xff]
      %v4773 = vadd.f32 %v4741, %v4709
      %v4774 = vadd.f32 %v4742, %v4710
      %v4775 = vadd.f32 %v4743, %v4711
      %v4776 = vadd.f32 %v4744, %v4712
      %v4777 = vadd.f32 %v4745, %v4713
      %v4778 = vadd.f32 %v4746, %v4714
      %v4779 = vadd.f32 %v4747, %v4715
      %v4780 = vadd.f32 %v4748, %v4716
      %v4781 = vadd.f32 %v4749, %v4717
      %v4782 = vadd.f32 %v4750, %v4718
      %v4783 = vadd.f32 %v4751, %v4719
      %v4784 = vadd.f32 %v4752, %v4720
      %v4785 = vadd.f32 %v4753, %v4721
      %v4786 = vadd.f32 %v4754, %v4722
      %v4787 = vadd.f32 %v4755, %v4723
      %v4788 = vadd.f32 %v4756, %v4724
      %v4789 = vadd.f32 %v4757, %v4725
      %v4790 = vadd.f32 %v4758, %v4726
      %v4791 = vadd.f32 %v4759, %v4727
      %v4792 = vadd.f32 %v4760, %v4728
      %v4793 = vadd.f32 %v4761, %v4729
      %v4794 = vadd.f32 %v4762, %v4730
      %v4795 = vadd.f32 %v4763, %v4731
      %v4796 = vadd.f32 %v4764, %v4732
      %v4797 = vadd.f32 %v4765, %v4733
      %v4798 = vadd.f32 %v4766, %v4734
      %v4799 = vadd.f32 %v4767, %v4735
      %v4800 = vadd.f32 %v4768, %v4736
      %v4801 = vadd.f32 %v4769, %v4737
      %v4802 = vadd.f32 %v4770, %v4738
      %v4803 = vadd.f32 %v4771, %v4739
      %v4804 = vadd.f32 %v4772, %v4740
      %4805 = vst.msk [vmem:[%s170] sm:$0xff] %vm204, %v4773
      %4806 = vst.msk [vmem:[%s170 + $0x8] sm:$0xff] %vm204, %v4774
      %4807 = vst.msk [vmem:[%s170 + $0x10] sm:$0xff] %vm204, %v4775
      %4808 = vst.msk [vmem:[%s170 + $0x18] sm:$0xff] %vm204, %v4776
      %4809 = vst.msk [vmem:[%s170 + $0x20] sm:$0xff] %vm204, %v4777
      %4810 = vst.msk [vmem:[%s170 + $0x28] sm:$0xff] %vm204, %v4778
      %4811 = vst.msk [vmem:[%s170 + $0x30] sm:$0xff] %vm204, %v4779
      %4812 = vst.msk [vmem:[%s170 + $0x38] sm:$0xff] %vm204, %v4780
      %4813 = vst.msk [vmem:[%s170 + $0x40] sm:$0xff] %vm204, %v4781
      %4814 = vst.msk [vmem:[%s170 + $0x48] sm:$0xff] %vm204, %v4782
      %4815 = vst.msk [vmem:[%s170 + $0x50] sm:$0xff] %vm204, %v4783
      %4816 = vst.msk [vmem:[%s170 + $0x58] sm:$0xff] %vm204, %v4784
      %4817 = vst.msk [vmem:[%s170 + $0x60] sm:$0xff] %vm204, %v4785
      %4818 = vst.msk [vmem:[%s170 + $0x68] sm:$0xff] %vm204, %v4786
      %4819 = vst.msk [vmem:[%s170 + $0x70] sm:$0xff] %vm204, %v4787
      %4820 = vst.msk [vmem:[%s170 + $0x78] sm:$0xff] %vm204, %v4788
      %4821 = vst.msk [vmem:[%s170 + $0x80] sm:$0xff] %vm204, %v4789
      %4822 = vst.msk [vmem:[%s170 + $0x88] sm:$0xff] %vm204, %v4790
      %4823 = vst.msk [vmem:[%s170 + $0x90] sm:$0xff] %vm204, %v4791
      %4824 = vst.msk [vmem:[%s170 + $0x98] sm:$0xff] %vm204, %v4792
      %4825 = vst.msk [vmem:[%s170 + $0xa0] sm:$0xff] %vm204, %v4793
      %4826 = vst.msk [vmem:[%s170 + $0xa8] sm:$0xff] %vm204, %v4794
      %4827 = vst.msk [vmem:[%s170 + $0xb0] sm:$0xff] %vm204, %v4795
      %4828 = vst.msk [vmem:[%s170 + $0xb8] sm:$0xff] %vm204, %v4796
      %4829 = vst.msk [vmem:[%s170 + $0xc0] sm:$0xff] %vm204, %v4797
      %4830 = vst.msk [vmem:[%s170 + $0xc8] sm:$0xff] %vm204, %v4798
      %4831 = vst.msk [vmem:[%s170 + $0xd0] sm:$0xff] %vm204, %v4799
      %4832 = vst.msk [vmem:[%s170 + $0xd8] sm:$0xff] %vm204, %v4800
      %4833 = vst.msk [vmem:[%s170 + $0xe0] sm:$0xff] %vm204, %v4801
      %4834 = vst.msk [vmem:[%s170 + $0xe8] sm:$0xff] %vm204, %v4802
      %4835 = vst.msk [vmem:[%s170 + $0xf0] sm:$0xff] %vm204, %v4803
      %4836 = vst.msk [vmem:[%s170 + $0xf8] sm:$0xff] %vm204, %v4804
      %p4837 = scmp.lt.s32.totalorder %s14, 1
      %s4838 = scalar_select %p4837, %s14, 1
      %s4839 = smul.addr %s4838, 32
      %s4840 = smul.addr %s4839, 8
      %s4841 = scalar_lea.vmem %s3, %s4840
      // Predicated region
      $region33: #{tpu_custom_call.1} parent=31 // pred_check
        %p4842 = pneg %p100
      $region34: #{tpu_custom_call.1} parent=31 // pred_check_branch
        %4844 = sbr.rel (%p4842) target = $region36
      $region35: #{tpu_custom_call.1} parent=31 // pred_region
        _
      $region36: #{tpu_custom_call.1} parent=31 // pred_fallthru
        _
    $region32: #{tpu_custom_call.1} parent=5 // pred_fallthru
      _
    %p4845 = scmp.le.s32.totalorder 2, %s9
    // Predicated region
    $region37: #{tpu_custom_call.1} parent=5 // pred_check
      %p4846 = pneg %p4845
    $region38: #{tpu_custom_call.1} parent=5 // pred_check_branch
      %4848 = sbr.rel (%p4846) target = $region40
    $region39: #{tpu_custom_call.1} parent=5 // pred_region
      %s4849 = ssub.s32 %s9, 2
      // Predicated region
      $region41: #{tpu_custom_call.1} parent=39 // pred_check
        %p4850 = pneg %p106
      $region42: #{tpu_custom_call.1} parent=39 // pred_check_branch
        %4852 = sbr.rel (%p4850) target = $region44
      $region43: #{tpu_custom_call.1} parent=39 // pred_region
        %p4853 = scmp.lt.s32.totalorder %s15, 1
        %s4854 = scalar_select %p4853, %s15, 1
        %s4855 = smul.addr %s4854, 32
        %s4856 = smul.addr %s4855, 8
        %s4857 = scalar_lea.vmem %s3, %s4856
      $region44: #{tpu_custom_call.1} parent=39 // pred_fallthru
        _
    $region40: #{tpu_custom_call.1} parent=5 // pred_fallthru
      _
  $region6: #{tpu_custom_call.1} parent=0 // loop_footer
    %s13 = sadd.s32 1, %s9
  $region7: #{tpu_custom_call.1} parent=0 // loop_footer_branch
    %8 = sbr.rel target = $region3
  $region8: #{tpu_custom_call.1} parent=0 // loop_exit
    _

</llo_original>
